<compile_context>
chip_gen: v6e
topology: v6e:2x2x1
jax: 0.10.0
libtpu: 0.0.40
codegen_flags: <defaults>
</compile_context>

<pallas_src>
import jax
import jax.numpy as jnp
import numpy as np
from jax import lax
from jax.experimental import pallas as pl
from jax.experimental.pallas import tpu as pltpu

EPS = 1e-5


def _make_kernel(C, Wp, Mq, Ltot, inv_count):
    """Build the BasicBlock kernel for static dims.

    Kernel-side layouts (lane axis last):
      xpf_ref : (C, Ltot) f32   zero-padded images, channels-first, flattened
      mask    : (1, Mq)   f32   1.0 at valid (interior-pixel) output positions
      w*_ref  : (9, C, C) bf16  per-tap weight matrices  w_k[o, i]
      g/b     : (C, 1)    f32   BN affine parameters
      o_ref   : (C, Mq)   f32   lane-dense output slab (garbage at invalid cols)
      ypf_ref : (C, Ltot) bf16  scratch: re-padded conv1 output, input to conv2

    Slab position j corresponds to padded-flat coordinate q = j + Wp + 1, so the
    3x3 tap (kh, kw) is the contiguous lane slice [kh*Wp+kw, kh*Wp+kw+Mq).
    """

    def kernel(xpf_ref, mask_ref, w1_ref, w2_ref, g1_ref, b1_ref, g2_ref,
               b2_ref, o_ref, ypf_ref):
        mask = mask_ref[...]                                       # (1, Mq) f32

        def conv_bn(src_ref, w_ref, g_ref, b_ref, relu, cast):
            # 3x3 conv = 9 accumulated MXU dots: w_k (C,C) @ tap_k (C,Mq).
            acc = jnp.zeros((C, Mq), jnp.float32)
            for kh in range(3):
                for kw in range(3):
                    k = kh * 3 + kw
                    off = kh * Wp + kw
                    tap = src_ref[:, off:off + Mq]                 # (C, Mq)
                    if cast:
                        tap = tap.astype(jnp.bfloat16)
                    acc = acc + jnp.dot(w_ref[k], tap,
                                        preferred_element_type=jnp.float32)
            # Training-mode batch statistics over the *valid* positions only
            # (two-pass, biased variance), folded into one scale/shift FMA.
            mu = jnp.sum(acc * mask, axis=1, keepdims=True) * inv_count
            d = acc - mu
            dm = d * mask
            var = jnp.sum(dm * dm, axis=1, keepdims=True) * inv_count
            scale = g_ref[...] * lax.rsqrt(var + EPS)              # EUP rsqrt
            y = d * scale + b_ref[...]
            return jnp.maximum(y, 0.0) if relu else y

        # ---- conv1 -> bn1 -> relu (taps read straight from the f32 input) ----
        y1 = conv_bn(xpf_ref, w1_ref, g1_ref, b1_ref, relu=True, cast=True)

        # ---- re-embed y1 as a zero-padded flat image (bf16) for conv2 ----
        # The masked write restores the halo / wrap-around columns to exactly
        # the zero padding conv2 needs; both edge regions are (Wp + 1) lanes.
        edge = jnp.zeros((C, Wp + 1), jnp.bfloat16)
        ypf_ref[:, 0:Wp + 1] = edge
        ypf_ref[:, Wp + 1 + Mq:Ltot] = edge
        ypf_ref[:, Wp + 1:Wp + 1 + Mq] = (y1 * mask).astype(jnp.bfloat16)

        # ---- conv2 -> bn2 ----
        y2 = conv_bn(ypf_ref, w2_ref, g2_ref, b2_ref, relu=False, cast=False)

        # ---- residual (= centre-tap slice of the f32 input slab) + relu ----
        res = xpf_ref[:, Wp + 1:Wp + 1 + Mq]
        o_ref[...] = jnp.maximum(y2 + res, 0.0)

    return kernel


def basic_block(x_nchw, w1, g1, b1, w2, g2, b2):
    """x_nchw: (N, C, H, W) f32. Conv weights in PyTorch OIHW layout (C, C, 3, 3)."""
    N, Cin, H, W = x_nchw.shape
    Cout = w1.shape[0]
    assert Cin == Cout, "stride=1 / downsample=False path requires Cin == Cout"
    C = Cout
    Hp, Wp = H + 2, W + 2
    Ltot = N * Hp * Wp                   # lanes of the padded-flat activation
    Mq = Ltot - 2 * (Wp + 1)             # lanes of the (garbage-carrying) output slab

    # ---- layout plumbing in plain XLA; the hot path runs in the kernel ----
    # channels-first, spatially zero-padded, flattened to (C, N*Hp*Wp)
    x_cf = jnp.transpose(x_nchw, (1, 0, 2, 3))                      # (C, N, H, W)
    xpf = jnp.pad(x_cf, ((0, 0), (0, 0), (1, 1), (1, 1))).reshape(C, Ltot)

    # per-tap weight matrices (9, Cout, Cin), pre-cast to bf16 for the MXU
    w1t = jnp.transpose(w1, (2, 3, 0, 1)).reshape(9, C, C).astype(jnp.bfloat16)
    w2t = jnp.transpose(w2, (2, 3, 0, 1)).reshape(9, C, C).astype(jnp.bfloat16)
    g1r, b1r = g1.reshape(C, 1), b1.reshape(C, 1)
    g2r, b2r = g2.reshape(C, 1), b2.reshape(C, 1)

    # Validity mask over flat output positions: slab index j <-> padded-flat
    # coordinate q = j + Wp + 1; valid iff it is an interior pixel of an image.
    q = np.arange(Mq) + Wp + 1
    col = q % Wp
    row = (q // Wp) % Hp
    mask_np = (col >= 1) & (col <= W) & (row >= 1) & (row <= H)
    assert int(mask_np.sum()) == N * H * W
    mask = jnp.asarray(mask_np.astype(np.float32)).reshape(1, Mq)

    # Single-shot (gridless) kernel: everything VMEM resident; assert it fits.
    f32b, bf16b = 4, 2
    vmem_bytes = (C * Ltot * f32b        # padded-flat input (also the residual)
                  + Mq * f32b            # validity mask
                  + C * Mq * f32b        # output slab
                  + C * Ltot * bf16b     # bf16 padded-flat intermediate scratch
                  + 2 * 9 * C * C * bf16b + 4 * C * f32b)
    assert vmem_bytes < 16 * 1024 * 1024, \
        "activations too large for the single-shot kernel; use a tiled grid"

    flops = 2 * 2 * (N * H * W) * (9 * C) * C                       # two 3x3 convs
    bytes_accessed = ((C * Ltot + Mq + C * Mq + 4 * C) * f32b
                      + 2 * 9 * C * C * bf16b)

    kernel = _make_kernel(C, Wp, Mq, Ltot, 1.0 / float(N * H * W))
    out_slab = pl.pallas_call(
        kernel,
        out_shape=jax.ShapeDtypeStruct((C, Mq), jnp.float32),
        in_specs=[pl.BlockSpec(memory_space=pltpu.MemorySpace.VMEM)] * 8,
        out_specs=pl.BlockSpec(memory_space=pltpu.MemorySpace.VMEM),
        scratch_shapes=[pltpu.VMEM((C, Ltot), jnp.bfloat16)],
        cost_estimate=pl.CostEstimate(flops=flops, transcendentals=2 * C,
                                      bytes_accessed=bytes_accessed),
    )(xpf, mask, w1t, w2t, g1r, b1r, g2r, b2r)

    # Unflatten the lane-dense slab: position j <-> padded-flat coord j + Wp + 1.
    out_full = jnp.pad(out_slab, ((0, 0), (Wp + 1, Wp + 1)))        # (C, Ltot)
    out = out_full.reshape(C, N, Hp, Wp)[:, :, 1:H + 1, 1:W + 1]    # (C, N, H, W)
    return jnp.transpose(out, (1, 0, 2, 3))                         # back to NCHW


def _reference(x_nchw, w1, g1, b1, w2, g2, b2, conv_dtype=jnp.float32):
    """Pure-JAX reference matching the PyTorch forward (training-mode BN).

    conv_dtype lets us also build a reference whose conv operands are bf16
    (matching the kernel's MXU precision) for a tight numerical check.
    """
    def conv(x, w):
        return lax.conv_general_dilated(
            x.astype(conv_dtype), w.astype(conv_dtype),
            window_strides=(1, 1), padding=((1, 1), (1, 1)),
            dimension_numbers=("NCHW", "OIHW", "NCHW"),
            preferred_element_type=jnp.float32)

    def bn(x, g, b):
        mu = jnp.mean(x, axis=(0, 2, 3), keepdims=True)
        var = jnp.mean((x - mu) ** 2, axis=(0, 2, 3), keepdims=True)
        return ((x - mu) * lax.rsqrt(var + EPS) * g.reshape(1, -1, 1, 1)
                + b.reshape(1, -1, 1, 1))

    y = jax.nn.relu(bn(conv(x_nchw, w1), g1, b1))
    y = bn(conv(y, w2), g2, b2)
    return jax.nn.relu(y + x_nchw)


if __name__ == "__main__":
    N, C, H, W = 2, 4, 16, 16   # in_channels = out_channels = 4, stride=1, no downsample

    key = jax.random.PRNGKey(0)
    kx, k1, k2, kg1, kb1, kg2, kb2 = jax.random.split(key, 7)

    x = jax.random.normal(kx, (N, C, H, W), jnp.float32)
    w1 = jax.random.normal(k1, (C, C, 3, 3), jnp.float32) * 0.1
    w2 = jax.random.normal(k2, (C, C, 3, 3), jnp.float32) * 0.1
    gamma1 = 1.0 + 0.1 * jax.random.normal(kg1, (C,), jnp.float32)
    beta1 = 0.1 * jax.random.normal(kb1, (C,), jnp.float32)
    gamma2 = 1.0 + 0.1 * jax.random.normal(kg2, (C,), jnp.float32)
    beta2 = 0.1 * jax.random.normal(kb2, (C,), jnp.float32)

    out = jax.block_until_ready(basic_block(x, w1, gamma1, beta1, w2, gamma2, beta2))

    # Tight check vs a reference whose conv operands are also bf16 (same MXU precision).
    ref_bf16 = jax.block_until_ready(
        _reference(x, w1, gamma1, beta1, w2, gamma2, beta2, conv_dtype=jnp.bfloat16))
    np.testing.assert_allclose(np.asarray(out), np.asarray(ref_bf16),
                               atol=2e-3, rtol=2e-3)

    # Looser check vs the exact f32 module semantics (difference is purely the
    # bf16 cast of the conv/MXU operands; BN, residual and ReLU stay in f32).
    ref_f32 = jax.block_until_ready(
        _reference(x, w1, gamma1, beta1, w2, gamma2, beta2, conv_dtype=jnp.float32))
    np.testing.assert_allclose(np.asarray(out), np.asarray(ref_f32),
                               atol=3e-2, rtol=3e-2)

    print("KERNEL_OK")
</pallas_src>

<mosaic_0001>
module attributes {stable_mosaic.version = 11 : i64} {
  func.func @kernel(%arg0: memref<4x648xf32, #tpu.memory_space<vmem>>, %arg1: memref<1x610xf32, #tpu.memory_space<vmem>>, %arg2: memref<9x4x4xbf16, #tpu.memory_space<vmem>>, %arg3: memref<9x4x4xbf16, #tpu.memory_space<vmem>>, %arg4: memref<4x1xf32, #tpu.memory_space<vmem>>, %arg5: memref<4x1xf32, #tpu.memory_space<vmem>>, %arg6: memref<4x1xf32, #tpu.memory_space<vmem>>, %arg7: memref<4x1xf32, #tpu.memory_space<vmem>>, %arg8: memref<4x610xf32, #tpu.memory_space<vmem>>, %arg9: memref<4x648xbf16, #tpu.memory_space<vmem>>) attributes {dimension_semantics = [], scalar_prefetch = 0 : i64, scratch_operands = 1 : i64, tpu.core_type = #tpu.core_type<tc>} {
    %c0 = arith.constant 0 : index
    %c0_0 = arith.constant 0 : index
    %0 = vector.load %arg1[%c0, %c0_0] : memref<1x610xf32, #tpu.memory_space<vmem>>, vector<1x610xf32>
    %cst = arith.constant 0.000000e+00 : f32
    %1 = vector.broadcast %cst : f32 to vector<4x610xf32>
    %c0_1 = arith.constant 0 : index
    %c0_2 = arith.constant 0 : index
    %2 = vector.load %arg0[%c0_1, %c0_2] : memref<4x648xf32, #tpu.memory_space<vmem>>, vector<4x610xf32>
    %3 = arith.truncf %2 : vector<4x610xf32> to vector<4x610xbf16>
    %c0_3 = arith.constant 0 : index
    %c0_4 = arith.constant 0 : index
    %c0_5 = arith.constant 0 : index
    %4 = vector.load %arg2[%c0_3, %c0_4, %c0_5] : memref<9x4x4xbf16, #tpu.memory_space<vmem>>, vector<1x4x4xbf16>
    %5 = vector.shape_cast %4 : vector<1x4x4xbf16> to vector<4x4xbf16>
    %cst_6 = arith.constant dense<0.000000e+00> : vector<4x610xf32>
    %6 = tpu.matmul %5, %3, %cst_6 {dimension_numbers = #tpu.dot_dimension_numbers<[1], [0], [0], [1], [0, 0, 1, 1], [], []>} : vector<4x4xbf16>, vector<4x610xbf16>, vector<4x610xf32> -> vector<4x610xf32>
    %7 = arith.addf %1, %6 : vector<4x610xf32>
    %c0_7 = arith.constant 0 : index
    %c1 = arith.constant 1 : index
    %8 = vector.load %arg0[%c0_7, %c1] : memref<4x648xf32, #tpu.memory_space<vmem>>, vector<4x610xf32>
    %9 = arith.truncf %8 : vector<4x610xf32> to vector<4x610xbf16>
    %c1_8 = arith.constant 1 : index
    %c0_9 = arith.constant 0 : index
    %c0_10 = arith.constant 0 : index
    %10 = vector.load %arg2[%c1_8, %c0_9, %c0_10] : memref<9x4x4xbf16, #tpu.memory_space<vmem>>, vector<1x4x4xbf16>
    %11 = vector.shape_cast %10 : vector<1x4x4xbf16> to vector<4x4xbf16>
    %cst_11 = arith.constant dense<0.000000e+00> : vector<4x610xf32>
    %12 = tpu.matmul %11, %9, %cst_11 {dimension_numbers = #tpu.dot_dimension_numbers<[1], [0], [0], [1], [0, 0, 1, 1], [], []>} : vector<4x4xbf16>, vector<4x610xbf16>, vector<4x610xf32> -> vector<4x610xf32>
    %13 = arith.addf %7, %12 : vector<4x610xf32>
    %c0_12 = arith.constant 0 : index
    %c2 = arith.constant 2 : index
    %14 = vector.load %arg0[%c0_12, %c2] : memref<4x648xf32, #tpu.memory_space<vmem>>, vector<4x610xf32>
    %15 = arith.truncf %14 : vector<4x610xf32> to vector<4x610xbf16>
    %c2_13 = arith.constant 2 : index
    %c0_14 = arith.constant 0 : index
    %c0_15 = arith.constant 0 : index
    %16 = vector.load %arg2[%c2_13, %c0_14, %c0_15] : memref<9x4x4xbf16, #tpu.memory_space<vmem>>, vector<1x4x4xbf16>
    %17 = vector.shape_cast %16 : vector<1x4x4xbf16> to vector<4x4xbf16>
    %cst_16 = arith.constant dense<0.000000e+00> : vector<4x610xf32>
    %18 = tpu.matmul %17, %15, %cst_16 {dimension_numbers = #tpu.dot_dimension_numbers<[1], [0], [0], [1], [0, 0, 1, 1], [], []>} : vector<4x4xbf16>, vector<4x610xbf16>, vector<4x610xf32> -> vector<4x610xf32>
    %19 = arith.addf %13, %18 : vector<4x610xf32>
    %c0_17 = arith.constant 0 : index
    %c18 = arith.constant 18 : index
    %20 = vector.load %arg0[%c0_17, %c18] : memref<4x648xf32, #tpu.memory_space<vmem>>, vector<4x610xf32>
    %21 = arith.truncf %20 : vector<4x610xf32> to vector<4x610xbf16>
    %c3 = arith.constant 3 : index
    %c0_18 = arith.constant 0 : index
    %c0_19 = arith.constant 0 : index
    %22 = vector.load %arg2[%c3, %c0_18, %c0_19] : memref<9x4x4xbf16, #tpu.memory_space<vmem>>, vector<1x4x4xbf16>
    %23 = vector.shape_cast %22 : vector<1x4x4xbf16> to vector<4x4xbf16>
    %cst_20 = arith.constant dense<0.000000e+00> : vector<4x610xf32>
    %24 = tpu.matmul %23, %21, %cst_20 {dimension_numbers = #tpu.dot_dimension_numbers<[1], [0], [0], [1], [0, 0, 1, 1], [], []>} : vector<4x4xbf16>, vector<4x610xbf16>, vector<4x610xf32> -> vector<4x610xf32>
    %25 = arith.addf %19, %24 : vector<4x610xf32>
    %c0_21 = arith.constant 0 : index
    %c19 = arith.constant 19 : index
    %26 = vector.load %arg0[%c0_21, %c19] : memref<4x648xf32, #tpu.memory_space<vmem>>, vector<4x610xf32>
    %27 = arith.truncf %26 : vector<4x610xf32> to vector<4x610xbf16>
    %c4 = arith.constant 4 : index
    %c0_22 = arith.constant 0 : index
    %c0_23 = arith.constant 0 : index
    %28 = vector.load %arg2[%c4, %c0_22, %c0_23] : memref<9x4x4xbf16, #tpu.memory_space<vmem>>, vector<1x4x4xbf16>
    %29 = vector.shape_cast %28 : vector<1x4x4xbf16> to vector<4x4xbf16>
    %cst_24 = arith.constant dense<0.000000e+00> : vector<4x610xf32>
    %30 = tpu.matmul %29, %27, %cst_24 {dimension_numbers = #tpu.dot_dimension_numbers<[1], [0], [0], [1], [0, 0, 1, 1], [], []>} : vector<4x4xbf16>, vector<4x610xbf16>, vector<4x610xf32> -> vector<4x610xf32>
    %31 = arith.addf %25, %30 : vector<4x610xf32>
    %c0_25 = arith.constant 0 : index
    %c20 = arith.constant 20 : index
    %32 = vector.load %arg0[%c0_25, %c20] : memref<4x648xf32, #tpu.memory_space<vmem>>, vector<4x610xf32>
    %33 = arith.truncf %32 : vector<4x610xf32> to vector<4x610xbf16>
    %c5 = arith.constant 5 : index
    %c0_26 = arith.constant 0 : index
    %c0_27 = arith.constant 0 : index
    %34 = vector.load %arg2[%c5, %c0_26, %c0_27] : memref<9x4x4xbf16, #tpu.memory_space<vmem>>, vector<1x4x4xbf16>
    %35 = vector.shape_cast %34 : vector<1x4x4xbf16> to vector<4x4xbf16>
    %cst_28 = arith.constant dense<0.000000e+00> : vector<4x610xf32>
    %36 = tpu.matmul %35, %33, %cst_28 {dimension_numbers = #tpu.dot_dimension_numbers<[1], [0], [0], [1], [0, 0, 1, 1], [], []>} : vector<4x4xbf16>, vector<4x610xbf16>, vector<4x610xf32> -> vector<4x610xf32>
    %37 = arith.addf %31, %36 : vector<4x610xf32>
    %c0_29 = arith.constant 0 : index
    %c36 = arith.constant 36 : index
    %38 = vector.load %arg0[%c0_29, %c36] : memref<4x648xf32, #tpu.memory_space<vmem>>, vector<4x610xf32>
    %39 = arith.truncf %38 : vector<4x610xf32> to vector<4x610xbf16>
    %c6 = arith.constant 6 : index
    %c0_30 = arith.constant 0 : index
    %c0_31 = arith.constant 0 : index
    %40 = vector.load %arg2[%c6, %c0_30, %c0_31] : memref<9x4x4xbf16, #tpu.memory_space<vmem>>, vector<1x4x4xbf16>
    %41 = vector.shape_cast %40 : vector<1x4x4xbf16> to vector<4x4xbf16>
    %cst_32 = arith.constant dense<0.000000e+00> : vector<4x610xf32>
    %42 = tpu.matmul %41, %39, %cst_32 {dimension_numbers = #tpu.dot_dimension_numbers<[1], [0], [0], [1], [0, 0, 1, 1], [], []>} : vector<4x4xbf16>, vector<4x610xbf16>, vector<4x610xf32> -> vector<4x610xf32>
    %43 = arith.addf %37, %42 : vector<4x610xf32>
    %c0_33 = arith.constant 0 : index
    %c37 = arith.constant 37 : index
    %44 = vector.load %arg0[%c0_33, %c37] : memref<4x648xf32, #tpu.memory_space<vmem>>, vector<4x610xf32>
    %45 = arith.truncf %44 : vector<4x610xf32> to vector<4x610xbf16>
    %c7 = arith.constant 7 : index
    %c0_34 = arith.constant 0 : index
    %c0_35 = arith.constant 0 : index
    %46 = vector.load %arg2[%c7, %c0_34, %c0_35] : memref<9x4x4xbf16, #tpu.memory_space<vmem>>, vector<1x4x4xbf16>
    %47 = vector.shape_cast %46 : vector<1x4x4xbf16> to vector<4x4xbf16>
    %cst_36 = arith.constant dense<0.000000e+00> : vector<4x610xf32>
    %48 = tpu.matmul %47, %45, %cst_36 {dimension_numbers = #tpu.dot_dimension_numbers<[1], [0], [0], [1], [0, 0, 1, 1], [], []>} : vector<4x4xbf16>, vector<4x610xbf16>, vector<4x610xf32> -> vector<4x610xf32>
    %49 = arith.addf %43, %48 : vector<4x610xf32>
    %c0_37 = arith.constant 0 : index
    %c38 = arith.constant 38 : index
    %50 = vector.load %arg0[%c0_37, %c38] : memref<4x648xf32, #tpu.memory_space<vmem>>, vector<4x610xf32>
    %51 = arith.truncf %50 : vector<4x610xf32> to vector<4x610xbf16>
    %c8 = arith.constant 8 : index
    %c0_38 = arith.constant 0 : index
    %c0_39 = arith.constant 0 : index
    %52 = vector.load %arg2[%c8, %c0_38, %c0_39] : memref<9x4x4xbf16, #tpu.memory_space<vmem>>, vector<1x4x4xbf16>
    %53 = vector.shape_cast %52 : vector<1x4x4xbf16> to vector<4x4xbf16>
    %cst_40 = arith.constant dense<0.000000e+00> : vector<4x610xf32>
    %54 = tpu.matmul %53, %51, %cst_40 {dimension_numbers = #tpu.dot_dimension_numbers<[1], [0], [0], [1], [0, 0, 1, 1], [], []>} : vector<4x4xbf16>, vector<4x610xbf16>, vector<4x610xf32> -> vector<4x610xf32>
    %55 = arith.addf %49, %54 : vector<4x610xf32>
    %56 = vector.broadcast %0 : vector<1x610xf32> to vector<4x610xf32>
    %57 = arith.mulf %55, %56 : vector<4x610xf32>
    %cst_41 = arith.constant dense<0.000000e+00> : vector<4xf32>
    %58 = vector.multi_reduction <add>, %57, %cst_41 [1] : vector<4x610xf32> to vector<4xf32>
    %59 = vector.shape_cast %58 : vector<4xf32> to vector<4x1xf32>
    %cst_42 = arith.constant 0.001953125 : f32
    %60 = vector.broadcast %cst_42 : f32 to vector<4x1xf32>
    %61 = arith.mulf %59, %60 : vector<4x1xf32>
    %62 = vector.broadcast %61 : vector<4x1xf32> to vector<4x610xf32>
    %63 = arith.subf %55, %62 : vector<4x610xf32>
    %64 = vector.broadcast %0 : vector<1x610xf32> to vector<4x610xf32>
    %65 = arith.mulf %63, %64 : vector<4x610xf32>
    %66 = arith.mulf %65, %65 : vector<4x610xf32>
    %cst_43 = arith.constant dense<0.000000e+00> : vector<4xf32>
    %67 = vector.multi_reduction <add>, %66, %cst_43 [1] : vector<4x610xf32> to vector<4xf32>
    %68 = vector.shape_cast %67 : vector<4xf32> to vector<4x1xf32>
    %cst_44 = arith.constant 0.001953125 : f32
    %69 = vector.broadcast %cst_44 : f32 to vector<4x1xf32>
    %70 = arith.mulf %68, %69 : vector<4x1xf32>
    %c0_45 = arith.constant 0 : index
    %c0_46 = arith.constant 0 : index
    %71 = vector.load %arg4[%c0_45, %c0_46] : memref<4x1xf32, #tpu.memory_space<vmem>>, vector<4x1xf32>
    %cst_47 = arith.constant 9.99999974E-6 : f32
    %72 = vector.broadcast %cst_47 : f32 to vector<4x1xf32>
    %73 = arith.addf %70, %72 : vector<4x1xf32>
    %74 = math.rsqrt %73 : vector<4x1xf32>
    %75 = arith.mulf %71, %74 : vector<4x1xf32>
    %76 = vector.broadcast %75 : vector<4x1xf32> to vector<4x610xf32>
    %77 = arith.mulf %63, %76 : vector<4x610xf32>
    %c0_48 = arith.constant 0 : index
    %c0_49 = arith.constant 0 : index
    %78 = vector.load %arg5[%c0_48, %c0_49] : memref<4x1xf32, #tpu.memory_space<vmem>>, vector<4x1xf32>
    %79 = vector.broadcast %78 : vector<4x1xf32> to vector<4x610xf32>
    %80 = arith.addf %77, %79 : vector<4x610xf32>
    %cst_50 = arith.constant 0.000000e+00 : f32
    %81 = vector.broadcast %cst_50 : f32 to vector<4x610xf32>
    %82 = arith.maximumf %80, %81 : vector<4x610xf32>
    %cst_51 = arith.constant 0.000000e+00 : bf16
    %83 = vector.broadcast %cst_51 : bf16 to vector<4x19xbf16>
    %c0_52 = arith.constant 0 : index
    %c0_53 = arith.constant 0 : index
    %84 = vector.load %arg9[%c0_52, %c0_53] : memref<4x648xbf16, #tpu.memory_space<vmem>>, vector<4x19xbf16>
    tpu.vector_store %arg9[%c0_52, %c0_53], %83 {strides = array<i32>} : memref<4x648xbf16, #tpu.memory_space<vmem>>, vector<4x19xbf16>,
    %c0_54 = arith.constant 0 : index
    %c629 = arith.constant 629 : index
    %85 = vector.load %arg9[%c0_54, %c629] : memref<4x648xbf16, #tpu.memory_space<vmem>>, vector<4x19xbf16>
    tpu.vector_store %arg9[%c0_54, %c629], %83 {strides = array<i32>} : memref<4x648xbf16, #tpu.memory_space<vmem>>, vector<4x19xbf16>,
    %86 = vector.broadcast %0 : vector<1x610xf32> to vector<4x610xf32>
    %87 = arith.mulf %82, %86 : vector<4x610xf32>
    %88 = arith.truncf %87 : vector<4x610xf32> to vector<4x610xbf16>
    %c0_55 = arith.constant 0 : index
    %c19_56 = arith.constant 19 : index
    %89 = vector.load %arg9[%c0_55, %c19_56] : memref<4x648xbf16, #tpu.memory_space<vmem>>, vector<4x610xbf16>
    tpu.vector_store %arg9[%c0_55, %c19_56], %88 {strides = array<i32>} : memref<4x648xbf16, #tpu.memory_space<vmem>>, vector<4x610xbf16>,
    %cst_57 = arith.constant 0.000000e+00 : f32
    %90 = vector.broadcast %cst_57 : f32 to vector<4x610xf32>
    %c0_58 = arith.constant 0 : index
    %c0_59 = arith.constant 0 : index
    %91 = vector.load %arg9[%c0_58, %c0_59] : memref<4x648xbf16, #tpu.memory_space<vmem>>, vector<4x610xbf16>
    %c0_60 = arith.constant 0 : index
    %c0_61 = arith.constant 0 : index
    %c0_62 = arith.constant 0 : index
    %92 = vector.load %arg3[%c0_60, %c0_61, %c0_62] : memref<9x4x4xbf16, #tpu.memory_space<vmem>>, vector<1x4x4xbf16>
    %93 = vector.shape_cast %92 : vector<1x4x4xbf16> to vector<4x4xbf16>
    %cst_63 = arith.constant dense<0.000000e+00> : vector<4x610xf32>
    %94 = tpu.matmul %93, %91, %cst_63 {dimension_numbers = #tpu.dot_dimension_numbers<[1], [0], [0], [1], [0, 0, 1, 1], [], []>} : vector<4x4xbf16>, vector<4x610xbf16>, vector<4x610xf32> -> vector<4x610xf32>
    %95 = arith.addf %90, %94 : vector<4x610xf32>
    %c0_64 = arith.constant 0 : index
    %c1_65 = arith.constant 1 : index
    %96 = vector.load %arg9[%c0_64, %c1_65] : memref<4x648xbf16, #tpu.memory_space<vmem>>, vector<4x610xbf16>
    %c1_66 = arith.constant 1 : index
    %c0_67 = arith.constant 0 : index
    %c0_68 = arith.constant 0 : index
    %97 = vector.load %arg3[%c1_66, %c0_67, %c0_68] : memref<9x4x4xbf16, #tpu.memory_space<vmem>>, vector<1x4x4xbf16>
    %98 = vector.shape_cast %97 : vector<1x4x4xbf16> to vector<4x4xbf16>
    %cst_69 = arith.constant dense<0.000000e+00> : vector<4x610xf32>
    %99 = tpu.matmul %98, %96, %cst_69 {dimension_numbers = #tpu.dot_dimension_numbers<[1], [0], [0], [1], [0, 0, 1, 1], [], []>} : vector<4x4xbf16>, vector<4x610xbf16>, vector<4x610xf32> -> vector<4x610xf32>
    %100 = arith.addf %95, %99 : vector<4x610xf32>
    %c0_70 = arith.constant 0 : index
    %c2_71 = arith.constant 2 : index
    %101 = vector.load %arg9[%c0_70, %c2_71] : memref<4x648xbf16, #tpu.memory_space<vmem>>, vector<4x610xbf16>
    %c2_72 = arith.constant 2 : index
    %c0_73 = arith.constant 0 : index
    %c0_74 = arith.constant 0 : index
    %102 = vector.load %arg3[%c2_72, %c0_73, %c0_74] : memref<9x4x4xbf16, #tpu.memory_space<vmem>>, vector<1x4x4xbf16>
    %103 = vector.shape_cast %102 : vector<1x4x4xbf16> to vector<4x4xbf16>
    %cst_75 = arith.constant dense<0.000000e+00> : vector<4x610xf32>
    %104 = tpu.matmul %103, %101, %cst_75 {dimension_numbers = #tpu.dot_dimension_numbers<[1], [0], [0], [1], [0, 0, 1, 1], [], []>} : vector<4x4xbf16>, vector<4x610xbf16>, vector<4x610xf32> -> vector<4x610xf32>
    %105 = arith.addf %100, %104 : vector<4x610xf32>
    %c0_76 = arith.constant 0 : index
    %c18_77 = arith.constant 18 : index
    %106 = vector.load %arg9[%c0_76, %c18_77] : memref<4x648xbf16, #tpu.memory_space<vmem>>, vector<4x610xbf16>
    %c3_78 = arith.constant 3 : index
    %c0_79 = arith.constant 0 : index
    %c0_80 = arith.constant 0 : index
    %107 = vector.load %arg3[%c3_78, %c0_79, %c0_80] : memref<9x4x4xbf16, #tpu.memory_space<vmem>>, vector<1x4x4xbf16>
    %108 = vector.shape_cast %107 : vector<1x4x4xbf16> to vector<4x4xbf16>
    %cst_81 = arith.constant dense<0.000000e+00> : vector<4x610xf32>
    %109 = tpu.matmul %108, %106, %cst_81 {dimension_numbers = #tpu.dot_dimension_numbers<[1], [0], [0], [1], [0, 0, 1, 1], [], []>} : vector<4x4xbf16>, vector<4x610xbf16>, vector<4x610xf32> -> vector<4x610xf32>
    %110 = arith.addf %105, %109 : vector<4x610xf32>
    %c0_82 = arith.constant 0 : index
    %c19_83 = arith.constant 19 : index
    %111 = vector.load %arg9[%c0_82, %c19_83] : memref<4x648xbf16, #tpu.memory_space<vmem>>, vector<4x610xbf16>
    %c4_84 = arith.constant 4 : index
    %c0_85 = arith.constant 0 : index
    %c0_86 = arith.constant 0 : index
    %112 = vector.load %arg3[%c4_84, %c0_85, %c0_86] : memref<9x4x4xbf16, #tpu.memory_space<vmem>>, vector<1x4x4xbf16>
    %113 = vector.shape_cast %112 : vector<1x4x4xbf16> to vector<4x4xbf16>
    %cst_87 = arith.constant dense<0.000000e+00> : vector<4x610xf32>
    %114 = tpu.matmul %113, %111, %cst_87 {dimension_numbers = #tpu.dot_dimension_numbers<[1], [0], [0], [1], [0, 0, 1, 1], [], []>} : vector<4x4xbf16>, vector<4x610xbf16>, vector<4x610xf32> -> vector<4x610xf32>
    %115 = arith.addf %110, %114 : vector<4x610xf32>
    %c0_88 = arith.constant 0 : index
    %c20_89 = arith.constant 20 : index
    %116 = vector.load %arg9[%c0_88, %c20_89] : memref<4x648xbf16, #tpu.memory_space<vmem>>, vector<4x610xbf16>
    %c5_90 = arith.constant 5 : index
    %c0_91 = arith.constant 0 : index
    %c0_92 = arith.constant 0 : index
    %117 = vector.load %arg3[%c5_90, %c0_91, %c0_92] : memref<9x4x4xbf16, #tpu.memory_space<vmem>>, vector<1x4x4xbf16>
    %118 = vector.shape_cast %117 : vector<1x4x4xbf16> to vector<4x4xbf16>
    %cst_93 = arith.constant dense<0.000000e+00> : vector<4x610xf32>
    %119 = tpu.matmul %118, %116, %cst_93 {dimension_numbers = #tpu.dot_dimension_numbers<[1], [0], [0], [1], [0, 0, 1, 1], [], []>} : vector<4x4xbf16>, vector<4x610xbf16>, vector<4x610xf32> -> vector<4x610xf32>
    %120 = arith.addf %115, %119 : vector<4x610xf32>
    %c0_94 = arith.constant 0 : index
    %c36_95 = arith.constant 36 : index
    %121 = vector.load %arg9[%c0_94, %c36_95] : memref<4x648xbf16, #tpu.memory_space<vmem>>, vector<4x610xbf16>
    %c6_96 = arith.constant 6 : index
    %c0_97 = arith.constant 0 : index
    %c0_98 = arith.constant 0 : index
    %122 = vector.load %arg3[%c6_96, %c0_97, %c0_98] : memref<9x4x4xbf16, #tpu.memory_space<vmem>>, vector<1x4x4xbf16>
    %123 = vector.shape_cast %122 : vector<1x4x4xbf16> to vector<4x4xbf16>
    %cst_99 = arith.constant dense<0.000000e+00> : vector<4x610xf32>
    %124 = tpu.matmul %123, %121, %cst_99 {dimension_numbers = #tpu.dot_dimension_numbers<[1], [0], [0], [1], [0, 0, 1, 1], [], []>} : vector<4x4xbf16>, vector<4x610xbf16>, vector<4x610xf32> -> vector<4x610xf32>
    %125 = arith.addf %120, %124 : vector<4x610xf32>
    %c0_100 = arith.constant 0 : index
    %c37_101 = arith.constant 37 : index
    %126 = vector.load %arg9[%c0_100, %c37_101] : memref<4x648xbf16, #tpu.memory_space<vmem>>, vector<4x610xbf16>
    %c7_102 = arith.constant 7 : index
    %c0_103 = arith.constant 0 : index
    %c0_104 = arith.constant 0 : index
    %127 = vector.load %arg3[%c7_102, %c0_103, %c0_104] : memref<9x4x4xbf16, #tpu.memory_space<vmem>>, vector<1x4x4xbf16>
    %128 = vector.shape_cast %127 : vector<1x4x4xbf16> to vector<4x4xbf16>
    %cst_105 = arith.constant dense<0.000000e+00> : vector<4x610xf32>
    %129 = tpu.matmul %128, %126, %cst_105 {dimension_numbers = #tpu.dot_dimension_numbers<[1], [0], [0], [1], [0, 0, 1, 1], [], []>} : vector<4x4xbf16>, vector<4x610xbf16>, vector<4x610xf32> -> vector<4x610xf32>
    %130 = arith.addf %125, %129 : vector<4x610xf32>
    %c0_106 = arith.constant 0 : index
    %c38_107 = arith.constant 38 : index
    %131 = vector.load %arg9[%c0_106, %c38_107] : memref<4x648xbf16, #tpu.memory_space<vmem>>, vector<4x610xbf16>
    %c8_108 = arith.constant 8 : index
    %c0_109 = arith.constant 0 : index
    %c0_110 = arith.constant 0 : index
    %132 = vector.load %arg3[%c8_108, %c0_109, %c0_110] : memref<9x4x4xbf16, #tpu.memory_space<vmem>>, vector<1x4x4xbf16>
    %133 = vector.shape_cast %132 : vector<1x4x4xbf16> to vector<4x4xbf16>
    %cst_111 = arith.constant dense<0.000000e+00> : vector<4x610xf32>
    %134 = tpu.matmul %133, %131, %cst_111 {dimension_numbers = #tpu.dot_dimension_numbers<[1], [0], [0], [1], [0, 0, 1, 1], [], []>} : vector<4x4xbf16>, vector<4x610xbf16>, vector<4x610xf32> -> vector<4x610xf32>
    %135 = arith.addf %130, %134 : vector<4x610xf32>
    %136 = vector.broadcast %0 : vector<1x610xf32> to vector<4x610xf32>
    %137 = arith.mulf %135, %136 : vector<4x610xf32>
    %cst_112 = arith.constant dense<0.000000e+00> : vector<4xf32>
    %138 = vector.multi_reduction <add>, %137, %cst_112 [1] : vector<4x610xf32> to vector<4xf32>
    %139 = vector.shape_cast %138 : vector<4xf32> to vector<4x1xf32>
    %cst_113 = arith.constant 0.001953125 : f32
    %140 = vector.broadcast %cst_113 : f32 to vector<4x1xf32>
    %141 = arith.mulf %139, %140 : vector<4x1xf32>
    %142 = vector.broadcast %141 : vector<4x1xf32> to vector<4x610xf32>
    %143 = arith.subf %135, %142 : vector<4x610xf32>
    %144 = vector.broadcast %0 : vector<1x610xf32> to vector<4x610xf32>
    %145 = arith.mulf %143, %144 : vector<4x610xf32>
    %146 = arith.mulf %145, %145 : vector<4x610xf32>
    %cst_114 = arith.constant dense<0.000000e+00> : vector<4xf32>
    %147 = vector.multi_reduction <add>, %146, %cst_114 [1] : vector<4x610xf32> to vector<4xf32>
    %148 = vector.shape_cast %147 : vector<4xf32> to vector<4x1xf32>
    %cst_115 = arith.constant 0.001953125 : f32
    %149 = vector.broadcast %cst_115 : f32 to vector<4x1xf32>
    %150 = arith.mulf %148, %149 : vector<4x1xf32>
    %c0_116 = arith.constant 0 : index
    %c0_117 = arith.constant 0 : index
    %151 = vector.load %arg6[%c0_116, %c0_117] : memref<4x1xf32, #tpu.memory_space<vmem>>, vector<4x1xf32>
    %cst_118 = arith.constant 9.99999974E-6 : f32
    %152 = vector.broadcast %cst_118 : f32 to vector<4x1xf32>
    %153 = arith.addf %150, %152 : vector<4x1xf32>
    %154 = math.rsqrt %153 : vector<4x1xf32>
    %155 = arith.mulf %151, %154 : vector<4x1xf32>
    %156 = vector.broadcast %155 : vector<4x1xf32> to vector<4x610xf32>
    %157 = arith.mulf %143, %156 : vector<4x610xf32>
    %c0_119 = arith.constant 0 : index
    %c0_120 = arith.constant 0 : index
    %158 = vector.load %arg7[%c0_119, %c0_120] : memref<4x1xf32, #tpu.memory_space<vmem>>, vector<4x1xf32>
    %159 = vector.broadcast %158 : vector<4x1xf32> to vector<4x610xf32>
    %160 = arith.addf %157, %159 : vector<4x610xf32>
    %c0_121 = arith.constant 0 : index
    %c19_122 = arith.constant 19 : index
    %161 = vector.load %arg0[%c0_121, %c19_122] : memref<4x648xf32, #tpu.memory_space<vmem>>, vector<4x610xf32>
    %162 = arith.addf %160, %161 : vector<4x610xf32>
    %cst_123 = arith.constant 0.000000e+00 : f32
    %163 = vector.broadcast %cst_123 : f32 to vector<4x610xf32>
    %164 = arith.maximumf %162, %163 : vector<4x610xf32>
    %c0_124 = arith.constant 0 : index
    %c0_125 = arith.constant 0 : index
    %165 = vector.load %arg8[%c0_124, %c0_125] : memref<4x610xf32, #tpu.memory_space<vmem>>, vector<4x610xf32>
    tpu.vector_store %arg8[%c0_124, %c0_125], %164 {strides = array<i32>} : memref<4x610xf32, #tpu.memory_space<vmem>>, vector<4x610xf32>,
    return
  }
}

</mosaic_0001>

<llo_original>
// kernel: tpu_custom_call.1
$region0: #{tpu_custom_call.1}
  #allocation0 [shape = 'u32[]', space=smem, size = 0x4, offset = 0x4, fixed_abs, tag = 'smem constant byte address 0x4 - core index']
  #allocation1 [shape = 'u32[144,128]{1,0:T(1,128)}', space=vmem, size = 0x12000, scoped, tag = 'internal scratch']
  #allocation2 [shape = 'bf16[4,648]{1,0:T(4,128)(2,1)}', space=vmem, size = 0x1800, scoped, tag = 'scratch operand']
  %s0 = inlined_call_operand.vmem [shape: f32[4,648], index: 0, kind: input, shape index: {}]
  %s1 = inlined_call_operand.vmem [shape: f32[1,610], index: 1, kind: input, shape index: {}]
  %s2 = inlined_call_operand.vmem [shape: bf16[9,4,4], index: 2, kind: input, shape index: {}]
  %s3 = inlined_call_operand.vmem [shape: bf16[9,4,4], index: 3, kind: input, shape index: {}]
  %s4 = inlined_call_operand.vmem [shape: f32[4,1], index: 4, kind: input, shape index: {}]
  %s5 = inlined_call_operand.vmem [shape: f32[4,1], index: 5, kind: input, shape index: {}]
  %s6 = inlined_call_operand.vmem [shape: f32[4,1], index: 6, kind: input, shape index: {}]
  %s7 = inlined_call_operand.vmem [shape: f32[4,1], index: 7, kind: input, shape index: {}]
  %s8 = inlined_call_operand.hbm [shape: f32[4,610], index: 8, kind: output, shape index: {}]
  %s9 = sld [smem:[#allocation0]]
  $region42: #{tpu_custom_call.1} parent=0
    _
  %s11 = ssub.s32 1, %s9
  %s12 = scalar_select 0, %s11, %s9
  $region1: #{tpu_custom_call.1} parent=0
    #allocation3 [shape = 'u8[10240]{0}', space=vmem, size = 0x2800, scoped, tag = 'output window, operand 0, single buffered']
    #allocation4 [shape = 's32[1]{0}', space=sflag, size = 0x4, scoped, tag = 'scoped memory for tpu_custom_call.1']
    %13 = vsyncpa [#allocation4], 0
    // Predicated region
    $region2: #{tpu_custom_call.1} parent=1 // pred_check
      _
    $region3: #{tpu_custom_call.1} parent=1 // pred_check_branch
      %15 = sbr.rel (0) target = $region5
    $region4: #{tpu_custom_call.1} parent=1 // pred_region
      _
    $region5: #{tpu_custom_call.1} parent=1 // pred_fallthru
      _
    // Predicated region
    $region6: #{tpu_custom_call.1} parent=1 // pred_check
      _
    $region7: #{tpu_custom_call.1} parent=1 // pred_check_branch
      %17 = sbr.rel (0) target = $region9
    $region8: #{tpu_custom_call.1} parent=1 // pred_region
      _
    $region9: #{tpu_custom_call.1} parent=1 // pred_fallthru
      _
    // Predicated region
    $region10: #{tpu_custom_call.1} parent=1 // pred_check
      _
    $region11: #{tpu_custom_call.1} parent=1 // pred_check_branch
      %19 = sbr.rel (0) target = $region13
    $region12: #{tpu_custom_call.1} parent=1 // pred_region
      _
    $region13: #{tpu_custom_call.1} parent=1 // pred_fallthru
      _
    // Predicated region
    $region14: #{tpu_custom_call.1} parent=1 // pred_check
      _
    $region15: #{tpu_custom_call.1} parent=1 // pred_check_branch
      %21 = sbr.rel (0) target = $region17
    $region16: #{tpu_custom_call.1} parent=1 // pred_region
      _
    $region17: #{tpu_custom_call.1} parent=1 // pred_fallthru
      _
    // Predicated region
    $region18: #{tpu_custom_call.1} parent=1 // pred_check
      _
    $region19: #{tpu_custom_call.1} parent=1 // pred_check_branch
      %23 = sbr.rel (0) target = $region21
    $region20: #{tpu_custom_call.1} parent=1 // pred_region
      _
    $region21: #{tpu_custom_call.1} parent=1 // pred_fallthru
      _
    // Predicated region
    $region22: #{tpu_custom_call.1} parent=1 // pred_check
      _
    $region23: #{tpu_custom_call.1} parent=1 // pred_check_branch
      %25 = sbr.rel (0) target = $region25
    $region24: #{tpu_custom_call.1} parent=1 // pred_region
      _
    $region25: #{tpu_custom_call.1} parent=1 // pred_fallthru
      _
    // Predicated region
    $region26: #{tpu_custom_call.1} parent=1 // pred_check
      _
    $region27: #{tpu_custom_call.1} parent=1 // pred_check_branch
      %27 = sbr.rel (0) target = $region29
    $region28: #{tpu_custom_call.1} parent=1 // pred_region
      _
    $region29: #{tpu_custom_call.1} parent=1 // pred_fallthru
      _
    // Predicated region
    $region30: #{tpu_custom_call.1} parent=1 // pred_check
      _
    $region31: #{tpu_custom_call.1} parent=1 // pred_check_branch
      %29 = sbr.rel (0) target = $region33
    $region32: #{tpu_custom_call.1} parent=1 // pred_region
      _
    $region33: #{tpu_custom_call.1} parent=1 // pred_fallthru
      _
    %v31 = vld [vmem:[%s1] sm:$0x1f]
    %v32 = vld [vmem:[%s0] sm:$0xff]
    %v33 = vld [vmem:[%s0 + $0x8] sm:$0xff]
    %v34 = vld [vmem:[%s0 + $0x10] sm:$0xf]
    %v37 = vcombine.high %v32, %v32
    %v38 = vcombine.high %v33, %v33
    %v41 = vpack.c.bf16 %v32, %v32
    %v42 = vpack.c.bf16 %v37, %v37
    %v43 = vpack.c.bf16 %v33, %v33
    %v44 = vpack.c.bf16 %v38, %v38
    %v45 = vpack.c.bf16 %v34, %v34
    %v46 = vld [vmem:[%s2] sm:$0x3]
    %s47 = scalar_lea.vmem %s2, 2
    %v48 = vld [vmem:[%s47] sm:$0x3]
    %54 = vrot.lane.b32.xlu0 %v41, 127
    %v55 = vpop.permute.xlu0 %54
    %56 = vrot.lane.b32.xlu0 %v42, 127
    %v57 = vpop.permute.xlu0 %56
    %58 = vrot.lane.b32.xlu0 %v43, 127
    %v59 = vpop.permute.xlu0 %58
    %60 = vrot.lane.b32.xlu0 %v44, 127
    %v61 = vpop.permute.xlu0 %60
    %62 = vrot.lane.b32.xlu0 %v45, 127
    %v63 = vpop.permute.xlu0 %62
    %vm64 = vcmask 1039360
    %v65 = vsel %vm64, %v55, %v57
    %v66 = vsel %vm64, %v57, %v59
    %v67 = vsel %vm64, %v59, %v61
    %v68 = vsel %vm64, %v61, %v63
    %vm69 = vcmask 31744
    %v71 = vsel %vm69, %v48, 0
    %vm73 = vcmask 1041408
    %v75 = vsel %vm73, %v65, 0
    %v78 = vsel %vm73, %v66, 0
    %v81 = vsel %vm73, %v67, 0
    %v84 = vsel %vm73, %v68, 0
    %v87 = vsel %vm73, %v63, 0
    %89 = vmatprep.subr.bf16.mxu0 0
    %90 = vmatpush1.bf16.msra.mxu0 0
    %91 = vmatprep.subr.bf16.mxu0 0
    %92 = vmatpush1.bf16.msra.mxu0 0
    %93 = vmatprep.subr.bf16.mxu0 0
    %94 = vmatpush1.bf16.msra.mxu0 0
    %95 = vmatprep.subr.bf16.mxu0 0
    %96 = vmatpush1.bf16.msra.mxu0 0
    %97 = vmatprep.subr.bf16.mxu0 0
    %98 = vmatpush1.bf16.msra.mxu0 0
    %99 = vmatprep.subr.bf16.mxu0 0
    %100 = vmatpush1.bf16.msra.mxu0 0
    %101 = vmatprep.subr.bf16.mxu0 0
    %102 = vmatpush1.bf16.msra.mxu0 0
    %103 = vmatprep.subr.bf16.mxu0 %v78
    %104 = vmatpush1.bf16.msra.mxu0 %v75
    %105 = vmatprep.subr.bf16.mxu0 0
    %106 = vmatpush2.bf16.msra.mxu0 0
    %107 = vmatprep.subr.bf16.mxu0 0
    %108 = vmatpush2.bf16.msra.mxu0 0
    %109 = vmatprep.subr.bf16.mxu0 0
    %110 = vmatpush2.bf16.msra.mxu0 0
    %111 = vmatprep.subr.bf16.mxu0 0
    %112 = vmatpush2.bf16.msra.mxu0 0
    %113 = vmatprep.subr.bf16.mxu0 0
    %114 = vmatpush2.bf16.msra.mxu0 0
    %115 = vmatprep.subr.bf16.mxu0 0
    %116 = vmatpush2.bf16.msra.mxu0 0
    %117 = vmatprep.subr.bf16.mxu0 0
    %118 = vmatpush2.bf16.msra.mxu0 0
    %119 = vmatprep.subr.bf16.mxu0 0
    %120 = vmatpush2.bf16.msra.mxu0 0
    %121 = vmatprep.mubr.bf16.mxu0 0
    %122 = vmatmul.mubr.bf16.gmra.mxu0 %v71
    %v123 = vpop.f32.mrf.mxu0
    %v124 = vadd.f32 0.0, %v123
    %v125 = vpop.f32.mrf.mxu0
    %v126 = vadd.f32 0.0, %v125
    %v127 = vpop.f32.mrf.mxu0
    %v128 = vpop.f32.mrf.mxu0
    %129 = vdwg.mxu0
    %130 = vmatprep.subr.bf16.mxu0 0
    %131 = vmatpush1.bf16.msra.mxu0 0
    %132 = vmatprep.subr.bf16.mxu0 0
    %133 = vmatpush1.bf16.msra.mxu0 0
    %134 = vmatprep.subr.bf16.mxu0 0
    %135 = vmatpush1.bf16.msra.mxu0 0
    %136 = vmatprep.subr.bf16.mxu0 0
    %137 = vmatpush1.bf16.msra.mxu0 0
    %138 = vmatprep.subr.bf16.mxu0 0
    %139 = vmatpush1.bf16.msra.mxu0 0
    %140 = vmatprep.subr.bf16.mxu0 0
    %141 = vmatpush1.bf16.msra.mxu0 0
    %142 = vmatprep.subr.bf16.mxu0 0
    %143 = vmatpush1.bf16.msra.mxu0 0
    %144 = vmatprep.subr.bf16.mxu0 %v84
    %145 = vmatpush1.bf16.msra.mxu0 %v81
    %146 = vmatprep.subr.bf16.mxu0 0
    %147 = vmatpush2.bf16.msra.mxu0 0
    %148 = vmatprep.subr.bf16.mxu0 0
    %149 = vmatpush2.bf16.msra.mxu0 0
    %150 = vmatprep.subr.bf16.mxu0 0
    %151 = vmatpush2.bf16.msra.mxu0 0
    %152 = vmatprep.subr.bf16.mxu0 0
    %153 = vmatpush2.bf16.msra.mxu0 0
    %154 = vmatprep.subr.bf16.mxu0 0
    %155 = vmatpush2.bf16.msra.mxu0 0
    %156 = vmatprep.subr.bf16.mxu0 0
    %157 = vmatpush2.bf16.msra.mxu0 0
    %158 = vmatprep.subr.bf16.mxu0 0
    %159 = vmatpush2.bf16.msra.mxu0 0
    %160 = vmatprep.subr.bf16.mxu0 0
    %161 = vmatpush2.bf16.msra.mxu0 0
    %162 = vmatprep.mubr.bf16.mxu0 0
    %163 = vmatmul.mubr.bf16.gmra.mxu0 %v71
    %v164 = vpop.f32.mrf.mxu0
    %v165 = vadd.f32 0.0, %v164
    %v166 = vpop.f32.mrf.mxu0
    %v167 = vadd.f32 0.0, %v166
    %v168 = vpop.f32.mrf.mxu0
    %v169 = vpop.f32.mrf.mxu0
    %170 = vdwg.mxu0
    %171 = vmatprep.subr.bf16.mxu0 0
    %172 = vmatpush1.bf16.msra.mxu0 0
    %173 = vmatprep.subr.bf16.mxu0 0
    %174 = vmatpush1.bf16.msra.mxu0 0
    %175 = vmatprep.subr.bf16.mxu0 0
    %176 = vmatpush1.bf16.msra.mxu0 0
    %177 = vmatprep.subr.bf16.mxu0 0
    %178 = vmatpush1.bf16.msra.mxu0 0
    %179 = vmatprep.subr.bf16.mxu0 0
    %180 = vmatpush1.bf16.msra.mxu0 0
    %181 = vmatprep.subr.bf16.mxu0 0
    %182 = vmatpush1.bf16.msra.mxu0 0
    %183 = vmatprep.subr.bf16.mxu0 0
    %184 = vmatpush1.bf16.msra.mxu0 0
    %185 = vmatprep.subr.bf16.mxu0 0
    %186 = vmatpush1.bf16.msra.mxu0 %v87
    %187 = vmatprep.subr.bf16.mxu0 0
    %188 = vmatpush2.bf16.msra.mxu0 0
    %189 = vmatprep.subr.bf16.mxu0 0
    %190 = vmatpush2.bf16.msra.mxu0 0
    %191 = vmatprep.subr.bf16.mxu0 0
    %192 = vmatpush2.bf16.msra.mxu0 0
    %193 = vmatprep.subr.bf16.mxu0 0
    %194 = vmatpush2.bf16.msra.mxu0 0
    %195 = vmatprep.subr.bf16.mxu0 0
    %196 = vmatpush2.bf16.msra.mxu0 0
    %197 = vmatprep.subr.bf16.mxu0 0
    %198 = vmatpush2.bf16.msra.mxu0 0
    %199 = vmatprep.subr.bf16.mxu0 0
    %200 = vmatpush2.bf16.msra.mxu0 0
    %201 = vmatprep.subr.bf16.mxu0 0
    %202 = vmatpush2.bf16.msra.mxu0 0
    %203 = vmatprep.mubr.bf16.mxu0 0
    %204 = vmatmul.mubr.bf16.gmra.mxu0 %v71
    %v205 = vpop.f32.mrf.mxu0
    %v206 = vadd.f32 0.0, %v205
    %v207 = vpop.f32.mrf.mxu0
    %v208 = vpop.f32.mrf.mxu0
    %v209 = vpop.f32.mrf.mxu0
    %210 = vdwg.mxu0
    %v212 = vsel %vm69, %v46, 0
    %v215 = vsel %vm73, %v41, 0
    %v218 = vsel %vm73, %v42, 0
    %v221 = vsel %vm73, %v43, 0
    %v224 = vsel %vm73, %v44, 0
    %v227 = vsel %vm73, %v45, 0
    %229 = vmatprep.subr.bf16.mxu0 0
    %230 = vmatpush1.bf16.msra.mxu0 0
    %231 = vmatprep.subr.bf16.mxu0 0
    %232 = vmatpush1.bf16.msra.mxu0 0
    %233 = vmatprep.subr.bf16.mxu0 0
    %234 = vmatpush1.bf16.msra.mxu0 0
    %235 = vmatprep.subr.bf16.mxu0 0
    %236 = vmatpush1.bf16.msra.mxu0 0
    %237 = vmatprep.subr.bf16.mxu0 0
    %238 = vmatpush1.bf16.msra.mxu0 0
    %239 = vmatprep.subr.bf16.mxu0 0
    %240 = vmatpush1.bf16.msra.mxu0 0
    %241 = vmatprep.subr.bf16.mxu0 0
    %242 = vmatpush1.bf16.msra.mxu0 0
    %243 = vmatprep.subr.bf16.mxu0 %v218
    %244 = vmatpush1.bf16.msra.mxu0 %v215
    %245 = vmatprep.subr.bf16.mxu0 0
    %246 = vmatpush2.bf16.msra.mxu0 0
    %247 = vmatprep.subr.bf16.mxu0 0
    %248 = vmatpush2.bf16.msra.mxu0 0
    %249 = vmatprep.subr.bf16.mxu0 0
    %250 = vmatpush2.bf16.msra.mxu0 0
    %251 = vmatprep.subr.bf16.mxu0 0
    %252 = vmatpush2.bf16.msra.mxu0 0
    %253 = vmatprep.subr.bf16.mxu0 0
    %254 = vmatpush2.bf16.msra.mxu0 0
    %255 = vmatprep.subr.bf16.mxu0 0
    %256 = vmatpush2.bf16.msra.mxu0 0
    %257 = vmatprep.subr.bf16.mxu0 0
    %258 = vmatpush2.bf16.msra.mxu0 0
    %259 = vmatprep.subr.bf16.mxu0 0
    %260 = vmatpush2.bf16.msra.mxu0 0
    %261 = vmatprep.mubr.bf16.mxu0 0
    %262 = vmatmul.mubr.bf16.gmra.mxu0 %v212
    %v263 = vpop.f32.mrf.mxu0
    %v264 = vadd.f32 %v124, %v263
    %v265 = vpop.f32.mrf.mxu0
    %v266 = vadd.f32 %v126, %v265
    %v267 = vpop.f32.mrf.mxu0
    %v268 = vpop.f32.mrf.mxu0
    %269 = vdwg.mxu0
    %270 = vmatprep.subr.bf16.mxu0 0
    %271 = vmatpush1.bf16.msra.mxu0 0
    %272 = vmatprep.subr.bf16.mxu0 0
    %273 = vmatpush1.bf16.msra.mxu0 0
    %274 = vmatprep.subr.bf16.mxu0 0
    %275 = vmatpush1.bf16.msra.mxu0 0
    %276 = vmatprep.subr.bf16.mxu0 0
    %277 = vmatpush1.bf16.msra.mxu0 0
    %278 = vmatprep.subr.bf16.mxu0 0
    %279 = vmatpush1.bf16.msra.mxu0 0
    %280 = vmatprep.subr.bf16.mxu0 0
    %281 = vmatpush1.bf16.msra.mxu0 0
    %282 = vmatprep.subr.bf16.mxu0 0
    %283 = vmatpush1.bf16.msra.mxu0 0
    %284 = vmatprep.subr.bf16.mxu0 %v224
    %285 = vmatpush1.bf16.msra.mxu0 %v221
    %286 = vmatprep.subr.bf16.mxu0 0
    %287 = vmatpush2.bf16.msra.mxu0 0
    %288 = vmatprep.subr.bf16.mxu0 0
    %289 = vmatpush2.bf16.msra.mxu0 0
    %290 = vmatprep.subr.bf16.mxu0 0
    %291 = vmatpush2.bf16.msra.mxu0 0
    %292 = vmatprep.subr.bf16.mxu0 0
    %293 = vmatpush2.bf16.msra.mxu0 0
    %294 = vmatprep.subr.bf16.mxu0 0
    %295 = vmatpush2.bf16.msra.mxu0 0
    %296 = vmatprep.subr.bf16.mxu0 0
    %297 = vmatpush2.bf16.msra.mxu0 0
    %298 = vmatprep.subr.bf16.mxu0 0
    %299 = vmatpush2.bf16.msra.mxu0 0
    %300 = vmatprep.subr.bf16.mxu0 0
    %301 = vmatpush2.bf16.msra.mxu0 0
    %302 = vmatprep.mubr.bf16.mxu0 0
    %303 = vmatmul.mubr.bf16.gmra.mxu0 %v212
    %v304 = vpop.f32.mrf.mxu0
    %v305 = vadd.f32 %v165, %v304
    %v306 = vpop.f32.mrf.mxu0
    %v307 = vadd.f32 %v167, %v306
    %v308 = vpop.f32.mrf.mxu0
    %v309 = vpop.f32.mrf.mxu0
    %310 = vdwg.mxu0
    %311 = vmatprep.subr.bf16.mxu0 0
    %312 = vmatpush1.bf16.msra.mxu0 0
    %313 = vmatprep.subr.bf16.mxu0 0
    %314 = vmatpush1.bf16.msra.mxu0 0
    %315 = vmatprep.subr.bf16.mxu0 0
    %316 = vmatpush1.bf16.msra.mxu0 0
    %317 = vmatprep.subr.bf16.mxu0 0
    %318 = vmatpush1.bf16.msra.mxu0 0
    %319 = vmatprep.subr.bf16.mxu0 0
    %320 = vmatpush1.bf16.msra.mxu0 0
    %321 = vmatprep.subr.bf16.mxu0 0
    %322 = vmatpush1.bf16.msra.mxu0 0
    %323 = vmatprep.subr.bf16.mxu0 0
    %324 = vmatpush1.bf16.msra.mxu0 0
    %325 = vmatprep.subr.bf16.mxu0 0
    %326 = vmatpush1.bf16.msra.mxu0 %v227
    %327 = vmatprep.subr.bf16.mxu0 0
    %328 = vmatpush2.bf16.msra.mxu0 0
    %329 = vmatprep.subr.bf16.mxu0 0
    %330 = vmatpush2.bf16.msra.mxu0 0
    %331 = vmatprep.subr.bf16.mxu0 0
    %332 = vmatpush2.bf16.msra.mxu0 0
    %333 = vmatprep.subr.bf16.mxu0 0
    %334 = vmatpush2.bf16.msra.mxu0 0
    %335 = vmatprep.subr.bf16.mxu0 0
    %336 = vmatpush2.bf16.msra.mxu0 0
    %337 = vmatprep.subr.bf16.mxu0 0
    %338 = vmatpush2.bf16.msra.mxu0 0
    %339 = vmatprep.subr.bf16.mxu0 0
    %340 = vmatpush2.bf16.msra.mxu0 0
    %341 = vmatprep.subr.bf16.mxu0 0
    %342 = vmatpush2.bf16.msra.mxu0 0
    %343 = vmatprep.mubr.bf16.mxu0 0
    %344 = vmatmul.mubr.bf16.gmra.mxu0 %v212
    %v345 = vpop.f32.mrf.mxu0
    %v346 = vadd.f32 %v206, %v345
    %v347 = vpop.f32.mrf.mxu0
    %v348 = vpop.f32.mrf.mxu0
    %v349 = vpop.f32.mrf.mxu0
    %350 = vdwg.mxu0
    %v351 = vld [vmem:[%s0] sm:$0xff]
    %v352 = vld [vmem:[%s0 + $0x8] sm:$0xff]
    %v353 = vld [vmem:[%s0 + $0x10] sm:$0xf]
    %v356 = vcombine.high %v351, %v351
    %v357 = vcombine.high %v352, %v352
    %v360 = vpack.c.bf16 %v351, %v351
    %v361 = vpack.c.bf16 %v356, %v356
    %v362 = vpack.c.bf16 %v352, %v352
    %v363 = vpack.c.bf16 %v357, %v357
    %v364 = vpack.c.bf16 %v353, %v353
    %s365 = scalar_lea.vmem %s2, 4
    %v366 = vld [vmem:[%s365] sm:$0x3]
    %372 = vrot.lane.b32.xlu0 %v360, 126
    %v373 = vpop.permute.xlu0 %372
    %374 = vrot.lane.b32.xlu0 %v361, 126
    %v375 = vpop.permute.xlu0 %374
    %376 = vrot.lane.b32.xlu0 %v362, 126
    %v377 = vpop.permute.xlu0 %376
    %378 = vrot.lane.b32.xlu0 %v363, 126
    %v379 = vpop.permute.xlu0 %378
    %380 = vrot.lane.b32.xlu0 %v364, 126
    %v381 = vpop.permute.xlu0 %380
    %vm382 = vcmask 1031168
    %v383 = vsel %vm382, %v373, %v375
    %v384 = vsel %vm382, %v375, %v377
    %v385 = vsel %vm382, %v377, %v379
    %v386 = vsel %vm382, %v379, %v381
    %v388 = vsel %vm69, %v366, 0
    %v391 = vsel %vm73, %v383, 0
    %v394 = vsel %vm73, %v384, 0
    %v397 = vsel %vm73, %v385, 0
    %v400 = vsel %vm73, %v386, 0
    %v403 = vsel %vm73, %v381, 0
    %405 = vmatprep.subr.bf16.mxu0 0
    %406 = vmatpush1.bf16.msra.mxu0 0
    %407 = vmatprep.subr.bf16.mxu0 0
    %408 = vmatpush1.bf16.msra.mxu0 0
    %409 = vmatprep.subr.bf16.mxu0 0
    %410 = vmatpush1.bf16.msra.mxu0 0
    %411 = vmatprep.subr.bf16.mxu0 0
    %412 = vmatpush1.bf16.msra.mxu0 0
    %413 = vmatprep.subr.bf16.mxu0 0
    %414 = vmatpush1.bf16.msra.mxu0 0
    %415 = vmatprep.subr.bf16.mxu0 0
    %416 = vmatpush1.bf16.msra.mxu0 0
    %417 = vmatprep.subr.bf16.mxu0 0
    %418 = vmatpush1.bf16.msra.mxu0 0
    %419 = vmatprep.subr.bf16.mxu0 %v394
    %420 = vmatpush1.bf16.msra.mxu0 %v391
    %421 = vmatprep.subr.bf16.mxu0 0
    %422 = vmatpush2.bf16.msra.mxu0 0
    %423 = vmatprep.subr.bf16.mxu0 0
    %424 = vmatpush2.bf16.msra.mxu0 0
    %425 = vmatprep.subr.bf16.mxu0 0
    %426 = vmatpush2.bf16.msra.mxu0 0
    %427 = vmatprep.subr.bf16.mxu0 0
    %428 = vmatpush2.bf16.msra.mxu0 0
    %429 = vmatprep.subr.bf16.mxu0 0
    %430 = vmatpush2.bf16.msra.mxu0 0
    %431 = vmatprep.subr.bf16.mxu0 0
    %432 = vmatpush2.bf16.msra.mxu0 0
    %433 = vmatprep.subr.bf16.mxu0 0
    %434 = vmatpush2.bf16.msra.mxu0 0
    %435 = vmatprep.subr.bf16.mxu0 0
    %436 = vmatpush2.bf16.msra.mxu0 0
    %437 = vmatprep.mubr.bf16.mxu0 0
    %438 = vmatmul.mubr.bf16.gmra.mxu0 %v388
    %v439 = vpop.f32.mrf.mxu0
    %v440 = vadd.f32 0.0, %v439
    %v441 = vpop.f32.mrf.mxu0
    %v442 = vadd.f32 0.0, %v441
    %v443 = vpop.f32.mrf.mxu0
    %v444 = vpop.f32.mrf.mxu0
    %445 = vdwg.mxu0
    %446 = vmatprep.subr.bf16.mxu0 0
    %447 = vmatpush1.bf16.msra.mxu0 0
    %448 = vmatprep.subr.bf16.mxu0 0
    %449 = vmatpush1.bf16.msra.mxu0 0
    %450 = vmatprep.subr.bf16.mxu0 0
    %451 = vmatpush1.bf16.msra.mxu0 0
    %452 = vmatprep.subr.bf16.mxu0 0
    %453 = vmatpush1.bf16.msra.mxu0 0
    %454 = vmatprep.subr.bf16.mxu0 0
    %455 = vmatpush1.bf16.msra.mxu0 0
    %456 = vmatprep.subr.bf16.mxu0 0
    %457 = vmatpush1.bf16.msra.mxu0 0
    %458 = vmatprep.subr.bf16.mxu0 0
    %459 = vmatpush1.bf16.msra.mxu0 0
    %460 = vmatprep.subr.bf16.mxu0 %v400
    %461 = vmatpush1.bf16.msra.mxu0 %v397
    %462 = vmatprep.subr.bf16.mxu0 0
    %463 = vmatpush2.bf16.msra.mxu0 0
    %464 = vmatprep.subr.bf16.mxu0 0
    %465 = vmatpush2.bf16.msra.mxu0 0
    %466 = vmatprep.subr.bf16.mxu0 0
    %467 = vmatpush2.bf16.msra.mxu0 0
    %468 = vmatprep.subr.bf16.mxu0 0
    %469 = vmatpush2.bf16.msra.mxu0 0
    %470 = vmatprep.subr.bf16.mxu0 0
    %471 = vmatpush2.bf16.msra.mxu0 0
    %472 = vmatprep.subr.bf16.mxu0 0
    %473 = vmatpush2.bf16.msra.mxu0 0
    %474 = vmatprep.subr.bf16.mxu0 0
    %475 = vmatpush2.bf16.msra.mxu0 0
    %476 = vmatprep.subr.bf16.mxu0 0
    %477 = vmatpush2.bf16.msra.mxu0 0
    %478 = vmatprep.mubr.bf16.mxu0 0
    %479 = vmatmul.mubr.bf16.gmra.mxu0 %v388
    %v480 = vpop.f32.mrf.mxu0
    %v481 = vadd.f32 0.0, %v480
    %v482 = vpop.f32.mrf.mxu0
    %v483 = vadd.f32 0.0, %v482
    %v484 = vpop.f32.mrf.mxu0
    %v485 = vpop.f32.mrf.mxu0
    %486 = vdwg.mxu0
    %487 = vmatprep.subr.bf16.mxu0 0
    %488 = vmatpush1.bf16.msra.mxu0 0
    %489 = vmatprep.subr.bf16.mxu0 0
    %490 = vmatpush1.bf16.msra.mxu0 0
    %491 = vmatprep.subr.bf16.mxu0 0
    %492 = vmatpush1.bf16.msra.mxu0 0
    %493 = vmatprep.subr.bf16.mxu0 0
    %494 = vmatpush1.bf16.msra.mxu0 0
    %495 = vmatprep.subr.bf16.mxu0 0
    %496 = vmatpush1.bf16.msra.mxu0 0
    %497 = vmatprep.subr.bf16.mxu0 0
    %498 = vmatpush1.bf16.msra.mxu0 0
    %499 = vmatprep.subr.bf16.mxu0 0
    %500 = vmatpush1.bf16.msra.mxu0 0
    %501 = vmatprep.subr.bf16.mxu0 0
    %502 = vmatpush1.bf16.msra.mxu0 %v403
    %503 = vmatprep.subr.bf16.mxu0 0
    %504 = vmatpush2.bf16.msra.mxu0 0
    %505 = vmatprep.subr.bf16.mxu0 0
    %506 = vmatpush2.bf16.msra.mxu0 0
    %507 = vmatprep.subr.bf16.mxu0 0
    %508 = vmatpush2.bf16.msra.mxu0 0
    %509 = vmatprep.subr.bf16.mxu0 0
    %510 = vmatpush2.bf16.msra.mxu0 0
    %511 = vmatprep.subr.bf16.mxu0 0
    %512 = vmatpush2.bf16.msra.mxu0 0
    %513 = vmatprep.subr.bf16.mxu0 0
    %514 = vmatpush2.bf16.msra.mxu0 0
    %515 = vmatprep.subr.bf16.mxu0 0
    %516 = vmatpush2.bf16.msra.mxu0 0
    %517 = vmatprep.subr.bf16.mxu0 0
    %518 = vmatpush2.bf16.msra.mxu0 0
    %519 = vmatprep.mubr.bf16.mxu0 0
    %520 = vmatmul.mubr.bf16.gmra.mxu0 %v388
    %v521 = vpop.f32.mrf.mxu0
    %v522 = vadd.f32 0.0, %v521
    %v523 = vpop.f32.mrf.mxu0
    %v524 = vpop.f32.mrf.mxu0
    %v525 = vpop.f32.mrf.mxu0
    %526 = vdwg.mxu0
    %v527 = vadd.f32 %v264, %v440
    %v528 = vadd.f32 %v266, %v442
    %v529 = vadd.f32 %v305, %v481
    %v530 = vadd.f32 %v307, %v483
    %v531 = vadd.f32 %v346, %v522
    %v532 = vld [vmem:[%s0] sm:$0xff]
    %v533 = vld [vmem:[%s0 + $0x8] sm:$0xff]
    %v534 = vld [vmem:[%s0 + $0x10] sm:$0xf]
    %v537 = vcombine.high %v532, %v532
    %v538 = vcombine.high %v533, %v533
    %v541 = vpack.c.bf16 %v532, %v532
    %v542 = vpack.c.bf16 %v537, %v537
    %v543 = vpack.c.bf16 %v533, %v533
    %v544 = vpack.c.bf16 %v538, %v538
    %v545 = vpack.c.bf16 %v534, %v534
    %s546 = scalar_lea.vmem %s2, 6
    %v547 = vld [vmem:[%s546] sm:$0x3]
    %553 = vrot.lane.b32.xlu0 %v541, 110
    %v554 = vpop.permute.xlu0 %553
    %555 = vrot.lane.b32.xlu0 %v542, 110
    %v556 = vpop.permute.xlu0 %555
    %557 = vrot.lane.b32.xlu0 %v543, 110
    %v558 = vpop.permute.xlu0 %557
    %559 = vrot.lane.b32.xlu0 %v544, 110
    %v560 = vpop.permute.xlu0 %559
    %561 = vrot.lane.b32.xlu0 %v545, 110
    %v562 = vpop.permute.xlu0 %561
    %vm563 = vcmask 900096
    %v564 = vsel %vm563, %v554, %v556
    %v565 = vsel %vm563, %v556, %v558
    %v566 = vsel %vm563, %v558, %v560
    %v567 = vsel %vm563, %v560, %v562
    %v569 = vsel %vm69, %v547, 0
    %v572 = vsel %vm73, %v564, 0
    %v575 = vsel %vm73, %v565, 0
    %v578 = vsel %vm73, %v566, 0
    %v581 = vsel %vm73, %v567, 0
    %v584 = vsel %vm73, %v562, 0
    %586 = vmatprep.subr.bf16.mxu0 0
    %587 = vmatpush1.bf16.msra.mxu0 0
    %588 = vmatprep.subr.bf16.mxu0 0
    %589 = vmatpush1.bf16.msra.mxu0 0
    %590 = vmatprep.subr.bf16.mxu0 0
    %591 = vmatpush1.bf16.msra.mxu0 0
    %592 = vmatprep.subr.bf16.mxu0 0
    %593 = vmatpush1.bf16.msra.mxu0 0
    %594 = vmatprep.subr.bf16.mxu0 0
    %595 = vmatpush1.bf16.msra.mxu0 0
    %596 = vmatprep.subr.bf16.mxu0 0
    %597 = vmatpush1.bf16.msra.mxu0 0
    %598 = vmatprep.subr.bf16.mxu0 0
    %599 = vmatpush1.bf16.msra.mxu0 0
    %600 = vmatprep.subr.bf16.mxu0 %v575
    %601 = vmatpush1.bf16.msra.mxu0 %v572
    %602 = vmatprep.subr.bf16.mxu0 0
    %603 = vmatpush2.bf16.msra.mxu0 0
    %604 = vmatprep.subr.bf16.mxu0 0
    %605 = vmatpush2.bf16.msra.mxu0 0
    %606 = vmatprep.subr.bf16.mxu0 0
    %607 = vmatpush2.bf16.msra.mxu0 0
    %608 = vmatprep.subr.bf16.mxu0 0
    %609 = vmatpush2.bf16.msra.mxu0 0
    %610 = vmatprep.subr.bf16.mxu0 0
    %611 = vmatpush2.bf16.msra.mxu0 0
    %612 = vmatprep.subr.bf16.mxu0 0
    %613 = vmatpush2.bf16.msra.mxu0 0
    %614 = vmatprep.subr.bf16.mxu0 0
    %615 = vmatpush2.bf16.msra.mxu0 0
    %616 = vmatprep.subr.bf16.mxu0 0
    %617 = vmatpush2.bf16.msra.mxu0 0
    %618 = vmatprep.mubr.bf16.mxu0 0
    %619 = vmatmul.mubr.bf16.gmra.mxu0 %v569
    %v620 = vpop.f32.mrf.mxu0
    %v621 = vadd.f32 0.0, %v620
    %v622 = vpop.f32.mrf.mxu0
    %v623 = vadd.f32 0.0, %v622
    %v624 = vpop.f32.mrf.mxu0
    %v625 = vpop.f32.mrf.mxu0
    %626 = vdwg.mxu0
    %627 = vmatprep.subr.bf16.mxu0 0
    %628 = vmatpush1.bf16.msra.mxu0 0
    %629 = vmatprep.subr.bf16.mxu0 0
    %630 = vmatpush1.bf16.msra.mxu0 0
    %631 = vmatprep.subr.bf16.mxu0 0
    %632 = vmatpush1.bf16.msra.mxu0 0
    %633 = vmatprep.subr.bf16.mxu0 0
    %634 = vmatpush1.bf16.msra.mxu0 0
    %635 = vmatprep.subr.bf16.mxu0 0
    %636 = vmatpush1.bf16.msra.mxu0 0
    %637 = vmatprep.subr.bf16.mxu0 0
    %638 = vmatpush1.bf16.msra.mxu0 0
    %639 = vmatprep.subr.bf16.mxu0 0
    %640 = vmatpush1.bf16.msra.mxu0 0
    %641 = vmatprep.subr.bf16.mxu0 %v581
    %642 = vmatpush1.bf16.msra.mxu0 %v578
    %643 = vmatprep.subr.bf16.mxu0 0
    %644 = vmatpush2.bf16.msra.mxu0 0
    %645 = vmatprep.subr.bf16.mxu0 0
    %646 = vmatpush2.bf16.msra.mxu0 0
    %647 = vmatprep.subr.bf16.mxu0 0
    %648 = vmatpush2.bf16.msra.mxu0 0
    %649 = vmatprep.subr.bf16.mxu0 0
    %650 = vmatpush2.bf16.msra.mxu0 0
    %651 = vmatprep.subr.bf16.mxu0 0
    %652 = vmatpush2.bf16.msra.mxu0 0
    %653 = vmatprep.subr.bf16.mxu0 0
    %654 = vmatpush2.bf16.msra.mxu0 0
    %655 = vmatprep.subr.bf16.mxu0 0
    %656 = vmatpush2.bf16.msra.mxu0 0
    %657 = vmatprep.subr.bf16.mxu0 0
    %658 = vmatpush2.bf16.msra.mxu0 0
    %659 = vmatprep.mubr.bf16.mxu0 0
    %660 = vmatmul.mubr.bf16.gmra.mxu0 %v569
    %v661 = vpop.f32.mrf.mxu0
    %v662 = vadd.f32 0.0, %v661
    %v663 = vpop.f32.mrf.mxu0
    %v664 = vadd.f32 0.0, %v663
    %v665 = vpop.f32.mrf.mxu0
    %v666 = vpop.f32.mrf.mxu0
    %667 = vdwg.mxu0
    %668 = vmatprep.subr.bf16.mxu0 0
    %669 = vmatpush1.bf16.msra.mxu0 0
    %670 = vmatprep.subr.bf16.mxu0 0
    %671 = vmatpush1.bf16.msra.mxu0 0
    %672 = vmatprep.subr.bf16.mxu0 0
    %673 = vmatpush1.bf16.msra.mxu0 0
    %674 = vmatprep.subr.bf16.mxu0 0
    %675 = vmatpush1.bf16.msra.mxu0 0
    %676 = vmatprep.subr.bf16.mxu0 0
    %677 = vmatpush1.bf16.msra.mxu0 0
    %678 = vmatprep.subr.bf16.mxu0 0
    %679 = vmatpush1.bf16.msra.mxu0 0
    %680 = vmatprep.subr.bf16.mxu0 0
    %681 = vmatpush1.bf16.msra.mxu0 0
    %682 = vmatprep.subr.bf16.mxu0 0
    %683 = vmatpush1.bf16.msra.mxu0 %v584
    %684 = vmatprep.subr.bf16.mxu0 0
    %685 = vmatpush2.bf16.msra.mxu0 0
    %686 = vmatprep.subr.bf16.mxu0 0
    %687 = vmatpush2.bf16.msra.mxu0 0
    %688 = vmatprep.subr.bf16.mxu0 0
    %689 = vmatpush2.bf16.msra.mxu0 0
    %690 = vmatprep.subr.bf16.mxu0 0
    %691 = vmatpush2.bf16.msra.mxu0 0
    %692 = vmatprep.subr.bf16.mxu0 0
    %693 = vmatpush2.bf16.msra.mxu0 0
    %694 = vmatprep.subr.bf16.mxu0 0
    %695 = vmatpush2.bf16.msra.mxu0 0
    %696 = vmatprep.subr.bf16.mxu0 0
    %697 = vmatpush2.bf16.msra.mxu0 0
    %698 = vmatprep.subr.bf16.mxu0 0
    %699 = vmatpush2.bf16.msra.mxu0 0
    %700 = vmatprep.mubr.bf16.mxu0 0
    %701 = vmatmul.mubr.bf16.gmra.mxu0 %v569
    %v702 = vpop.f32.mrf.mxu0
    %v703 = vadd.f32 0.0, %v702
    %v704 = vpop.f32.mrf.mxu0
    %v705 = vpop.f32.mrf.mxu0
    %v706 = vpop.f32.mrf.mxu0
    %707 = vdwg.mxu0
    %v708 = vadd.f32 %v527, %v621
    %v709 = vadd.f32 %v528, %v623
    %v710 = vadd.f32 %v529, %v662
    %v711 = vadd.f32 %v530, %v664
    %v712 = vadd.f32 %v531, %v703
    %v713 = vld [vmem:[%s0] sm:$0xff]
    %v714 = vld [vmem:[%s0 + $0x8] sm:$0xff]
    %v715 = vld [vmem:[%s0 + $0x10] sm:$0xf]
    %v718 = vcombine.high %v713, %v713
    %v719 = vcombine.high %v714, %v714
    %v722 = vpack.c.bf16 %v713, %v713
    %v723 = vpack.c.bf16 %v718, %v718
    %v724 = vpack.c.bf16 %v714, %v714
    %v725 = vpack.c.bf16 %v719, %v719
    %v726 = vpack.c.bf16 %v715, %v715
    %s727 = scalar_lea.vmem %s2, 8
    %v728 = vld [vmem:[%s727] sm:$0x3]
    %734 = vrot.lane.b32.xlu0 %v722, 109
    %v735 = vpop.permute.xlu0 %734
    %736 = vrot.lane.b32.xlu0 %v723, 109
    %v737 = vpop.permute.xlu0 %736
    %738 = vrot.lane.b32.xlu0 %v724, 109
    %v739 = vpop.permute.xlu0 %738
    %740 = vrot.lane.b32.xlu0 %v725, 109
    %v741 = vpop.permute.xlu0 %740
    %742 = vrot.lane.b32.xlu0 %v726, 109
    %v743 = vpop.permute.xlu0 %742
    %vm744 = vcmask 891904
    %v745 = vsel %vm744, %v735, %v737
    %v746 = vsel %vm744, %v737, %v739
    %v747 = vsel %vm744, %v739, %v741
    %v748 = vsel %vm744, %v741, %v743
    %v750 = vsel %vm69, %v728, 0
    %v753 = vsel %vm73, %v745, 0
    %v756 = vsel %vm73, %v746, 0
    %v759 = vsel %vm73, %v747, 0
    %v762 = vsel %vm73, %v748, 0
    %v765 = vsel %vm73, %v743, 0
    %767 = vmatprep.subr.bf16.mxu0 0
    %768 = vmatpush1.bf16.msra.mxu0 0
    %769 = vmatprep.subr.bf16.mxu0 0
    %770 = vmatpush1.bf16.msra.mxu0 0
    %771 = vmatprep.subr.bf16.mxu0 0
    %772 = vmatpush1.bf16.msra.mxu0 0
    %773 = vmatprep.subr.bf16.mxu0 0
    %774 = vmatpush1.bf16.msra.mxu0 0
    %775 = vmatprep.subr.bf16.mxu0 0
    %776 = vmatpush1.bf16.msra.mxu0 0
    %777 = vmatprep.subr.bf16.mxu0 0
    %778 = vmatpush1.bf16.msra.mxu0 0
    %779 = vmatprep.subr.bf16.mxu0 0
    %780 = vmatpush1.bf16.msra.mxu0 0
    %781 = vmatprep.subr.bf16.mxu0 %v756
    %782 = vmatpush1.bf16.msra.mxu0 %v753
    %783 = vmatprep.subr.bf16.mxu0 0
    %784 = vmatpush2.bf16.msra.mxu0 0
    %785 = vmatprep.subr.bf16.mxu0 0
    %786 = vmatpush2.bf16.msra.mxu0 0
    %787 = vmatprep.subr.bf16.mxu0 0
    %788 = vmatpush2.bf16.msra.mxu0 0
    %789 = vmatprep.subr.bf16.mxu0 0
    %790 = vmatpush2.bf16.msra.mxu0 0
    %791 = vmatprep.subr.bf16.mxu0 0
    %792 = vmatpush2.bf16.msra.mxu0 0
    %793 = vmatprep.subr.bf16.mxu0 0
    %794 = vmatpush2.bf16.msra.mxu0 0
    %795 = vmatprep.subr.bf16.mxu0 0
    %796 = vmatpush2.bf16.msra.mxu0 0
    %797 = vmatprep.subr.bf16.mxu0 0
    %798 = vmatpush2.bf16.msra.mxu0 0
    %799 = vmatprep.mubr.bf16.mxu0 0
    %800 = vmatmul.mubr.bf16.gmra.mxu0 %v750
    %v801 = vpop.f32.mrf.mxu0
    %v802 = vadd.f32 0.0, %v801
    %v803 = vpop.f32.mrf.mxu0
    %v804 = vadd.f32 0.0, %v803
    %v805 = vpop.f32.mrf.mxu0
    %v806 = vpop.f32.mrf.mxu0
    %807 = vdwg.mxu0
    %808 = vmatprep.subr.bf16.mxu0 0
    %809 = vmatpush1.bf16.msra.mxu0 0
    %810 = vmatprep.subr.bf16.mxu0 0
    %811 = vmatpush1.bf16.msra.mxu0 0
    %812 = vmatprep.subr.bf16.mxu0 0
    %813 = vmatpush1.bf16.msra.mxu0 0
    %814 = vmatprep.subr.bf16.mxu0 0
    %815 = vmatpush1.bf16.msra.mxu0 0
    %816 = vmatprep.subr.bf16.mxu0 0
    %817 = vmatpush1.bf16.msra.mxu0 0
    %818 = vmatprep.subr.bf16.mxu0 0
    %819 = vmatpush1.bf16.msra.mxu0 0
    %820 = vmatprep.subr.bf16.mxu0 0
    %821 = vmatpush1.bf16.msra.mxu0 0
    %822 = vmatprep.subr.bf16.mxu0 %v762
    %823 = vmatpush1.bf16.msra.mxu0 %v759
    %824 = vmatprep.subr.bf16.mxu0 0
    %825 = vmatpush2.bf16.msra.mxu0 0
    %826 = vmatprep.subr.bf16.mxu0 0
    %827 = vmatpush2.bf16.msra.mxu0 0
    %828 = vmatprep.subr.bf16.mxu0 0
    %829 = vmatpush2.bf16.msra.mxu0 0
    %830 = vmatprep.subr.bf16.mxu0 0
    %831 = vmatpush2.bf16.msra.mxu0 0
    %832 = vmatprep.subr.bf16.mxu0 0
    %833 = vmatpush2.bf16.msra.mxu0 0
    %834 = vmatprep.subr.bf16.mxu0 0
    %835 = vmatpush2.bf16.msra.mxu0 0
    %836 = vmatprep.subr.bf16.mxu0 0
    %837 = vmatpush2.bf16.msra.mxu0 0
    %838 = vmatprep.subr.bf16.mxu0 0
    %839 = vmatpush2.bf16.msra.mxu0 0
    %840 = vmatprep.mubr.bf16.mxu0 0
    %841 = vmatmul.mubr.bf16.gmra.mxu0 %v750
    %v842 = vpop.f32.mrf.mxu0
    %v843 = vadd.f32 0.0, %v842
    %v844 = vpop.f32.mrf.mxu0
    %v845 = vadd.f32 0.0, %v844
    %v846 = vpop.f32.mrf.mxu0
    %v847 = vpop.f32.mrf.mxu0
    %848 = vdwg.mxu0
    %849 = vmatprep.subr.bf16.mxu0 0
    %850 = vmatpush1.bf16.msra.mxu0 0
    %851 = vmatprep.subr.bf16.mxu0 0
    %852 = vmatpush1.bf16.msra.mxu0 0
    %853 = vmatprep.subr.bf16.mxu0 0
    %854 = vmatpush1.bf16.msra.mxu0 0
    %855 = vmatprep.subr.bf16.mxu0 0
    %856 = vmatpush1.bf16.msra.mxu0 0
    %857 = vmatprep.subr.bf16.mxu0 0
    %858 = vmatpush1.bf16.msra.mxu0 0
    %859 = vmatprep.subr.bf16.mxu0 0
    %860 = vmatpush1.bf16.msra.mxu0 0
    %861 = vmatprep.subr.bf16.mxu0 0
    %862 = vmatpush1.bf16.msra.mxu0 0
    %863 = vmatprep.subr.bf16.mxu0 0
    %864 = vmatpush1.bf16.msra.mxu0 %v765
    %865 = vmatprep.subr.bf16.mxu0 0
    %866 = vmatpush2.bf16.msra.mxu0 0
    %867 = vmatprep.subr.bf16.mxu0 0
    %868 = vmatpush2.bf16.msra.mxu0 0
    %869 = vmatprep.subr.bf16.mxu0 0
    %870 = vmatpush2.bf16.msra.mxu0 0
    %871 = vmatprep.subr.bf16.mxu0 0
    %872 = vmatpush2.bf16.msra.mxu0 0
    %873 = vmatprep.subr.bf16.mxu0 0
    %874 = vmatpush2.bf16.msra.mxu0 0
    %875 = vmatprep.subr.bf16.mxu0 0
    %876 = vmatpush2.bf16.msra.mxu0 0
    %877 = vmatprep.subr.bf16.mxu0 0
    %878 = vmatpush2.bf16.msra.mxu0 0
    %879 = vmatprep.subr.bf16.mxu0 0
    %880 = vmatpush2.bf16.msra.mxu0 0
    %881 = vmatprep.mubr.bf16.mxu0 0
    %882 = vmatmul.mubr.bf16.gmra.mxu0 %v750
    %v883 = vpop.f32.mrf.mxu0
    %v884 = vadd.f32 0.0, %v883
    %v885 = vpop.f32.mrf.mxu0
    %v886 = vpop.f32.mrf.mxu0
    %v887 = vpop.f32.mrf.mxu0
    %888 = vdwg.mxu0
    %v889 = vadd.f32 %v708, %v802
    %v890 = vadd.f32 %v709, %v804
    %v891 = vadd.f32 %v710, %v843
    %v892 = vadd.f32 %v711, %v845
    %v893 = vadd.f32 %v712, %v884
    %v894 = vld [vmem:[%s0] sm:$0xff]
    %v895 = vld [vmem:[%s0 + $0x8] sm:$0xff]
    %v896 = vld [vmem:[%s0 + $0x10] sm:$0xf]
    %v899 = vcombine.high %v894, %v894
    %v900 = vcombine.high %v895, %v895
    %v903 = vpack.c.bf16 %v894, %v894
    %v904 = vpack.c.bf16 %v899, %v899
    %v905 = vpack.c.bf16 %v895, %v895
    %v906 = vpack.c.bf16 %v900, %v900
    %v907 = vpack.c.bf16 %v896, %v896
    %s908 = scalar_lea.vmem %s2, 10
    %v909 = vld [vmem:[%s908] sm:$0x3]
    %915 = vrot.lane.b32.xlu0 %v903, 108
    %v916 = vpop.permute.xlu0 %915
    %917 = vrot.lane.b32.xlu0 %v904, 108
    %v918 = vpop.permute.xlu0 %917
    %919 = vrot.lane.b32.xlu0 %v905, 108
    %v920 = vpop.permute.xlu0 %919
    %921 = vrot.lane.b32.xlu0 %v906, 108
    %v922 = vpop.permute.xlu0 %921
    %923 = vrot.lane.b32.xlu0 %v907, 108
    %v924 = vpop.permute.xlu0 %923
    %vm925 = vcmask 883712
    %v926 = vsel %vm925, %v916, %v918
    %v927 = vsel %vm925, %v918, %v920
    %v928 = vsel %vm925, %v920, %v922
    %v929 = vsel %vm925, %v922, %v924
    %v931 = vsel %vm69, %v909, 0
    %v934 = vsel %vm73, %v926, 0
    %v937 = vsel %vm73, %v927, 0
    %v940 = vsel %vm73, %v928, 0
    %v943 = vsel %vm73, %v929, 0
    %v946 = vsel %vm73, %v924, 0
    %948 = vmatprep.subr.bf16.mxu0 0
    %949 = vmatpush1.bf16.msra.mxu0 0
    %950 = vmatprep.subr.bf16.mxu0 0
    %951 = vmatpush1.bf16.msra.mxu0 0
    %952 = vmatprep.subr.bf16.mxu0 0
    %953 = vmatpush1.bf16.msra.mxu0 0
    %954 = vmatprep.subr.bf16.mxu0 0
    %955 = vmatpush1.bf16.msra.mxu0 0
    %956 = vmatprep.subr.bf16.mxu0 0
    %957 = vmatpush1.bf16.msra.mxu0 0
    %958 = vmatprep.subr.bf16.mxu0 0
    %959 = vmatpush1.bf16.msra.mxu0 0
    %960 = vmatprep.subr.bf16.mxu0 0
    %961 = vmatpush1.bf16.msra.mxu0 0
    %962 = vmatprep.subr.bf16.mxu0 %v937
    %963 = vmatpush1.bf16.msra.mxu0 %v934
    %964 = vmatprep.subr.bf16.mxu0 0
    %965 = vmatpush2.bf16.msra.mxu0 0
    %966 = vmatprep.subr.bf16.mxu0 0
    %967 = vmatpush2.bf16.msra.mxu0 0
    %968 = vmatprep.subr.bf16.mxu0 0
    %969 = vmatpush2.bf16.msra.mxu0 0
    %970 = vmatprep.subr.bf16.mxu0 0
    %971 = vmatpush2.bf16.msra.mxu0 0
    %972 = vmatprep.subr.bf16.mxu0 0
    %973 = vmatpush2.bf16.msra.mxu0 0
    %974 = vmatprep.subr.bf16.mxu0 0
    %975 = vmatpush2.bf16.msra.mxu0 0
    %976 = vmatprep.subr.bf16.mxu0 0
    %977 = vmatpush2.bf16.msra.mxu0 0
    %978 = vmatprep.subr.bf16.mxu0 0
    %979 = vmatpush2.bf16.msra.mxu0 0
    %980 = vmatprep.mubr.bf16.mxu0 0
    %981 = vmatmul.mubr.bf16.gmra.mxu0 %v931
    %v982 = vpop.f32.mrf.mxu0
    %v983 = vadd.f32 0.0, %v982
    %v984 = vpop.f32.mrf.mxu0
    %v985 = vadd.f32 0.0, %v984
    %v986 = vpop.f32.mrf.mxu0
    %v987 = vpop.f32.mrf.mxu0
    %988 = vdwg.mxu0
    %989 = vmatprep.subr.bf16.mxu0 0
    %990 = vmatpush1.bf16.msra.mxu0 0
    %991 = vmatprep.subr.bf16.mxu0 0
    %992 = vmatpush1.bf16.msra.mxu0 0
    %993 = vmatprep.subr.bf16.mxu0 0
    %994 = vmatpush1.bf16.msra.mxu0 0
    %995 = vmatprep.subr.bf16.mxu0 0
    %996 = vmatpush1.bf16.msra.mxu0 0
    %997 = vmatprep.subr.bf16.mxu0 0
    %998 = vmatpush1.bf16.msra.mxu0 0
    %999 = vmatprep.subr.bf16.mxu0 0
    %1000 = vmatpush1.bf16.msra.mxu0 0
    %1001 = vmatprep.subr.bf16.mxu0 0
    %1002 = vmatpush1.bf16.msra.mxu0 0
    %1003 = vmatprep.subr.bf16.mxu0 %v943
    %1004 = vmatpush1.bf16.msra.mxu0 %v940
    %1005 = vmatprep.subr.bf16.mxu0 0
    %1006 = vmatpush2.bf16.msra.mxu0 0
    %1007 = vmatprep.subr.bf16.mxu0 0
    %1008 = vmatpush2.bf16.msra.mxu0 0
    %1009 = vmatprep.subr.bf16.mxu0 0
    %1010 = vmatpush2.bf16.msra.mxu0 0
    %1011 = vmatprep.subr.bf16.mxu0 0
    %1012 = vmatpush2.bf16.msra.mxu0 0
    %1013 = vmatprep.subr.bf16.mxu0 0
    %1014 = vmatpush2.bf16.msra.mxu0 0
    %1015 = vmatprep.subr.bf16.mxu0 0
    %1016 = vmatpush2.bf16.msra.mxu0 0
    %1017 = vmatprep.subr.bf16.mxu0 0
    %1018 = vmatpush2.bf16.msra.mxu0 0
    %1019 = vmatprep.subr.bf16.mxu0 0
    %1020 = vmatpush2.bf16.msra.mxu0 0
    %1021 = vmatprep.mubr.bf16.mxu0 0
    %1022 = vmatmul.mubr.bf16.gmra.mxu0 %v931
    %v1023 = vpop.f32.mrf.mxu0
    %v1024 = vadd.f32 0.0, %v1023
    %v1025 = vpop.f32.mrf.mxu0
    %v1026 = vadd.f32 0.0, %v1025
    %v1027 = vpop.f32.mrf.mxu0
    %v1028 = vpop.f32.mrf.mxu0
    %1029 = vdwg.mxu0
    %1030 = vmatprep.subr.bf16.mxu0 0
    %1031 = vmatpush1.bf16.msra.mxu0 0
    %1032 = vmatprep.subr.bf16.mxu0 0
    %1033 = vmatpush1.bf16.msra.mxu0 0
    %1034 = vmatprep.subr.bf16.mxu0 0
    %1035 = vmatpush1.bf16.msra.mxu0 0
    %1036 = vmatprep.subr.bf16.mxu0 0
    %1037 = vmatpush1.bf16.msra.mxu0 0
    %1038 = vmatprep.subr.bf16.mxu0 0
    %1039 = vmatpush1.bf16.msra.mxu0 0
    %1040 = vmatprep.subr.bf16.mxu0 0
    %1041 = vmatpush1.bf16.msra.mxu0 0
    %1042 = vmatprep.subr.bf16.mxu0 0
    %1043 = vmatpush1.bf16.msra.mxu0 0
    %1044 = vmatprep.subr.bf16.mxu0 0
    %1045 = vmatpush1.bf16.msra.mxu0 %v946
    %1046 = vmatprep.subr.bf16.mxu0 0
    %1047 = vmatpush2.bf16.msra.mxu0 0
    %1048 = vmatprep.subr.bf16.mxu0 0
    %1049 = vmatpush2.bf16.msra.mxu0 0
    %1050 = vmatprep.subr.bf16.mxu0 0
    %1051 = vmatpush2.bf16.msra.mxu0 0
    %1052 = vmatprep.subr.bf16.mxu0 0
    %1053 = vmatpush2.bf16.msra.mxu0 0
    %1054 = vmatprep.subr.bf16.mxu0 0
    %1055 = vmatpush2.bf16.msra.mxu0 0
    %1056 = vmatprep.subr.bf16.mxu0 0
    %1057 = vmatpush2.bf16.msra.mxu0 0
    %1058 = vmatprep.subr.bf16.mxu0 0
    %1059 = vmatpush2.bf16.msra.mxu0 0
    %1060 = vmatprep.subr.bf16.mxu0 0
    %1061 = vmatpush2.bf16.msra.mxu0 0
    %1062 = vmatprep.mubr.bf16.mxu0 0
    %1063 = vmatmul.mubr.bf16.gmra.mxu0 %v931
    %v1064 = vpop.f32.mrf.mxu0
    %v1065 = vadd.f32 0.0, %v1064
    %v1066 = vpop.f32.mrf.mxu0
    %v1067 = vpop.f32.mrf.mxu0
    %v1068 = vpop.f32.mrf.mxu0
    %1069 = vdwg.mxu0
    %v1070 = vadd.f32 %v889, %v983
    %v1071 = vadd.f32 %v890, %v985
    %v1072 = vadd.f32 %v891, %v1024
    %v1073 = vadd.f32 %v892, %v1026
    %v1074 = vadd.f32 %v893, %v1065
    %v1075 = vld [vmem:[%s0] sm:$0xff]
    %v1076 = vld [vmem:[%s0 + $0x8] sm:$0xff]
    %v1077 = vld [vmem:[%s0 + $0x10] sm:$0xff]
    %v1081 = vcombine.high %v1075, %v1075
    %v1082 = vcombine.high %v1076, %v1076
    %v1083 = vcombine.high %v1077, %v1077
    %v1087 = vpack.c.bf16 %v1075, %v1075
    %v1088 = vpack.c.bf16 %v1081, %v1081
    %v1089 = vpack.c.bf16 %v1076, %v1076
    %v1090 = vpack.c.bf16 %v1082, %v1082
    %v1091 = vpack.c.bf16 %v1077, %v1077
    %v1092 = vpack.c.bf16 %v1083, %v1083
    %s1093 = scalar_lea.vmem %s2, 12
    %v1094 = vld [vmem:[%s1093] sm:$0x3]
    %1101 = vrot.lane.b32.xlu0 %v1087, 92
    %v1102 = vpop.permute.xlu0 %1101
    %1103 = vrot.lane.b32.xlu0 %v1088, 92
    %v1104 = vpop.permute.xlu0 %1103
    %1105 = vrot.lane.b32.xlu0 %v1089, 92
    %v1106 = vpop.permute.xlu0 %1105
    %1107 = vrot.lane.b32.xlu0 %v1090, 92
    %v1108 = vpop.permute.xlu0 %1107
    %1109 = vrot.lane.b32.xlu0 %v1091, 92
    %v1110 = vpop.permute.xlu0 %1109
    %1111 = vrot.lane.b32.xlu0 %v1092, 92
    %v1112 = vpop.permute.xlu0 %1111
    %vm1113 = vcmask 752640
    %v1114 = vsel %vm1113, %v1102, %v1104
    %v1115 = vsel %vm1113, %v1104, %v1106
    %v1116 = vsel %vm1113, %v1106, %v1108
    %v1117 = vsel %vm1113, %v1108, %v1110
    %v1118 = vsel %vm1113, %v1110, %v1112
    %v1120 = vsel %vm69, %v1094, 0
    %v1123 = vsel %vm73, %v1114, 0
    %v1126 = vsel %vm73, %v1115, 0
    %v1129 = vsel %vm73, %v1116, 0
    %v1132 = vsel %vm73, %v1117, 0
    %v1135 = vsel %vm73, %v1118, 0
    %1137 = vmatprep.subr.bf16.mxu0 0
    %1138 = vmatpush1.bf16.msra.mxu0 0
    %1139 = vmatprep.subr.bf16.mxu0 0
    %1140 = vmatpush1.bf16.msra.mxu0 0
    %1141 = vmatprep.subr.bf16.mxu0 0
    %1142 = vmatpush1.bf16.msra.mxu0 0
    %1143 = vmatprep.subr.bf16.mxu0 0
    %1144 = vmatpush1.bf16.msra.mxu0 0
    %1145 = vmatprep.subr.bf16.mxu0 0
    %1146 = vmatpush1.bf16.msra.mxu0 0
    %1147 = vmatprep.subr.bf16.mxu0 0
    %1148 = vmatpush1.bf16.msra.mxu0 0
    %1149 = vmatprep.subr.bf16.mxu0 0
    %1150 = vmatpush1.bf16.msra.mxu0 0
    %1151 = vmatprep.subr.bf16.mxu0 %v1126
    %1152 = vmatpush1.bf16.msra.mxu0 %v1123
    %1153 = vmatprep.subr.bf16.mxu0 0
    %1154 = vmatpush2.bf16.msra.mxu0 0
    %1155 = vmatprep.subr.bf16.mxu0 0
    %1156 = vmatpush2.bf16.msra.mxu0 0
    %1157 = vmatprep.subr.bf16.mxu0 0
    %1158 = vmatpush2.bf16.msra.mxu0 0
    %1159 = vmatprep.subr.bf16.mxu0 0
    %1160 = vmatpush2.bf16.msra.mxu0 0
    %1161 = vmatprep.subr.bf16.mxu0 0
    %1162 = vmatpush2.bf16.msra.mxu0 0
    %1163 = vmatprep.subr.bf16.mxu0 0
    %1164 = vmatpush2.bf16.msra.mxu0 0
    %1165 = vmatprep.subr.bf16.mxu0 0
    %1166 = vmatpush2.bf16.msra.mxu0 0
    %1167 = vmatprep.subr.bf16.mxu0 0
    %1168 = vmatpush2.bf16.msra.mxu0 0
    %1169 = vmatprep.mubr.bf16.mxu0 0
    %1170 = vmatmul.mubr.bf16.gmra.mxu0 %v1120
    %v1171 = vpop.f32.mrf.mxu0
    %v1172 = vadd.f32 0.0, %v1171
    %v1173 = vpop.f32.mrf.mxu0
    %v1174 = vadd.f32 0.0, %v1173
    %v1175 = vpop.f32.mrf.mxu0
    %v1176 = vpop.f32.mrf.mxu0
    %1177 = vdwg.mxu0
    %1178 = vmatprep.subr.bf16.mxu0 0
    %1179 = vmatpush1.bf16.msra.mxu0 0
    %1180 = vmatprep.subr.bf16.mxu0 0
    %1181 = vmatpush1.bf16.msra.mxu0 0
    %1182 = vmatprep.subr.bf16.mxu0 0
    %1183 = vmatpush1.bf16.msra.mxu0 0
    %1184 = vmatprep.subr.bf16.mxu0 0
    %1185 = vmatpush1.bf16.msra.mxu0 0
    %1186 = vmatprep.subr.bf16.mxu0 0
    %1187 = vmatpush1.bf16.msra.mxu0 0
    %1188 = vmatprep.subr.bf16.mxu0 0
    %1189 = vmatpush1.bf16.msra.mxu0 0
    %1190 = vmatprep.subr.bf16.mxu0 0
    %1191 = vmatpush1.bf16.msra.mxu0 0
    %1192 = vmatprep.subr.bf16.mxu0 %v1132
    %1193 = vmatpush1.bf16.msra.mxu0 %v1129
    %1194 = vmatprep.subr.bf16.mxu0 0
    %1195 = vmatpush2.bf16.msra.mxu0 0
    %1196 = vmatprep.subr.bf16.mxu0 0
    %1197 = vmatpush2.bf16.msra.mxu0 0
    %1198 = vmatprep.subr.bf16.mxu0 0
    %1199 = vmatpush2.bf16.msra.mxu0 0
    %1200 = vmatprep.subr.bf16.mxu0 0
    %1201 = vmatpush2.bf16.msra.mxu0 0
    %1202 = vmatprep.subr.bf16.mxu0 0
    %1203 = vmatpush2.bf16.msra.mxu0 0
    %1204 = vmatprep.subr.bf16.mxu0 0
    %1205 = vmatpush2.bf16.msra.mxu0 0
    %1206 = vmatprep.subr.bf16.mxu0 0
    %1207 = vmatpush2.bf16.msra.mxu0 0
    %1208 = vmatprep.subr.bf16.mxu0 0
    %1209 = vmatpush2.bf16.msra.mxu0 0
    %1210 = vmatprep.mubr.bf16.mxu0 0
    %1211 = vmatmul.mubr.bf16.gmra.mxu0 %v1120
    %v1212 = vpop.f32.mrf.mxu0
    %v1213 = vadd.f32 0.0, %v1212
    %v1214 = vpop.f32.mrf.mxu0
    %v1215 = vadd.f32 0.0, %v1214
    %v1216 = vpop.f32.mrf.mxu0
    %v1217 = vpop.f32.mrf.mxu0
    %1218 = vdwg.mxu0
    %1219 = vmatprep.subr.bf16.mxu0 0
    %1220 = vmatpush1.bf16.msra.mxu0 0
    %1221 = vmatprep.subr.bf16.mxu0 0
    %1222 = vmatpush1.bf16.msra.mxu0 0
    %1223 = vmatprep.subr.bf16.mxu0 0
    %1224 = vmatpush1.bf16.msra.mxu0 0
    %1225 = vmatprep.subr.bf16.mxu0 0
    %1226 = vmatpush1.bf16.msra.mxu0 0
    %1227 = vmatprep.subr.bf16.mxu0 0
    %1228 = vmatpush1.bf16.msra.mxu0 0
    %1229 = vmatprep.subr.bf16.mxu0 0
    %1230 = vmatpush1.bf16.msra.mxu0 0
    %1231 = vmatprep.subr.bf16.mxu0 0
    %1232 = vmatpush1.bf16.msra.mxu0 0
    %1233 = vmatprep.subr.bf16.mxu0 0
    %1234 = vmatpush1.bf16.msra.mxu0 %v1135
    %1235 = vmatprep.subr.bf16.mxu0 0
    %1236 = vmatpush2.bf16.msra.mxu0 0
    %1237 = vmatprep.subr.bf16.mxu0 0
    %1238 = vmatpush2.bf16.msra.mxu0 0
    %1239 = vmatprep.subr.bf16.mxu0 0
    %1240 = vmatpush2.bf16.msra.mxu0 0
    %1241 = vmatprep.subr.bf16.mxu0 0
    %1242 = vmatpush2.bf16.msra.mxu0 0
    %1243 = vmatprep.subr.bf16.mxu0 0
    %1244 = vmatpush2.bf16.msra.mxu0 0
    %1245 = vmatprep.subr.bf16.mxu0 0
    %1246 = vmatpush2.bf16.msra.mxu0 0
    %1247 = vmatprep.subr.bf16.mxu0 0
    %1248 = vmatpush2.bf16.msra.mxu0 0
    %1249 = vmatprep.subr.bf16.mxu0 0
    %1250 = vmatpush2.bf16.msra.mxu0 0
    %1251 = vmatprep.mubr.bf16.mxu0 0
    %1252 = vmatmul.mubr.bf16.gmra.mxu0 %v1120
    %v1253 = vpop.f32.mrf.mxu0
    %v1254 = vadd.f32 0.0, %v1253
    %v1255 = vpop.f32.mrf.mxu0
    %v1256 = vpop.f32.mrf.mxu0
    %v1257 = vpop.f32.mrf.mxu0
    %1258 = vdwg.mxu0
    %v1259 = vadd.f32 %v1070, %v1172
    %v1260 = vadd.f32 %v1071, %v1174
    %v1261 = vadd.f32 %v1072, %v1213
    %v1262 = vadd.f32 %v1073, %v1215
    %v1263 = vadd.f32 %v1074, %v1254
    %v1264 = vld [vmem:[%s0] sm:$0xff]
    %v1265 = vld [vmem:[%s0 + $0x8] sm:$0xff]
    %v1266 = vld [vmem:[%s0 + $0x10] sm:$0xff]
    %v1270 = vcombine.high %v1264, %v1264
    %v1271 = vcombine.high %v1265, %v1265
    %v1272 = vcombine.high %v1266, %v1266
    %v1276 = vpack.c.bf16 %v1264, %v1264
    %v1277 = vpack.c.bf16 %v1270, %v1270
    %v1278 = vpack.c.bf16 %v1265, %v1265
    %v1279 = vpack.c.bf16 %v1271, %v1271
    %v1280 = vpack.c.bf16 %v1266, %v1266
    %v1281 = vpack.c.bf16 %v1272, %v1272
    %s1282 = scalar_lea.vmem %s2, 14
    %v1283 = vld [vmem:[%s1282] sm:$0x3]
    %1290 = vrot.lane.b32.xlu0 %v1276, 91
    %v1291 = vpop.permute.xlu0 %1290
    %1292 = vrot.lane.b32.xlu0 %v1277, 91
    %v1293 = vpop.permute.xlu0 %1292
    %1294 = vrot.lane.b32.xlu0 %v1278, 91
    %v1295 = vpop.permute.xlu0 %1294
    %1296 = vrot.lane.b32.xlu0 %v1279, 91
    %v1297 = vpop.permute.xlu0 %1296
    %1298 = vrot.lane.b32.xlu0 %v1280, 91
    %v1299 = vpop.permute.xlu0 %1298
    %1300 = vrot.lane.b32.xlu0 %v1281, 91
    %v1301 = vpop.permute.xlu0 %1300
    %vm1302 = vcmask 744448
    %v1303 = vsel %vm1302, %v1291, %v1293
    %v1304 = vsel %vm1302, %v1293, %v1295
    %v1305 = vsel %vm1302, %v1295, %v1297
    %v1306 = vsel %vm1302, %v1297, %v1299
    %v1307 = vsel %vm1302, %v1299, %v1301
    %v1309 = vsel %vm69, %v1283, 0
    %v1312 = vsel %vm73, %v1303, 0
    %v1315 = vsel %vm73, %v1304, 0
    %v1318 = vsel %vm73, %v1305, 0
    %v1321 = vsel %vm73, %v1306, 0
    %v1324 = vsel %vm73, %v1307, 0
    %1326 = vmatprep.subr.bf16.mxu0 0
    %1327 = vmatpush1.bf16.msra.mxu0 0
    %1328 = vmatprep.subr.bf16.mxu0 0
    %1329 = vmatpush1.bf16.msra.mxu0 0
    %1330 = vmatprep.subr.bf16.mxu0 0
    %1331 = vmatpush1.bf16.msra.mxu0 0
    %1332 = vmatprep.subr.bf16.mxu0 0
    %1333 = vmatpush1.bf16.msra.mxu0 0
    %1334 = vmatprep.subr.bf16.mxu0 0
    %1335 = vmatpush1.bf16.msra.mxu0 0
    %1336 = vmatprep.subr.bf16.mxu0 0
    %1337 = vmatpush1.bf16.msra.mxu0 0
    %1338 = vmatprep.subr.bf16.mxu0 0
    %1339 = vmatpush1.bf16.msra.mxu0 0
    %1340 = vmatprep.subr.bf16.mxu0 %v1315
    %1341 = vmatpush1.bf16.msra.mxu0 %v1312
    %1342 = vmatprep.subr.bf16.mxu0 0
    %1343 = vmatpush2.bf16.msra.mxu0 0
    %1344 = vmatprep.subr.bf16.mxu0 0
    %1345 = vmatpush2.bf16.msra.mxu0 0
    %1346 = vmatprep.subr.bf16.mxu0 0
    %1347 = vmatpush2.bf16.msra.mxu0 0
    %1348 = vmatprep.subr.bf16.mxu0 0
    %1349 = vmatpush2.bf16.msra.mxu0 0
    %1350 = vmatprep.subr.bf16.mxu0 0
    %1351 = vmatpush2.bf16.msra.mxu0 0
    %1352 = vmatprep.subr.bf16.mxu0 0
    %1353 = vmatpush2.bf16.msra.mxu0 0
    %1354 = vmatprep.subr.bf16.mxu0 0
    %1355 = vmatpush2.bf16.msra.mxu0 0
    %1356 = vmatprep.subr.bf16.mxu0 0
    %1357 = vmatpush2.bf16.msra.mxu0 0
    %1358 = vmatprep.mubr.bf16.mxu0 0
    %1359 = vmatmul.mubr.bf16.gmra.mxu0 %v1309
    %v1360 = vpop.f32.mrf.mxu0
    %v1361 = vadd.f32 0.0, %v1360
    %v1362 = vpop.f32.mrf.mxu0
    %v1363 = vadd.f32 0.0, %v1362
    %v1364 = vpop.f32.mrf.mxu0
    %v1365 = vpop.f32.mrf.mxu0
    %1366 = vdwg.mxu0
    %1367 = vmatprep.subr.bf16.mxu0 0
    %1368 = vmatpush1.bf16.msra.mxu0 0
    %1369 = vmatprep.subr.bf16.mxu0 0
    %1370 = vmatpush1.bf16.msra.mxu0 0
    %1371 = vmatprep.subr.bf16.mxu0 0
    %1372 = vmatpush1.bf16.msra.mxu0 0
    %1373 = vmatprep.subr.bf16.mxu0 0
    %1374 = vmatpush1.bf16.msra.mxu0 0
    %1375 = vmatprep.subr.bf16.mxu0 0
    %1376 = vmatpush1.bf16.msra.mxu0 0
    %1377 = vmatprep.subr.bf16.mxu0 0
    %1378 = vmatpush1.bf16.msra.mxu0 0
    %1379 = vmatprep.subr.bf16.mxu0 0
    %1380 = vmatpush1.bf16.msra.mxu0 0
    %1381 = vmatprep.subr.bf16.mxu0 %v1321
    %1382 = vmatpush1.bf16.msra.mxu0 %v1318
    %1383 = vmatprep.subr.bf16.mxu0 0
    %1384 = vmatpush2.bf16.msra.mxu0 0
    %1385 = vmatprep.subr.bf16.mxu0 0
    %1386 = vmatpush2.bf16.msra.mxu0 0
    %1387 = vmatprep.subr.bf16.mxu0 0
    %1388 = vmatpush2.bf16.msra.mxu0 0
    %1389 = vmatprep.subr.bf16.mxu0 0
    %1390 = vmatpush2.bf16.msra.mxu0 0
    %1391 = vmatprep.subr.bf16.mxu0 0
    %1392 = vmatpush2.bf16.msra.mxu0 0
    %1393 = vmatprep.subr.bf16.mxu0 0
    %1394 = vmatpush2.bf16.msra.mxu0 0
    %1395 = vmatprep.subr.bf16.mxu0 0
    %1396 = vmatpush2.bf16.msra.mxu0 0
    %1397 = vmatprep.subr.bf16.mxu0 0
    %1398 = vmatpush2.bf16.msra.mxu0 0
    %1399 = vmatprep.mubr.bf16.mxu0 0
    %1400 = vmatmul.mubr.bf16.gmra.mxu0 %v1309
    %v1401 = vpop.f32.mrf.mxu0
    %v1402 = vadd.f32 0.0, %v1401
    %v1403 = vpop.f32.mrf.mxu0
    %v1404 = vadd.f32 0.0, %v1403
    %v1405 = vpop.f32.mrf.mxu0
    %v1406 = vpop.f32.mrf.mxu0
    %1407 = vdwg.mxu0
    %1408 = vmatprep.subr.bf16.mxu0 0
    %1409 = vmatpush1.bf16.msra.mxu0 0
    %1410 = vmatprep.subr.bf16.mxu0 0
    %1411 = vmatpush1.bf16.msra.mxu0 0
    %1412 = vmatprep.subr.bf16.mxu0 0
    %1413 = vmatpush1.bf16.msra.mxu0 0
    %1414 = vmatprep.subr.bf16.mxu0 0
    %1415 = vmatpush1.bf16.msra.mxu0 0
    %1416 = vmatprep.subr.bf16.mxu0 0
    %1417 = vmatpush1.bf16.msra.mxu0 0
    %1418 = vmatprep.subr.bf16.mxu0 0
    %1419 = vmatpush1.bf16.msra.mxu0 0
    %1420 = vmatprep.subr.bf16.mxu0 0
    %1421 = vmatpush1.bf16.msra.mxu0 0
    %1422 = vmatprep.subr.bf16.mxu0 0
    %1423 = vmatpush1.bf16.msra.mxu0 %v1324
    %1424 = vmatprep.subr.bf16.mxu0 0
    %1425 = vmatpush2.bf16.msra.mxu0 0
    %1426 = vmatprep.subr.bf16.mxu0 0
    %1427 = vmatpush2.bf16.msra.mxu0 0
    %1428 = vmatprep.subr.bf16.mxu0 0
    %1429 = vmatpush2.bf16.msra.mxu0 0
    %1430 = vmatprep.subr.bf16.mxu0 0
    %1431 = vmatpush2.bf16.msra.mxu0 0
    %1432 = vmatprep.subr.bf16.mxu0 0
    %1433 = vmatpush2.bf16.msra.mxu0 0
    %1434 = vmatprep.subr.bf16.mxu0 0
    %1435 = vmatpush2.bf16.msra.mxu0 0
    %1436 = vmatprep.subr.bf16.mxu0 0
    %1437 = vmatpush2.bf16.msra.mxu0 0
    %1438 = vmatprep.subr.bf16.mxu0 0
    %1439 = vmatpush2.bf16.msra.mxu0 0
    %1440 = vmatprep.mubr.bf16.mxu0 0
    %1441 = vmatmul.mubr.bf16.gmra.mxu0 %v1309
    %v1442 = vpop.f32.mrf.mxu0
    %v1443 = vadd.f32 0.0, %v1442
    %v1444 = vpop.f32.mrf.mxu0
    %v1445 = vpop.f32.mrf.mxu0
    %v1446 = vpop.f32.mrf.mxu0
    %1447 = vdwg.mxu0
    %v1448 = vadd.f32 %v1259, %v1361
    %v1449 = vadd.f32 %v1260, %v1363
    %v1450 = vadd.f32 %v1261, %v1402
    %v1451 = vadd.f32 %v1262, %v1404
    %v1452 = vadd.f32 %v1263, %v1443
    %v1453 = vld [vmem:[%s0] sm:$0xff]
    %v1454 = vld [vmem:[%s0 + $0x8] sm:$0xff]
    %v1455 = vld [vmem:[%s0 + $0x10] sm:$0xff]
    %v1459 = vcombine.high %v1453, %v1453
    %v1460 = vcombine.high %v1454, %v1454
    %v1461 = vcombine.high %v1455, %v1455
    %v1465 = vpack.c.bf16 %v1453, %v1453
    %v1466 = vpack.c.bf16 %v1459, %v1459
    %v1467 = vpack.c.bf16 %v1454, %v1454
    %v1468 = vpack.c.bf16 %v1460, %v1460
    %v1469 = vpack.c.bf16 %v1455, %v1455
    %v1470 = vpack.c.bf16 %v1461, %v1461
    %s1471 = scalar_lea.vmem %s2, 16
    %v1472 = vld [vmem:[%s1471] sm:$0x3]
    %1479 = vrot.lane.b32.xlu0 %v1465, 90
    %v1480 = vpop.permute.xlu0 %1479
    %1481 = vrot.lane.b32.xlu0 %v1466, 90
    %v1482 = vpop.permute.xlu0 %1481
    %1483 = vrot.lane.b32.xlu0 %v1467, 90
    %v1484 = vpop.permute.xlu0 %1483
    %1485 = vrot.lane.b32.xlu0 %v1468, 90
    %v1486 = vpop.permute.xlu0 %1485
    %1487 = vrot.lane.b32.xlu0 %v1469, 90
    %v1488 = vpop.permute.xlu0 %1487
    %1489 = vrot.lane.b32.xlu0 %v1470, 90
    %v1490 = vpop.permute.xlu0 %1489
    %vm1491 = vcmask 736256
    %v1492 = vsel %vm1491, %v1480, %v1482
    %v1493 = vsel %vm1491, %v1482, %v1484
    %v1494 = vsel %vm1491, %v1484, %v1486
    %v1495 = vsel %vm1491, %v1486, %v1488
    %v1496 = vsel %vm1491, %v1488, %v1490
    %v1498 = vsel %vm69, %v1472, 0
    %v1501 = vsel %vm73, %v1492, 0
    %v1504 = vsel %vm73, %v1493, 0
    %v1507 = vsel %vm73, %v1494, 0
    %v1510 = vsel %vm73, %v1495, 0
    %v1513 = vsel %vm73, %v1496, 0
    %1515 = vmatprep.subr.bf16.mxu0 0
    %1516 = vmatpush1.bf16.msra.mxu0 0
    %1517 = vmatprep.subr.bf16.mxu0 0
    %1518 = vmatpush1.bf16.msra.mxu0 0
    %1519 = vmatprep.subr.bf16.mxu0 0
    %1520 = vmatpush1.bf16.msra.mxu0 0
    %1521 = vmatprep.subr.bf16.mxu0 0
    %1522 = vmatpush1.bf16.msra.mxu0 0
    %1523 = vmatprep.subr.bf16.mxu0 0
    %1524 = vmatpush1.bf16.msra.mxu0 0
    %1525 = vmatprep.subr.bf16.mxu0 0
    %1526 = vmatpush1.bf16.msra.mxu0 0
    %1527 = vmatprep.subr.bf16.mxu0 0
    %1528 = vmatpush1.bf16.msra.mxu0 0
    %1529 = vmatprep.subr.bf16.mxu0 %v1504
    %1530 = vmatpush1.bf16.msra.mxu0 %v1501
    %1531 = vmatprep.subr.bf16.mxu0 0
    %1532 = vmatpush2.bf16.msra.mxu0 0
    %1533 = vmatprep.subr.bf16.mxu0 0
    %1534 = vmatpush2.bf16.msra.mxu0 0
    %1535 = vmatprep.subr.bf16.mxu0 0
    %1536 = vmatpush2.bf16.msra.mxu0 0
    %1537 = vmatprep.subr.bf16.mxu0 0
    %1538 = vmatpush2.bf16.msra.mxu0 0
    %1539 = vmatprep.subr.bf16.mxu0 0
    %1540 = vmatpush2.bf16.msra.mxu0 0
    %1541 = vmatprep.subr.bf16.mxu0 0
    %1542 = vmatpush2.bf16.msra.mxu0 0
    %1543 = vmatprep.subr.bf16.mxu0 0
    %1544 = vmatpush2.bf16.msra.mxu0 0
    %1545 = vmatprep.subr.bf16.mxu0 0
    %1546 = vmatpush2.bf16.msra.mxu0 0
    %1547 = vmatprep.mubr.bf16.mxu0 0
    %1548 = vmatmul.mubr.bf16.gmra.mxu0 %v1498
    %v1549 = vpop.f32.mrf.mxu0
    %v1550 = vadd.f32 0.0, %v1549
    %v1551 = vpop.f32.mrf.mxu0
    %v1552 = vadd.f32 0.0, %v1551
    %v1553 = vpop.f32.mrf.mxu0
    %v1554 = vpop.f32.mrf.mxu0
    %1555 = vdwg.mxu0
    %1556 = vmatprep.subr.bf16.mxu0 0
    %1557 = vmatpush1.bf16.msra.mxu0 0
    %1558 = vmatprep.subr.bf16.mxu0 0
    %1559 = vmatpush1.bf16.msra.mxu0 0
    %1560 = vmatprep.subr.bf16.mxu0 0
    %1561 = vmatpush1.bf16.msra.mxu0 0
    %1562 = vmatprep.subr.bf16.mxu0 0
    %1563 = vmatpush1.bf16.msra.mxu0 0
    %1564 = vmatprep.subr.bf16.mxu0 0
    %1565 = vmatpush1.bf16.msra.mxu0 0
    %1566 = vmatprep.subr.bf16.mxu0 0
    %1567 = vmatpush1.bf16.msra.mxu0 0
    %1568 = vmatprep.subr.bf16.mxu0 0
    %1569 = vmatpush1.bf16.msra.mxu0 0
    %1570 = vmatprep.subr.bf16.mxu0 %v1510
    %1571 = vmatpush1.bf16.msra.mxu0 %v1507
    %1572 = vmatprep.subr.bf16.mxu0 0
    %1573 = vmatpush2.bf16.msra.mxu0 0
    %1574 = vmatprep.subr.bf16.mxu0 0
    %1575 = vmatpush2.bf16.msra.mxu0 0
    %1576 = vmatprep.subr.bf16.mxu0 0
    %1577 = vmatpush2.bf16.msra.mxu0 0
    %1578 = vmatprep.subr.bf16.mxu0 0
    %1579 = vmatpush2.bf16.msra.mxu0 0
    %1580 = vmatprep.subr.bf16.mxu0 0
    %1581 = vmatpush2.bf16.msra.mxu0 0
    %1582 = vmatprep.subr.bf16.mxu0 0
    %1583 = vmatpush2.bf16.msra.mxu0 0
    %1584 = vmatprep.subr.bf16.mxu0 0
    %1585 = vmatpush2.bf16.msra.mxu0 0
    %1586 = vmatprep.subr.bf16.mxu0 0
    %1587 = vmatpush2.bf16.msra.mxu0 0
    %1588 = vmatprep.mubr.bf16.mxu0 0
    %1589 = vmatmul.mubr.bf16.gmra.mxu0 %v1498
    %v1590 = vpop.f32.mrf.mxu0
    %v1591 = vadd.f32 0.0, %v1590
    %v1592 = vpop.f32.mrf.mxu0
    %v1593 = vadd.f32 0.0, %v1592
    %v1594 = vpop.f32.mrf.mxu0
    %v1595 = vpop.f32.mrf.mxu0
    %1596 = vdwg.mxu0
    %1597 = vmatprep.subr.bf16.mxu0 0
    %1598 = vmatpush1.bf16.msra.mxu0 0
    %1599 = vmatprep.subr.bf16.mxu0 0
    %1600 = vmatpush1.bf16.msra.mxu0 0
    %1601 = vmatprep.subr.bf16.mxu0 0
    %1602 = vmatpush1.bf16.msra.mxu0 0
    %1603 = vmatprep.subr.bf16.mxu0 0
    %1604 = vmatpush1.bf16.msra.mxu0 0
    %1605 = vmatprep.subr.bf16.mxu0 0
    %1606 = vmatpush1.bf16.msra.mxu0 0
    %1607 = vmatprep.subr.bf16.mxu0 0
    %1608 = vmatpush1.bf16.msra.mxu0 0
    %1609 = vmatprep.subr.bf16.mxu0 0
    %1610 = vmatpush1.bf16.msra.mxu0 0
    %1611 = vmatprep.subr.bf16.mxu0 0
    %1612 = vmatpush1.bf16.msra.mxu0 %v1513
    %1613 = vmatprep.subr.bf16.mxu0 0
    %1614 = vmatpush2.bf16.msra.mxu0 0
    %1615 = vmatprep.subr.bf16.mxu0 0
    %1616 = vmatpush2.bf16.msra.mxu0 0
    %1617 = vmatprep.subr.bf16.mxu0 0
    %1618 = vmatpush2.bf16.msra.mxu0 0
    %1619 = vmatprep.subr.bf16.mxu0 0
    %1620 = vmatpush2.bf16.msra.mxu0 0
    %1621 = vmatprep.subr.bf16.mxu0 0
    %1622 = vmatpush2.bf16.msra.mxu0 0
    %1623 = vmatprep.subr.bf16.mxu0 0
    %1624 = vmatpush2.bf16.msra.mxu0 0
    %1625 = vmatprep.subr.bf16.mxu0 0
    %1626 = vmatpush2.bf16.msra.mxu0 0
    %1627 = vmatprep.subr.bf16.mxu0 0
    %1628 = vmatpush2.bf16.msra.mxu0 0
    %1629 = vmatprep.mubr.bf16.mxu0 0
    %1630 = vmatmul.mubr.bf16.gmra.mxu0 %v1498
    %v1631 = vpop.f32.mrf.mxu0
    %v1632 = vadd.f32 0.0, %v1631
    %v1633 = vpop.f32.mrf.mxu0
    %v1634 = vpop.f32.mrf.mxu0
    %v1635 = vpop.f32.mrf.mxu0
    %1636 = vdwg.mxu0
    %v1637 = vadd.f32 %v1448, %v1550
    %v1638 = vadd.f32 %v1449, %v1552
    %v1639 = vadd.f32 %v1450, %v1591
    %v1640 = vadd.f32 %v1451, %v1593
    %v1641 = vadd.f32 %v1452, %v1632
    %v1643 = vlaneseq
    %v1644 = vshrl.u32 %v1643, 7
    %v1645 = vsub.s32 0, %v1644
    %v1646 = vrot.slane %v31, %v1645
    %v1647 = vlaneseq
    %v1648 = vshrl.u32 %v1647, 7
    %v1649 = vsub.s32 1, %v1648
    %v1650 = vrot.slane %v31, %v1649
    %v1651 = vlaneseq
    %v1652 = vshrl.u32 %v1651, 7
    %v1653 = vsub.s32 2, %v1652
    %v1654 = vrot.slane %v31, %v1653
    %v1655 = vlaneseq
    %v1656 = vshrl.u32 %v1655, 7
    %v1657 = vsub.s32 3, %v1656
    %v1658 = vrot.slane %v31, %v1657
    %v1659 = vlaneseq
    %v1660 = vshrl.u32 %v1659, 7
    %v1661 = vsub.s32 4, %v1660
    %v1662 = vrot.slane %v31, %v1661
    %v1668 = vmul.f32 %v1637, %v1646
    %v1669 = vmul.f32 %v1638, %v1650
    %v1670 = vmul.f32 %v1639, %v1654
    %v1671 = vmul.f32 %v1640, %v1658
    %v1672 = vmul.f32 %v1641, %v1662
    %vm1673 = vcmask 1043456
    %v1674 = vsel %vm1673, %v1668, 0.0
    %v1675 = vsel %vm1673, %v1669, 0.0
    %v1676 = vadd.f32 %v1674, %v1675
    %v1677 = vsel %vm1673, %v1670, 0.0
    %v1678 = vadd.f32 %v1676, %v1677
    %v1679 = vsel %vm1673, %v1671, 0.0
    %v1680 = vadd.f32 %v1678, %v1679
    %vm1681 = vcmask 797696
    %v1682 = vsel %vm1681, %v1672, 0.0
    %v1683 = vadd.f32 %v1680, %v1682
    %1684 = vadd.xlane.f32.xlu0 %v1683
    %v1685 = vpop.xlane.xlu0 %1684
    %v1686 = vmul.f32 %v1685, 0.001953125
    %v1687 = vsub.f32 %v1637, %v1686
    %v1688 = vsub.f32 %v1638, %v1686
    %v1689 = vsub.f32 %v1639, %v1686
    %v1690 = vsub.f32 %v1640, %v1686
    %v1691 = vsub.f32 %v1641, %v1686
    %v1692 = vmul.f32 %v1687, %v1646
    %v1693 = vmul.f32 %v1688, %v1650
    %v1694 = vmul.f32 %v1689, %v1654
    %v1695 = vmul.f32 %v1690, %v1658
    %v1696 = vmul.f32 %v1691, %v1662
    %v1697 = vmul.f32 %v1692, %v1692
    %v1698 = vmul.f32 %v1693, %v1693
    %v1699 = vmul.f32 %v1694, %v1694
    %v1700 = vmul.f32 %v1695, %v1695
    %v1701 = vmul.f32 %v1696, %v1696
    %v1702 = vsel %vm1673, %v1697, 0.0
    %v1703 = vsel %vm1673, %v1698, 0.0
    %v1704 = vadd.f32 %v1702, %v1703
    %v1705 = vsel %vm1673, %v1699, 0.0
    %v1706 = vadd.f32 %v1704, %v1705
    %v1707 = vsel %vm1673, %v1700, 0.0
    %v1708 = vadd.f32 %v1706, %v1707
    %v1709 = vsel %vm1681, %v1701, 0.0
    %v1710 = vadd.f32 %v1708, %v1709
    %1711 = vadd.xlane.f32.xlu0 %v1710
    %v1712 = vpop.xlane.xlu0 %1711
    %v1713 = vmul.f32 %v1712, 0.001953125
    %v1714 = vld [vmem:[%s4] sm:$0xf]
    %v1715 = vadd.f32 %v1713, 1e-05
    %v1716 = vrsqrt.pop %v1715
    %v1717 = vmul.f32 %v1714, %v1716
    %1719 = vset.pattern.permute.xlu0 0
    %1720 = vperm.xlu0 %1719, %v1717
    %v1721 = vpop.permute.xlu0 %1720
    %v1723 = vmul.f32 %v1687, %v1721
    %v1724 = vmul.f32 %v1688, %v1721
    %v1725 = vmul.f32 %v1689, %v1721
    %v1726 = vmul.f32 %v1690, %v1721
    %v1727 = vmul.f32 %v1691, %v1721
    %v1728 = vld [vmem:[%s5] sm:$0xf]
    %1730 = vset.pattern.permute.xlu0 0
    %1731 = vperm.xlu0 %1730, %v1728
    %v1732 = vpop.permute.xlu0 %1731
    %v1734 = vadd.f32 %v1723, %v1732
    %v1735 = vadd.f32 %v1724, %v1732
    %v1736 = vadd.f32 %v1725, %v1732
    %v1737 = vadd.f32 %v1726, %v1732
    %v1738 = vadd.f32 %v1727, %v1732
    %v1739 = vmax.f32 %v1734, 0.0
    %v1740 = vmax.f32 %v1735, 0.0
    %v1741 = vmax.f32 %v1736, 0.0
    %v1742 = vmax.f32 %v1737, 0.0
    %v1743 = vmax.f32 %v1738, 0.0
    %vm1744 = vcmask 148480
    %1745 = vst.msk [vmem:[#allocation2] sm:$0x3] %vm1744, 0
    %vm1746 = vcmask 1042344
    %vm1747 = vcmask 60418
    %vm1748 = vmor %vm1747, %vm1746
    %1749 = vst.msk [vmem:[#allocation2 + $0x8] sm:$0xf] %vm1748, 0
    %v1750 = vmul.f32 %v1739, %v1646
    %v1751 = vmul.f32 %v1740, %v1650
    %v1752 = vmul.f32 %v1741, %v1654
    %v1753 = vmul.f32 %v1742, %v1658
    %v1754 = vmul.f32 %v1743, %v1662
    %v1755 = vpack.c.bf16 %v1750, %v1750
    %v1756 = vpack.c.bf16 %v1751, %v1751
    %v1757 = vpack.c.bf16 %v1752, %v1752
    %v1758 = vpack.c.bf16 %v1753, %v1753
    %v1759 = vpack.c.bf16 %v1754, %v1754
    %v1765 = vcombine.low %v1755, %v1756
    %v1766 = vcombine.low %v1757, %v1758
    %v1768 = vunpack.c.l.s4 1983009808
    %v1769 = vunpack.c.0.s8 %v1768
    %v1770 = vlaneseq
    %v1771 = vshrl.u32 %v1770, 7
    %v1772 = vsub.s32 %v1769, %v1771
    %v1773 = vrot.slane %v1765, %v1772
    %v1775 = vunpack.c.l.s4 1983009808
    %v1776 = vunpack.c.0.s8 %v1775
    %v1777 = vlaneseq
    %v1778 = vshrl.u32 %v1777, 7
    %v1779 = vsub.s32 %v1776, %v1778
    %v1780 = vrot.slane %v1766, %v1779
    %v1781 = vcombine.low %v1773, %v1780
    %v1783 = vunpack.c.l.s4 1983009808
    %v1784 = vunpack.c.0.s8 %v1783
    %v1785 = vlaneseq
    %v1786 = vshrl.u32 %v1785, 7
    %v1787 = vsub.s32 %v1784, %v1786
    %v1788 = vrot.slane %v1759, %v1787
    %1789 = vrot.lane.b32.xlu0 %v1781, 19
    %v1790 = vpop.permute.xlu0 %1789
    %1791 = vrot.lane.b32.xlu0 %v1788, 19
    %v1792 = vpop.permute.xlu0 %1791
    %v1793 = vrot.slane %v1790, 6
    %vm1794 = vcmask 154624
    %v1795 = vsel %vm1794, %v1793, %v1790
    %v1796 = vsel %vm1794, %v1793, %v1792
    %vm1799 = vcmask 1041560
    %vm1800 = vcmask 1043458
    %vm1801 = vmor %vm1800, %vm1799
    %vm1802 = vcmask 1045508
    %vm1803 = vmor %vm1802, %vm1801
    %vm1804 = vcmask 1047558
    %vm1805 = vmor %vm1804, %vm1803
    %1806 = vst.msk [vmem:[#allocation2] sm:$0xff] %vm1805, %v1795
    %vm1807 = vcmask 951296
    %1808 = vst.msk [vmem:[#allocation2 + $0x8] sm:$0x3] %vm1807, %v1796
    %v1809 = vld [vmem:[#allocation2] sm:$0xff]
    %v1810 = vld [vmem:[#allocation2 + $0x8] sm:$0x3]
    %v1811 = vld [vmem:[%s3] sm:$0x3]
    %s1812 = scalar_lea.vmem %s3, 2
    %v1813 = vld [vmem:[%s1812] sm:$0x3]
    %v1816 = vcombine.high %v1809, %v1809
    %v1818 = vunpack.c.l.s4 1983009808
    %v1819 = vunpack.c.0.s8 %v1818
    %v1820 = vlaneseq
    %v1821 = vshrl.u32 %v1820, 7
    %v1822 = vsub.s32 %v1819, %v1821
    %v1823 = vrot.slane %v1809, %v1822
    %v1825 = vunpack.c.l.s4 1983009808
    %v1826 = vunpack.c.0.s8 %v1825
    %v1827 = vlaneseq
    %v1828 = vshrl.u32 %v1827, 7
    %v1829 = vsub.s32 %v1826, %v1828
    %v1830 = vrot.slane %v1816, %v1829
    %v1831 = vcombine.high %v1823, %v1823
    %v1832 = vcombine.high %v1830, %v1830
    %v1834 = vunpack.c.l.s4 1983009808
    %v1835 = vunpack.c.0.s8 %v1834
    %v1836 = vlaneseq
    %v1837 = vshrl.u32 %v1836, 7
    %v1838 = vsub.s32 %v1835, %v1837
    %v1839 = vrot.slane %v1810, %v1838
    %1840 = vrot.lane.b32.xlu0 %v1823, 127
    %v1841 = vpop.permute.xlu0 %1840
    %1842 = vrot.lane.b32.xlu0 %v1831, 127
    %v1843 = vpop.permute.xlu0 %1842
    %1844 = vrot.lane.b32.xlu0 %v1830, 127
    %v1845 = vpop.permute.xlu0 %1844
    %1846 = vrot.lane.b32.xlu0 %v1832, 127
    %v1847 = vpop.permute.xlu0 %1846
    %1848 = vrot.lane.b32.xlu0 %v1839, 127
    %v1849 = vpop.permute.xlu0 %1848
    %v1850 = vsel %vm64, %v1841, %v1843
    %v1851 = vsel %vm64, %v1843, %v1845
    %v1852 = vsel %vm64, %v1845, %v1847
    %v1853 = vsel %vm64, %v1847, %v1849
    %v1855 = vsel %vm69, %v1813, 0
    %v1858 = vsel %vm73, %v1850, 0
    %v1861 = vsel %vm73, %v1851, 0
    %v1864 = vsel %vm73, %v1852, 0
    %v1867 = vsel %vm73, %v1853, 0
    %v1870 = vsel %vm73, %v1849, 0
    %1872 = vmatprep.subr.bf16.mxu0 0
    %1873 = vmatpush1.bf16.msra.mxu0 0
    %1874 = vmatprep.subr.bf16.mxu0 0
    %1875 = vmatpush1.bf16.msra.mxu0 0
    %1876 = vmatprep.subr.bf16.mxu0 0
    %1877 = vmatpush1.bf16.msra.mxu0 0
    %1878 = vmatprep.subr.bf16.mxu0 0
    %1879 = vmatpush1.bf16.msra.mxu0 0
    %1880 = vmatprep.subr.bf16.mxu0 0
    %1881 = vmatpush1.bf16.msra.mxu0 0
    %1882 = vmatprep.subr.bf16.mxu0 0
    %1883 = vmatpush1.bf16.msra.mxu0 0
    %1884 = vmatprep.subr.bf16.mxu0 0
    %1885 = vmatpush1.bf16.msra.mxu0 0
    %1886 = vmatprep.subr.bf16.mxu0 %v1861
    %1887 = vmatpush1.bf16.msra.mxu0 %v1858
    %1888 = vmatprep.subr.bf16.mxu0 0
    %1889 = vmatpush2.bf16.msra.mxu0 0
    %1890 = vmatprep.subr.bf16.mxu0 0
    %1891 = vmatpush2.bf16.msra.mxu0 0
    %1892 = vmatprep.subr.bf16.mxu0 0
    %1893 = vmatpush2.bf16.msra.mxu0 0
    %1894 = vmatprep.subr.bf16.mxu0 0
    %1895 = vmatpush2.bf16.msra.mxu0 0
    %1896 = vmatprep.subr.bf16.mxu0 0
    %1897 = vmatpush2.bf16.msra.mxu0 0
    %1898 = vmatprep.subr.bf16.mxu0 0
    %1899 = vmatpush2.bf16.msra.mxu0 0
    %1900 = vmatprep.subr.bf16.mxu0 0
    %1901 = vmatpush2.bf16.msra.mxu0 0
    %1902 = vmatprep.subr.bf16.mxu0 0
    %1903 = vmatpush2.bf16.msra.mxu0 0
    %1904 = vmatprep.mubr.bf16.mxu0 0
    %1905 = vmatmul.mubr.bf16.gmra.mxu0 %v1855
    %v1906 = vpop.f32.mrf.mxu0
    %v1907 = vadd.f32 0.0, %v1906
    %v1908 = vpop.f32.mrf.mxu0
    %v1909 = vadd.f32 0.0, %v1908
    %v1910 = vpop.f32.mrf.mxu0
    %v1911 = vpop.f32.mrf.mxu0
    %1912 = vdwg.mxu0
    %1913 = vmatprep.subr.bf16.mxu0 0
    %1914 = vmatpush1.bf16.msra.mxu0 0
    %1915 = vmatprep.subr.bf16.mxu0 0
    %1916 = vmatpush1.bf16.msra.mxu0 0
    %1917 = vmatprep.subr.bf16.mxu0 0
    %1918 = vmatpush1.bf16.msra.mxu0 0
    %1919 = vmatprep.subr.bf16.mxu0 0
    %1920 = vmatpush1.bf16.msra.mxu0 0
    %1921 = vmatprep.subr.bf16.mxu0 0
    %1922 = vmatpush1.bf16.msra.mxu0 0
    %1923 = vmatprep.subr.bf16.mxu0 0
    %1924 = vmatpush1.bf16.msra.mxu0 0
    %1925 = vmatprep.subr.bf16.mxu0 0
    %1926 = vmatpush1.bf16.msra.mxu0 0
    %1927 = vmatprep.subr.bf16.mxu0 %v1867
    %1928 = vmatpush1.bf16.msra.mxu0 %v1864
    %1929 = vmatprep.subr.bf16.mxu0 0
    %1930 = vmatpush2.bf16.msra.mxu0 0
    %1931 = vmatprep.subr.bf16.mxu0 0
    %1932 = vmatpush2.bf16.msra.mxu0 0
    %1933 = vmatprep.subr.bf16.mxu0 0
    %1934 = vmatpush2.bf16.msra.mxu0 0
    %1935 = vmatprep.subr.bf16.mxu0 0
    %1936 = vmatpush2.bf16.msra.mxu0 0
    %1937 = vmatprep.subr.bf16.mxu0 0
    %1938 = vmatpush2.bf16.msra.mxu0 0
    %1939 = vmatprep.subr.bf16.mxu0 0
    %1940 = vmatpush2.bf16.msra.mxu0 0
    %1941 = vmatprep.subr.bf16.mxu0 0
    %1942 = vmatpush2.bf16.msra.mxu0 0
    %1943 = vmatprep.subr.bf16.mxu0 0
    %1944 = vmatpush2.bf16.msra.mxu0 0
    %1945 = vmatprep.mubr.bf16.mxu0 0
    %1946 = vmatmul.mubr.bf16.gmra.mxu0 %v1855
    %v1947 = vpop.f32.mrf.mxu0
    %v1948 = vadd.f32 0.0, %v1947
    %v1949 = vpop.f32.mrf.mxu0
    %v1950 = vadd.f32 0.0, %v1949
    %v1951 = vpop.f32.mrf.mxu0
    %v1952 = vpop.f32.mrf.mxu0
    %1953 = vdwg.mxu0
    %1954 = vmatprep.subr.bf16.mxu0 0
    %1955 = vmatpush1.bf16.msra.mxu0 0
    %1956 = vmatprep.subr.bf16.mxu0 0
    %1957 = vmatpush1.bf16.msra.mxu0 0
    %1958 = vmatprep.subr.bf16.mxu0 0
    %1959 = vmatpush1.bf16.msra.mxu0 0
    %1960 = vmatprep.subr.bf16.mxu0 0
    %1961 = vmatpush1.bf16.msra.mxu0 0
    %1962 = vmatprep.subr.bf16.mxu0 0
    %1963 = vmatpush1.bf16.msra.mxu0 0
    %1964 = vmatprep.subr.bf16.mxu0 0
    %1965 = vmatpush1.bf16.msra.mxu0 0
    %1966 = vmatprep.subr.bf16.mxu0 0
    %1967 = vmatpush1.bf16.msra.mxu0 0
    %1968 = vmatprep.subr.bf16.mxu0 0
    %1969 = vmatpush1.bf16.msra.mxu0 %v1870
    %1970 = vmatprep.subr.bf16.mxu0 0
    %1971 = vmatpush2.bf16.msra.mxu0 0
    %1972 = vmatprep.subr.bf16.mxu0 0
    %1973 = vmatpush2.bf16.msra.mxu0 0
    %1974 = vmatprep.subr.bf16.mxu0 0
    %1975 = vmatpush2.bf16.msra.mxu0 0
    %1976 = vmatprep.subr.bf16.mxu0 0
    %1977 = vmatpush2.bf16.msra.mxu0 0
    %1978 = vmatprep.subr.bf16.mxu0 0
    %1979 = vmatpush2.bf16.msra.mxu0 0
    %1980 = vmatprep.subr.bf16.mxu0 0
    %1981 = vmatpush2.bf16.msra.mxu0 0
    %1982 = vmatprep.subr.bf16.mxu0 0
    %1983 = vmatpush2.bf16.msra.mxu0 0
    %1984 = vmatprep.subr.bf16.mxu0 0
    %1985 = vmatpush2.bf16.msra.mxu0 0
    %1986 = vmatprep.mubr.bf16.mxu0 0
    %1987 = vmatmul.mubr.bf16.gmra.mxu0 %v1855
    %v1988 = vpop.f32.mrf.mxu0
    %v1989 = vadd.f32 0.0, %v1988
    %v1990 = vpop.f32.mrf.mxu0
    %v1991 = vpop.f32.mrf.mxu0
    %v1992 = vpop.f32.mrf.mxu0
    %1993 = vdwg.mxu0
    %v1995 = vsel %vm69, %v1811, 0
    %v1998 = vsel %vm73, %v1823, 0
    %v2001 = vsel %vm73, %v1831, 0
    %v2004 = vsel %vm73, %v1830, 0
    %v2007 = vsel %vm73, %v1832, 0
    %v2010 = vsel %vm73, %v1839, 0
    %2012 = vmatprep.subr.bf16.mxu0 0
    %2013 = vmatpush1.bf16.msra.mxu0 0
    %2014 = vmatprep.subr.bf16.mxu0 0
    %2015 = vmatpush1.bf16.msra.mxu0 0
    %2016 = vmatprep.subr.bf16.mxu0 0
    %2017 = vmatpush1.bf16.msra.mxu0 0
    %2018 = vmatprep.subr.bf16.mxu0 0
    %2019 = vmatpush1.bf16.msra.mxu0 0
    %2020 = vmatprep.subr.bf16.mxu0 0
    %2021 = vmatpush1.bf16.msra.mxu0 0
    %2022 = vmatprep.subr.bf16.mxu0 0
    %2023 = vmatpush1.bf16.msra.mxu0 0
    %2024 = vmatprep.subr.bf16.mxu0 0
    %2025 = vmatpush1.bf16.msra.mxu0 0
    %2026 = vmatprep.subr.bf16.mxu0 %v2001
    %2027 = vmatpush1.bf16.msra.mxu0 %v1998
    %2028 = vmatprep.subr.bf16.mxu0 0
    %2029 = vmatpush2.bf16.msra.mxu0 0
    %2030 = vmatprep.subr.bf16.mxu0 0
    %2031 = vmatpush2.bf16.msra.mxu0 0
    %2032 = vmatprep.subr.bf16.mxu0 0
    %2033 = vmatpush2.bf16.msra.mxu0 0
    %2034 = vmatprep.subr.bf16.mxu0 0
    %2035 = vmatpush2.bf16.msra.mxu0 0
    %2036 = vmatprep.subr.bf16.mxu0 0
    %2037 = vmatpush2.bf16.msra.mxu0 0
    %2038 = vmatprep.subr.bf16.mxu0 0
    %2039 = vmatpush2.bf16.msra.mxu0 0
    %2040 = vmatprep.subr.bf16.mxu0 0
    %2041 = vmatpush2.bf16.msra.mxu0 0
    %2042 = vmatprep.subr.bf16.mxu0 0
    %2043 = vmatpush2.bf16.msra.mxu0 0
    %2044 = vmatprep.mubr.bf16.mxu0 0
    %2045 = vmatmul.mubr.bf16.gmra.mxu0 %v1995
    %v2046 = vpop.f32.mrf.mxu0
    %v2047 = vadd.f32 %v1907, %v2046
    %v2048 = vpop.f32.mrf.mxu0
    %v2049 = vadd.f32 %v1909, %v2048
    %v2050 = vpop.f32.mrf.mxu0
    %v2051 = vpop.f32.mrf.mxu0
    %2052 = vdwg.mxu0
    %2053 = vmatprep.subr.bf16.mxu0 0
    %2054 = vmatpush1.bf16.msra.mxu0 0
    %2055 = vmatprep.subr.bf16.mxu0 0
    %2056 = vmatpush1.bf16.msra.mxu0 0
    %2057 = vmatprep.subr.bf16.mxu0 0
    %2058 = vmatpush1.bf16.msra.mxu0 0
    %2059 = vmatprep.subr.bf16.mxu0 0
    %2060 = vmatpush1.bf16.msra.mxu0 0
    %2061 = vmatprep.subr.bf16.mxu0 0
    %2062 = vmatpush1.bf16.msra.mxu0 0
    %2063 = vmatprep.subr.bf16.mxu0 0
    %2064 = vmatpush1.bf16.msra.mxu0 0
    %2065 = vmatprep.subr.bf16.mxu0 0
    %2066 = vmatpush1.bf16.msra.mxu0 0
    %2067 = vmatprep.subr.bf16.mxu0 %v2007
    %2068 = vmatpush1.bf16.msra.mxu0 %v2004
    %2069 = vmatprep.subr.bf16.mxu0 0
    %2070 = vmatpush2.bf16.msra.mxu0 0
    %2071 = vmatprep.subr.bf16.mxu0 0
    %2072 = vmatpush2.bf16.msra.mxu0 0
    %2073 = vmatprep.subr.bf16.mxu0 0
    %2074 = vmatpush2.bf16.msra.mxu0 0
    %2075 = vmatprep.subr.bf16.mxu0 0
    %2076 = vmatpush2.bf16.msra.mxu0 0
    %2077 = vmatprep.subr.bf16.mxu0 0
    %2078 = vmatpush2.bf16.msra.mxu0 0
    %2079 = vmatprep.subr.bf16.mxu0 0
    %2080 = vmatpush2.bf16.msra.mxu0 0
    %2081 = vmatprep.subr.bf16.mxu0 0
    %2082 = vmatpush2.bf16.msra.mxu0 0
    %2083 = vmatprep.subr.bf16.mxu0 0
    %2084 = vmatpush2.bf16.msra.mxu0 0
    %2085 = vmatprep.mubr.bf16.mxu0 0
    %2086 = vmatmul.mubr.bf16.gmra.mxu0 %v1995
    %v2087 = vpop.f32.mrf.mxu0
    %v2088 = vadd.f32 %v1948, %v2087
    %v2089 = vpop.f32.mrf.mxu0
    %v2090 = vadd.f32 %v1950, %v2089
    %v2091 = vpop.f32.mrf.mxu0
    %v2092 = vpop.f32.mrf.mxu0
    %2093 = vdwg.mxu0
    %2094 = vmatprep.subr.bf16.mxu0 0
    %2095 = vmatpush1.bf16.msra.mxu0 0
    %2096 = vmatprep.subr.bf16.mxu0 0
    %2097 = vmatpush1.bf16.msra.mxu0 0
    %2098 = vmatprep.subr.bf16.mxu0 0
    %2099 = vmatpush1.bf16.msra.mxu0 0
    %2100 = vmatprep.subr.bf16.mxu0 0
    %2101 = vmatpush1.bf16.msra.mxu0 0
    %2102 = vmatprep.subr.bf16.mxu0 0
    %2103 = vmatpush1.bf16.msra.mxu0 0
    %2104 = vmatprep.subr.bf16.mxu0 0
    %2105 = vmatpush1.bf16.msra.mxu0 0
    %2106 = vmatprep.subr.bf16.mxu0 0
    %2107 = vmatpush1.bf16.msra.mxu0 0
    %2108 = vmatprep.subr.bf16.mxu0 0
    %2109 = vmatpush1.bf16.msra.mxu0 %v2010
    %2110 = vmatprep.subr.bf16.mxu0 0
    %2111 = vmatpush2.bf16.msra.mxu0 0
    %2112 = vmatprep.subr.bf16.mxu0 0
    %2113 = vmatpush2.bf16.msra.mxu0 0
    %2114 = vmatprep.subr.bf16.mxu0 0
    %2115 = vmatpush2.bf16.msra.mxu0 0
    %2116 = vmatprep.subr.bf16.mxu0 0
    %2117 = vmatpush2.bf16.msra.mxu0 0
    %2118 = vmatprep.subr.bf16.mxu0 0
    %2119 = vmatpush2.bf16.msra.mxu0 0
    %2120 = vmatprep.subr.bf16.mxu0 0
    %2121 = vmatpush2.bf16.msra.mxu0 0
    %2122 = vmatprep.subr.bf16.mxu0 0
    %2123 = vmatpush2.bf16.msra.mxu0 0
    %2124 = vmatprep.subr.bf16.mxu0 0
    %2125 = vmatpush2.bf16.msra.mxu0 0
    %2126 = vmatprep.mubr.bf16.mxu0 0
    %2127 = vmatmul.mubr.bf16.gmra.mxu0 %v1995
    %v2128 = vpop.f32.mrf.mxu0
    %v2129 = vadd.f32 %v1989, %v2128
    %v2130 = vpop.f32.mrf.mxu0
    %v2131 = vpop.f32.mrf.mxu0
    %v2132 = vpop.f32.mrf.mxu0
    %2133 = vdwg.mxu0
    %v2134 = vld [vmem:[#allocation2] sm:$0xff]
    %v2135 = vld [vmem:[#allocation2 + $0x8] sm:$0x3]
    %s2136 = scalar_lea.vmem %s3, 4
    %v2137 = vld [vmem:[%s2136] sm:$0x3]
    %v2140 = vcombine.high %v2134, %v2134
    %v2142 = vunpack.c.l.s4 1983009808
    %v2143 = vunpack.c.0.s8 %v2142
    %v2144 = vlaneseq
    %v2145 = vshrl.u32 %v2144, 7
    %v2146 = vsub.s32 %v2143, %v2145
    %v2147 = vrot.slane %v2134, %v2146
    %v2149 = vunpack.c.l.s4 1983009808
    %v2150 = vunpack.c.0.s8 %v2149
    %v2151 = vlaneseq
    %v2152 = vshrl.u32 %v2151, 7
    %v2153 = vsub.s32 %v2150, %v2152
    %v2154 = vrot.slane %v2140, %v2153
    %v2155 = vcombine.high %v2147, %v2147
    %v2156 = vcombine.high %v2154, %v2154
    %v2158 = vunpack.c.l.s4 1983009808
    %v2159 = vunpack.c.0.s8 %v2158
    %v2160 = vlaneseq
    %v2161 = vshrl.u32 %v2160, 7
    %v2162 = vsub.s32 %v2159, %v2161
    %v2163 = vrot.slane %v2135, %v2162
    %2164 = vrot.lane.b32.xlu0 %v2147, 126
    %v2165 = vpop.permute.xlu0 %2164
    %2166 = vrot.lane.b32.xlu0 %v2155, 126
    %v2167 = vpop.permute.xlu0 %2166
    %2168 = vrot.lane.b32.xlu0 %v2154, 126
    %v2169 = vpop.permute.xlu0 %2168
    %2170 = vrot.lane.b32.xlu0 %v2156, 126
    %v2171 = vpop.permute.xlu0 %2170
    %2172 = vrot.lane.b32.xlu0 %v2163, 126
    %v2173 = vpop.permute.xlu0 %2172
    %v2174 = vsel %vm382, %v2165, %v2167
    %v2175 = vsel %vm382, %v2167, %v2169
    %v2176 = vsel %vm382, %v2169, %v2171
    %v2177 = vsel %vm382, %v2171, %v2173
    %v2179 = vsel %vm69, %v2137, 0
    %v2182 = vsel %vm73, %v2174, 0
    %v2185 = vsel %vm73, %v2175, 0
    %v2188 = vsel %vm73, %v2176, 0
    %v2191 = vsel %vm73, %v2177, 0
    %v2194 = vsel %vm73, %v2173, 0
    %2196 = vmatprep.subr.bf16.mxu0 0
    %2197 = vmatpush1.bf16.msra.mxu0 0
    %2198 = vmatprep.subr.bf16.mxu0 0
    %2199 = vmatpush1.bf16.msra.mxu0 0
    %2200 = vmatprep.subr.bf16.mxu0 0
    %2201 = vmatpush1.bf16.msra.mxu0 0
    %2202 = vmatprep.subr.bf16.mxu0 0
    %2203 = vmatpush1.bf16.msra.mxu0 0
    %2204 = vmatprep.subr.bf16.mxu0 0
    %2205 = vmatpush1.bf16.msra.mxu0 0
    %2206 = vmatprep.subr.bf16.mxu0 0
    %2207 = vmatpush1.bf16.msra.mxu0 0
    %2208 = vmatprep.subr.bf16.mxu0 0
    %2209 = vmatpush1.bf16.msra.mxu0 0
    %2210 = vmatprep.subr.bf16.mxu0 %v2185
    %2211 = vmatpush1.bf16.msra.mxu0 %v2182
    %2212 = vmatprep.subr.bf16.mxu0 0
    %2213 = vmatpush2.bf16.msra.mxu0 0
    %2214 = vmatprep.subr.bf16.mxu0 0
    %2215 = vmatpush2.bf16.msra.mxu0 0
    %2216 = vmatprep.subr.bf16.mxu0 0
    %2217 = vmatpush2.bf16.msra.mxu0 0
    %2218 = vmatprep.subr.bf16.mxu0 0
    %2219 = vmatpush2.bf16.msra.mxu0 0
    %2220 = vmatprep.subr.bf16.mxu0 0
    %2221 = vmatpush2.bf16.msra.mxu0 0
    %2222 = vmatprep.subr.bf16.mxu0 0
    %2223 = vmatpush2.bf16.msra.mxu0 0
    %2224 = vmatprep.subr.bf16.mxu0 0
    %2225 = vmatpush2.bf16.msra.mxu0 0
    %2226 = vmatprep.subr.bf16.mxu0 0
    %2227 = vmatpush2.bf16.msra.mxu0 0
    %2228 = vmatprep.mubr.bf16.mxu0 0
    %2229 = vmatmul.mubr.bf16.gmra.mxu0 %v2179
    %v2230 = vpop.f32.mrf.mxu0
    %v2231 = vadd.f32 0.0, %v2230
    %v2232 = vpop.f32.mrf.mxu0
    %v2233 = vadd.f32 0.0, %v2232
    %v2234 = vpop.f32.mrf.mxu0
    %v2235 = vpop.f32.mrf.mxu0
    %2236 = vdwg.mxu0
    %2237 = vmatprep.subr.bf16.mxu0 0
    %2238 = vmatpush1.bf16.msra.mxu0 0
    %2239 = vmatprep.subr.bf16.mxu0 0
    %2240 = vmatpush1.bf16.msra.mxu0 0
    %2241 = vmatprep.subr.bf16.mxu0 0
    %2242 = vmatpush1.bf16.msra.mxu0 0
    %2243 = vmatprep.subr.bf16.mxu0 0
    %2244 = vmatpush1.bf16.msra.mxu0 0
    %2245 = vmatprep.subr.bf16.mxu0 0
    %2246 = vmatpush1.bf16.msra.mxu0 0
    %2247 = vmatprep.subr.bf16.mxu0 0
    %2248 = vmatpush1.bf16.msra.mxu0 0
    %2249 = vmatprep.subr.bf16.mxu0 0
    %2250 = vmatpush1.bf16.msra.mxu0 0
    %2251 = vmatprep.subr.bf16.mxu0 %v2191
    %2252 = vmatpush1.bf16.msra.mxu0 %v2188
    %2253 = vmatprep.subr.bf16.mxu0 0
    %2254 = vmatpush2.bf16.msra.mxu0 0
    %2255 = vmatprep.subr.bf16.mxu0 0
    %2256 = vmatpush2.bf16.msra.mxu0 0
    %2257 = vmatprep.subr.bf16.mxu0 0
    %2258 = vmatpush2.bf16.msra.mxu0 0
    %2259 = vmatprep.subr.bf16.mxu0 0
    %2260 = vmatpush2.bf16.msra.mxu0 0
    %2261 = vmatprep.subr.bf16.mxu0 0
    %2262 = vmatpush2.bf16.msra.mxu0 0
    %2263 = vmatprep.subr.bf16.mxu0 0
    %2264 = vmatpush2.bf16.msra.mxu0 0
    %2265 = vmatprep.subr.bf16.mxu0 0
    %2266 = vmatpush2.bf16.msra.mxu0 0
    %2267 = vmatprep.subr.bf16.mxu0 0
    %2268 = vmatpush2.bf16.msra.mxu0 0
    %2269 = vmatprep.mubr.bf16.mxu0 0
    %2270 = vmatmul.mubr.bf16.gmra.mxu0 %v2179
    %v2271 = vpop.f32.mrf.mxu0
    %v2272 = vadd.f32 0.0, %v2271
    %v2273 = vpop.f32.mrf.mxu0
    %v2274 = vadd.f32 0.0, %v2273
    %v2275 = vpop.f32.mrf.mxu0
    %v2276 = vpop.f32.mrf.mxu0
    %2277 = vdwg.mxu0
    %2278 = vmatprep.subr.bf16.mxu0 0
    %2279 = vmatpush1.bf16.msra.mxu0 0
    %2280 = vmatprep.subr.bf16.mxu0 0
    %2281 = vmatpush1.bf16.msra.mxu0 0
    %2282 = vmatprep.subr.bf16.mxu0 0
    %2283 = vmatpush1.bf16.msra.mxu0 0
    %2284 = vmatprep.subr.bf16.mxu0 0
    %2285 = vmatpush1.bf16.msra.mxu0 0
    %2286 = vmatprep.subr.bf16.mxu0 0
    %2287 = vmatpush1.bf16.msra.mxu0 0
    %2288 = vmatprep.subr.bf16.mxu0 0
    %2289 = vmatpush1.bf16.msra.mxu0 0
    %2290 = vmatprep.subr.bf16.mxu0 0
    %2291 = vmatpush1.bf16.msra.mxu0 0
    %2292 = vmatprep.subr.bf16.mxu0 0
    %2293 = vmatpush1.bf16.msra.mxu0 %v2194
    %2294 = vmatprep.subr.bf16.mxu0 0
    %2295 = vmatpush2.bf16.msra.mxu0 0
    %2296 = vmatprep.subr.bf16.mxu0 0
    %2297 = vmatpush2.bf16.msra.mxu0 0
    %2298 = vmatprep.subr.bf16.mxu0 0
    %2299 = vmatpush2.bf16.msra.mxu0 0
    %2300 = vmatprep.subr.bf16.mxu0 0
    %2301 = vmatpush2.bf16.msra.mxu0 0
    %2302 = vmatprep.subr.bf16.mxu0 0
    %2303 = vmatpush2.bf16.msra.mxu0 0
    %2304 = vmatprep.subr.bf16.mxu0 0
    %2305 = vmatpush2.bf16.msra.mxu0 0
    %2306 = vmatprep.subr.bf16.mxu0 0
    %2307 = vmatpush2.bf16.msra.mxu0 0
    %2308 = vmatprep.subr.bf16.mxu0 0
    %2309 = vmatpush2.bf16.msra.mxu0 0
    %2310 = vmatprep.mubr.bf16.mxu0 0
    %2311 = vmatmul.mubr.bf16.gmra.mxu0 %v2179
    %v2312 = vpop.f32.mrf.mxu0
    %v2313 = vadd.f32 0.0, %v2312
    %v2314 = vpop.f32.mrf.mxu0
    %v2315 = vpop.f32.mrf.mxu0
    %v2316 = vpop.f32.mrf.mxu0
    %2317 = vdwg.mxu0
    %v2318 = vadd.f32 %v2047, %v2231
    %v2319 = vadd.f32 %v2049, %v2233
    %v2320 = vadd.f32 %v2088, %v2272
    %v2321 = vadd.f32 %v2090, %v2274
    %v2322 = vadd.f32 %v2129, %v2313
    %v2323 = vld [vmem:[#allocation2] sm:$0xff]
    %v2324 = vld [vmem:[#allocation2 + $0x8] sm:$0x3]
    %s2325 = scalar_lea.vmem %s3, 6
    %v2326 = vld [vmem:[%s2325] sm:$0x3]
    %v2329 = vcombine.high %v2323, %v2323
    %v2331 = vunpack.c.l.s4 1983009808
    %v2332 = vunpack.c.0.s8 %v2331
    %v2333 = vlaneseq
    %v2334 = vshrl.u32 %v2333, 7
    %v2335 = vsub.s32 %v2332, %v2334
    %v2336 = vrot.slane %v2323, %v2335
    %v2338 = vunpack.c.l.s4 1983009808
    %v2339 = vunpack.c.0.s8 %v2338
    %v2340 = vlaneseq
    %v2341 = vshrl.u32 %v2340, 7
    %v2342 = vsub.s32 %v2339, %v2341
    %v2343 = vrot.slane %v2329, %v2342
    %v2344 = vcombine.high %v2336, %v2336
    %v2345 = vcombine.high %v2343, %v2343
    %v2347 = vunpack.c.l.s4 1983009808
    %v2348 = vunpack.c.0.s8 %v2347
    %v2349 = vlaneseq
    %v2350 = vshrl.u32 %v2349, 7
    %v2351 = vsub.s32 %v2348, %v2350
    %v2352 = vrot.slane %v2324, %v2351
    %2353 = vrot.lane.b32.xlu0 %v2336, 110
    %v2354 = vpop.permute.xlu0 %2353
    %2355 = vrot.lane.b32.xlu0 %v2344, 110
    %v2356 = vpop.permute.xlu0 %2355
    %2357 = vrot.lane.b32.xlu0 %v2343, 110
    %v2358 = vpop.permute.xlu0 %2357
    %2359 = vrot.lane.b32.xlu0 %v2345, 110
    %v2360 = vpop.permute.xlu0 %2359
    %2361 = vrot.lane.b32.xlu0 %v2352, 110
    %v2362 = vpop.permute.xlu0 %2361
    %v2363 = vsel %vm563, %v2354, %v2356
    %v2364 = vsel %vm563, %v2356, %v2358
    %v2365 = vsel %vm563, %v2358, %v2360
    %v2366 = vsel %vm563, %v2360, %v2362
    %v2368 = vsel %vm69, %v2326, 0
    %v2371 = vsel %vm73, %v2363, 0
    %v2374 = vsel %vm73, %v2364, 0
    %v2377 = vsel %vm73, %v2365, 0
    %v2380 = vsel %vm73, %v2366, 0
    %v2383 = vsel %vm73, %v2362, 0
    %2385 = vmatprep.subr.bf16.mxu0 0
    %2386 = vmatpush1.bf16.msra.mxu0 0
    %2387 = vmatprep.subr.bf16.mxu0 0
    %2388 = vmatpush1.bf16.msra.mxu0 0
    %2389 = vmatprep.subr.bf16.mxu0 0
    %2390 = vmatpush1.bf16.msra.mxu0 0
    %2391 = vmatprep.subr.bf16.mxu0 0
    %2392 = vmatpush1.bf16.msra.mxu0 0
    %2393 = vmatprep.subr.bf16.mxu0 0
    %2394 = vmatpush1.bf16.msra.mxu0 0
    %2395 = vmatprep.subr.bf16.mxu0 0
    %2396 = vmatpush1.bf16.msra.mxu0 0
    %2397 = vmatprep.subr.bf16.mxu0 0
    %2398 = vmatpush1.bf16.msra.mxu0 0
    %2399 = vmatprep.subr.bf16.mxu0 %v2374
    %2400 = vmatpush1.bf16.msra.mxu0 %v2371
    %2401 = vmatprep.subr.bf16.mxu0 0
    %2402 = vmatpush2.bf16.msra.mxu0 0
    %2403 = vmatprep.subr.bf16.mxu0 0
    %2404 = vmatpush2.bf16.msra.mxu0 0
    %2405 = vmatprep.subr.bf16.mxu0 0
    %2406 = vmatpush2.bf16.msra.mxu0 0
    %2407 = vmatprep.subr.bf16.mxu0 0
    %2408 = vmatpush2.bf16.msra.mxu0 0
    %2409 = vmatprep.subr.bf16.mxu0 0
    %2410 = vmatpush2.bf16.msra.mxu0 0
    %2411 = vmatprep.subr.bf16.mxu0 0
    %2412 = vmatpush2.bf16.msra.mxu0 0
    %2413 = vmatprep.subr.bf16.mxu0 0
    %2414 = vmatpush2.bf16.msra.mxu0 0
    %2415 = vmatprep.subr.bf16.mxu0 0
    %2416 = vmatpush2.bf16.msra.mxu0 0
    %2417 = vmatprep.mubr.bf16.mxu0 0
    %2418 = vmatmul.mubr.bf16.gmra.mxu0 %v2368
    %v2419 = vpop.f32.mrf.mxu0
    %v2420 = vadd.f32 0.0, %v2419
    %v2421 = vpop.f32.mrf.mxu0
    %v2422 = vadd.f32 0.0, %v2421
    %v2423 = vpop.f32.mrf.mxu0
    %v2424 = vpop.f32.mrf.mxu0
    %2425 = vdwg.mxu0
    %2426 = vmatprep.subr.bf16.mxu0 0
    %2427 = vmatpush1.bf16.msra.mxu0 0
    %2428 = vmatprep.subr.bf16.mxu0 0
    %2429 = vmatpush1.bf16.msra.mxu0 0
    %2430 = vmatprep.subr.bf16.mxu0 0
    %2431 = vmatpush1.bf16.msra.mxu0 0
    %2432 = vmatprep.subr.bf16.mxu0 0
    %2433 = vmatpush1.bf16.msra.mxu0 0
    %2434 = vmatprep.subr.bf16.mxu0 0
    %2435 = vmatpush1.bf16.msra.mxu0 0
    %2436 = vmatprep.subr.bf16.mxu0 0
    %2437 = vmatpush1.bf16.msra.mxu0 0
    %2438 = vmatprep.subr.bf16.mxu0 0
    %2439 = vmatpush1.bf16.msra.mxu0 0
    %2440 = vmatprep.subr.bf16.mxu0 %v2380
    %2441 = vmatpush1.bf16.msra.mxu0 %v2377
    %2442 = vmatprep.subr.bf16.mxu0 0
    %2443 = vmatpush2.bf16.msra.mxu0 0
    %2444 = vmatprep.subr.bf16.mxu0 0
    %2445 = vmatpush2.bf16.msra.mxu0 0
    %2446 = vmatprep.subr.bf16.mxu0 0
    %2447 = vmatpush2.bf16.msra.mxu0 0
    %2448 = vmatprep.subr.bf16.mxu0 0
    %2449 = vmatpush2.bf16.msra.mxu0 0
    %2450 = vmatprep.subr.bf16.mxu0 0
    %2451 = vmatpush2.bf16.msra.mxu0 0
    %2452 = vmatprep.subr.bf16.mxu0 0
    %2453 = vmatpush2.bf16.msra.mxu0 0
    %2454 = vmatprep.subr.bf16.mxu0 0
    %2455 = vmatpush2.bf16.msra.mxu0 0
    %2456 = vmatprep.subr.bf16.mxu0 0
    %2457 = vmatpush2.bf16.msra.mxu0 0
    %2458 = vmatprep.mubr.bf16.mxu0 0
    %2459 = vmatmul.mubr.bf16.gmra.mxu0 %v2368
    %v2460 = vpop.f32.mrf.mxu0
    %v2461 = vadd.f32 0.0, %v2460
    %v2462 = vpop.f32.mrf.mxu0
    %v2463 = vadd.f32 0.0, %v2462
    %v2464 = vpop.f32.mrf.mxu0
    %v2465 = vpop.f32.mrf.mxu0
    %2466 = vdwg.mxu0
    %2467 = vmatprep.subr.bf16.mxu0 0
    %2468 = vmatpush1.bf16.msra.mxu0 0
    %2469 = vmatprep.subr.bf16.mxu0 0
    %2470 = vmatpush1.bf16.msra.mxu0 0
    %2471 = vmatprep.subr.bf16.mxu0 0
    %2472 = vmatpush1.bf16.msra.mxu0 0
    %2473 = vmatprep.subr.bf16.mxu0 0
    %2474 = vmatpush1.bf16.msra.mxu0 0
    %2475 = vmatprep.subr.bf16.mxu0 0
    %2476 = vmatpush1.bf16.msra.mxu0 0
    %2477 = vmatprep.subr.bf16.mxu0 0
    %2478 = vmatpush1.bf16.msra.mxu0 0
    %2479 = vmatprep.subr.bf16.mxu0 0
    %2480 = vmatpush1.bf16.msra.mxu0 0
    %2481 = vmatprep.subr.bf16.mxu0 0
    %2482 = vmatpush1.bf16.msra.mxu0 %v2383
    %2483 = vmatprep.subr.bf16.mxu0 0
    %2484 = vmatpush2.bf16.msra.mxu0 0
    %2485 = vmatprep.subr.bf16.mxu0 0
    %2486 = vmatpush2.bf16.msra.mxu0 0
    %2487 = vmatprep.subr.bf16.mxu0 0
    %2488 = vmatpush2.bf16.msra.mxu0 0
    %2489 = vmatprep.subr.bf16.mxu0 0
    %2490 = vmatpush2.bf16.msra.mxu0 0
    %2491 = vmatprep.subr.bf16.mxu0 0
    %2492 = vmatpush2.bf16.msra.mxu0 0
    %2493 = vmatprep.subr.bf16.mxu0 0
    %2494 = vmatpush2.bf16.msra.mxu0 0
    %2495 = vmatprep.subr.bf16.mxu0 0
    %2496 = vmatpush2.bf16.msra.mxu0 0
    %2497 = vmatprep.subr.bf16.mxu0 0
    %2498 = vmatpush2.bf16.msra.mxu0 0
    %2499 = vmatprep.mubr.bf16.mxu0 0
    %2500 = vmatmul.mubr.bf16.gmra.mxu0 %v2368
    %v2501 = vpop.f32.mrf.mxu0
    %v2502 = vadd.f32 0.0, %v2501
    %v2503 = vpop.f32.mrf.mxu0
    %v2504 = vpop.f32.mrf.mxu0
    %v2505 = vpop.f32.mrf.mxu0
    %2506 = vdwg.mxu0
    %v2507 = vadd.f32 %v2318, %v2420
    %v2508 = vadd.f32 %v2319, %v2422
    %v2509 = vadd.f32 %v2320, %v2461
    %v2510 = vadd.f32 %v2321, %v2463
    %v2511 = vadd.f32 %v2322, %v2502
    %v2512 = vld [vmem:[#allocation2] sm:$0xff]
    %v2513 = vld [vmem:[#allocation2 + $0x8] sm:$0x3]
    %s2514 = scalar_lea.vmem %s3, 8
    %v2515 = vld [vmem:[%s2514] sm:$0x3]
    %v2518 = vcombine.high %v2512, %v2512
    %v2520 = vunpack.c.l.s4 1983009808
    %v2521 = vunpack.c.0.s8 %v2520
    %v2522 = vlaneseq
    %v2523 = vshrl.u32 %v2522, 7
    %v2524 = vsub.s32 %v2521, %v2523
    %v2525 = vrot.slane %v2512, %v2524
    %v2527 = vunpack.c.l.s4 1983009808
    %v2528 = vunpack.c.0.s8 %v2527
    %v2529 = vlaneseq
    %v2530 = vshrl.u32 %v2529, 7
    %v2531 = vsub.s32 %v2528, %v2530
    %v2532 = vrot.slane %v2518, %v2531
    %v2533 = vcombine.high %v2525, %v2525
    %v2534 = vcombine.high %v2532, %v2532
    %v2536 = vunpack.c.l.s4 1983009808
    %v2537 = vunpack.c.0.s8 %v2536
    %v2538 = vlaneseq
    %v2539 = vshrl.u32 %v2538, 7
    %v2540 = vsub.s32 %v2537, %v2539
    %v2541 = vrot.slane %v2513, %v2540
    %2542 = vrot.lane.b32.xlu0 %v2525, 109
    %v2543 = vpop.permute.xlu0 %2542
    %2544 = vrot.lane.b32.xlu0 %v2533, 109
    %v2545 = vpop.permute.xlu0 %2544
    %2546 = vrot.lane.b32.xlu0 %v2532, 109
    %v2547 = vpop.permute.xlu0 %2546
    %2548 = vrot.lane.b32.xlu0 %v2534, 109
    %v2549 = vpop.permute.xlu0 %2548
    %2550 = vrot.lane.b32.xlu0 %v2541, 109
    %v2551 = vpop.permute.xlu0 %2550
    %v2552 = vsel %vm744, %v2543, %v2545
    %v2553 = vsel %vm744, %v2545, %v2547
    %v2554 = vsel %vm744, %v2547, %v2549
    %v2555 = vsel %vm744, %v2549, %v2551
    %v2557 = vsel %vm69, %v2515, 0
    %v2560 = vsel %vm73, %v2552, 0
    %v2563 = vsel %vm73, %v2553, 0
    %v2566 = vsel %vm73, %v2554, 0
    %v2569 = vsel %vm73, %v2555, 0
    %v2572 = vsel %vm73, %v2551, 0
    %2574 = vmatprep.subr.bf16.mxu0 0
    %2575 = vmatpush1.bf16.msra.mxu0 0
    %2576 = vmatprep.subr.bf16.mxu0 0
    %2577 = vmatpush1.bf16.msra.mxu0 0
    %2578 = vmatprep.subr.bf16.mxu0 0
    %2579 = vmatpush1.bf16.msra.mxu0 0
    %2580 = vmatprep.subr.bf16.mxu0 0
    %2581 = vmatpush1.bf16.msra.mxu0 0
    %2582 = vmatprep.subr.bf16.mxu0 0
    %2583 = vmatpush1.bf16.msra.mxu0 0
    %2584 = vmatprep.subr.bf16.mxu0 0
    %2585 = vmatpush1.bf16.msra.mxu0 0
    %2586 = vmatprep.subr.bf16.mxu0 0
    %2587 = vmatpush1.bf16.msra.mxu0 0
    %2588 = vmatprep.subr.bf16.mxu0 %v2563
    %2589 = vmatpush1.bf16.msra.mxu0 %v2560
    %2590 = vmatprep.subr.bf16.mxu0 0
    %2591 = vmatpush2.bf16.msra.mxu0 0
    %2592 = vmatprep.subr.bf16.mxu0 0
    %2593 = vmatpush2.bf16.msra.mxu0 0
    %2594 = vmatprep.subr.bf16.mxu0 0
    %2595 = vmatpush2.bf16.msra.mxu0 0
    %2596 = vmatprep.subr.bf16.mxu0 0
    %2597 = vmatpush2.bf16.msra.mxu0 0
    %2598 = vmatprep.subr.bf16.mxu0 0
    %2599 = vmatpush2.bf16.msra.mxu0 0
    %2600 = vmatprep.subr.bf16.mxu0 0
    %2601 = vmatpush2.bf16.msra.mxu0 0
    %2602 = vmatprep.subr.bf16.mxu0 0
    %2603 = vmatpush2.bf16.msra.mxu0 0
    %2604 = vmatprep.subr.bf16.mxu0 0
    %2605 = vmatpush2.bf16.msra.mxu0 0
    %2606 = vmatprep.mubr.bf16.mxu0 0
    %2607 = vmatmul.mubr.bf16.gmra.mxu0 %v2557
    %v2608 = vpop.f32.mrf.mxu0
    %v2609 = vadd.f32 0.0, %v2608
    %v2610 = vpop.f32.mrf.mxu0
    %v2611 = vadd.f32 0.0, %v2610
    %v2612 = vpop.f32.mrf.mxu0
    %v2613 = vpop.f32.mrf.mxu0
    %2614 = vdwg.mxu0
    %2615 = vmatprep.subr.bf16.mxu0 0
    %2616 = vmatpush1.bf16.msra.mxu0 0
    %2617 = vmatprep.subr.bf16.mxu0 0
    %2618 = vmatpush1.bf16.msra.mxu0 0
    %2619 = vmatprep.subr.bf16.mxu0 0
    %2620 = vmatpush1.bf16.msra.mxu0 0
    %2621 = vmatprep.subr.bf16.mxu0 0
    %2622 = vmatpush1.bf16.msra.mxu0 0
    %2623 = vmatprep.subr.bf16.mxu0 0
    %2624 = vmatpush1.bf16.msra.mxu0 0
    %2625 = vmatprep.subr.bf16.mxu0 0
    %2626 = vmatpush1.bf16.msra.mxu0 0
    %2627 = vmatprep.subr.bf16.mxu0 0
    %2628 = vmatpush1.bf16.msra.mxu0 0
    %2629 = vmatprep.subr.bf16.mxu0 %v2569
    %2630 = vmatpush1.bf16.msra.mxu0 %v2566
    %2631 = vmatprep.subr.bf16.mxu0 0
    %2632 = vmatpush2.bf16.msra.mxu0 0
    %2633 = vmatprep.subr.bf16.mxu0 0
    %2634 = vmatpush2.bf16.msra.mxu0 0
    %2635 = vmatprep.subr.bf16.mxu0 0
    %2636 = vmatpush2.bf16.msra.mxu0 0
    %2637 = vmatprep.subr.bf16.mxu0 0
    %2638 = vmatpush2.bf16.msra.mxu0 0
    %2639 = vmatprep.subr.bf16.mxu0 0
    %2640 = vmatpush2.bf16.msra.mxu0 0
    %2641 = vmatprep.subr.bf16.mxu0 0
    %2642 = vmatpush2.bf16.msra.mxu0 0
    %2643 = vmatprep.subr.bf16.mxu0 0
    %2644 = vmatpush2.bf16.msra.mxu0 0
    %2645 = vmatprep.subr.bf16.mxu0 0
    %2646 = vmatpush2.bf16.msra.mxu0 0
    %2647 = vmatprep.mubr.bf16.mxu0 0
    %2648 = vmatmul.mubr.bf16.gmra.mxu0 %v2557
    %v2649 = vpop.f32.mrf.mxu0
    %v2650 = vadd.f32 0.0, %v2649
    %v2651 = vpop.f32.mrf.mxu0
    %v2652 = vadd.f32 0.0, %v2651
    %v2653 = vpop.f32.mrf.mxu0
    %v2654 = vpop.f32.mrf.mxu0
    %2655 = vdwg.mxu0
    %2656 = vmatprep.subr.bf16.mxu0 0
    %2657 = vmatpush1.bf16.msra.mxu0 0
    %2658 = vmatprep.subr.bf16.mxu0 0
    %2659 = vmatpush1.bf16.msra.mxu0 0
    %2660 = vmatprep.subr.bf16.mxu0 0
    %2661 = vmatpush1.bf16.msra.mxu0 0
    %2662 = vmatprep.subr.bf16.mxu0 0
    %2663 = vmatpush1.bf16.msra.mxu0 0
    %2664 = vmatprep.subr.bf16.mxu0 0
    %2665 = vmatpush1.bf16.msra.mxu0 0
    %2666 = vmatprep.subr.bf16.mxu0 0
    %2667 = vmatpush1.bf16.msra.mxu0 0
    %2668 = vmatprep.subr.bf16.mxu0 0
    %2669 = vmatpush1.bf16.msra.mxu0 0
    %2670 = vmatprep.subr.bf16.mxu0 0
    %2671 = vmatpush1.bf16.msra.mxu0 %v2572
    %2672 = vmatprep.subr.bf16.mxu0 0
    %2673 = vmatpush2.bf16.msra.mxu0 0
    %2674 = vmatprep.subr.bf16.mxu0 0
    %2675 = vmatpush2.bf16.msra.mxu0 0
    %2676 = vmatprep.subr.bf16.mxu0 0
    %2677 = vmatpush2.bf16.msra.mxu0 0
    %2678 = vmatprep.subr.bf16.mxu0 0
    %2679 = vmatpush2.bf16.msra.mxu0 0
    %2680 = vmatprep.subr.bf16.mxu0 0
    %2681 = vmatpush2.bf16.msra.mxu0 0
    %2682 = vmatprep.subr.bf16.mxu0 0
    %2683 = vmatpush2.bf16.msra.mxu0 0
    %2684 = vmatprep.subr.bf16.mxu0 0
    %2685 = vmatpush2.bf16.msra.mxu0 0
    %2686 = vmatprep.subr.bf16.mxu0 0
    %2687 = vmatpush2.bf16.msra.mxu0 0
    %2688 = vmatprep.mubr.bf16.mxu0 0
    %2689 = vmatmul.mubr.bf16.gmra.mxu0 %v2557
    %v2690 = vpop.f32.mrf.mxu0
    %v2691 = vadd.f32 0.0, %v2690
    %v2692 = vpop.f32.mrf.mxu0
    %v2693 = vpop.f32.mrf.mxu0
    %v2694 = vpop.f32.mrf.mxu0
    %2695 = vdwg.mxu0
    %v2696 = vadd.f32 %v2507, %v2609
    %v2697 = vadd.f32 %v2508, %v2611
    %v2698 = vadd.f32 %v2509, %v2650
    %v2699 = vadd.f32 %v2510, %v2652
    %v2700 = vadd.f32 %v2511, %v2691
    %v2701 = vld [vmem:[#allocation2] sm:$0xff]
    %v2702 = vld [vmem:[#allocation2 + $0x8] sm:$0x3]
    %s2703 = scalar_lea.vmem %s3, 10
    %v2704 = vld [vmem:[%s2703] sm:$0x3]
    %v2707 = vcombine.high %v2701, %v2701
    %v2709 = vunpack.c.l.s4 1983009808
    %v2710 = vunpack.c.0.s8 %v2709
    %v2711 = vlaneseq
    %v2712 = vshrl.u32 %v2711, 7
    %v2713 = vsub.s32 %v2710, %v2712
    %v2714 = vrot.slane %v2701, %v2713
    %v2716 = vunpack.c.l.s4 1983009808
    %v2717 = vunpack.c.0.s8 %v2716
    %v2718 = vlaneseq
    %v2719 = vshrl.u32 %v2718, 7
    %v2720 = vsub.s32 %v2717, %v2719
    %v2721 = vrot.slane %v2707, %v2720
    %v2722 = vcombine.high %v2714, %v2714
    %v2723 = vcombine.high %v2721, %v2721
    %v2725 = vunpack.c.l.s4 1983009808
    %v2726 = vunpack.c.0.s8 %v2725
    %v2727 = vlaneseq
    %v2728 = vshrl.u32 %v2727, 7
    %v2729 = vsub.s32 %v2726, %v2728
    %v2730 = vrot.slane %v2702, %v2729
    %2731 = vrot.lane.b32.xlu0 %v2714, 108
    %v2732 = vpop.permute.xlu0 %2731
    %2733 = vrot.lane.b32.xlu0 %v2722, 108
    %v2734 = vpop.permute.xlu0 %2733
    %2735 = vrot.lane.b32.xlu0 %v2721, 108
    %v2736 = vpop.permute.xlu0 %2735
    %2737 = vrot.lane.b32.xlu0 %v2723, 108
    %v2738 = vpop.permute.xlu0 %2737
    %2739 = vrot.lane.b32.xlu0 %v2730, 108
    %v2740 = vpop.permute.xlu0 %2739
    %v2741 = vsel %vm925, %v2732, %v2734
    %v2742 = vsel %vm925, %v2734, %v2736
    %v2743 = vsel %vm925, %v2736, %v2738
    %v2744 = vsel %vm925, %v2738, %v2740
    %v2746 = vsel %vm69, %v2704, 0
    %v2749 = vsel %vm73, %v2741, 0
    %v2752 = vsel %vm73, %v2742, 0
    %v2755 = vsel %vm73, %v2743, 0
    %v2758 = vsel %vm73, %v2744, 0
    %v2761 = vsel %vm73, %v2740, 0
    %2763 = vmatprep.subr.bf16.mxu0 0
    %2764 = vmatpush1.bf16.msra.mxu0 0
    %2765 = vmatprep.subr.bf16.mxu0 0
    %2766 = vmatpush1.bf16.msra.mxu0 0
    %2767 = vmatprep.subr.bf16.mxu0 0
    %2768 = vmatpush1.bf16.msra.mxu0 0
    %2769 = vmatprep.subr.bf16.mxu0 0
    %2770 = vmatpush1.bf16.msra.mxu0 0
    %2771 = vmatprep.subr.bf16.mxu0 0
    %2772 = vmatpush1.bf16.msra.mxu0 0
    %2773 = vmatprep.subr.bf16.mxu0 0
    %2774 = vmatpush1.bf16.msra.mxu0 0
    %2775 = vmatprep.subr.bf16.mxu0 0
    %2776 = vmatpush1.bf16.msra.mxu0 0
    %2777 = vmatprep.subr.bf16.mxu0 %v2752
    %2778 = vmatpush1.bf16.msra.mxu0 %v2749
    %2779 = vmatprep.subr.bf16.mxu0 0
    %2780 = vmatpush2.bf16.msra.mxu0 0
    %2781 = vmatprep.subr.bf16.mxu0 0
    %2782 = vmatpush2.bf16.msra.mxu0 0
    %2783 = vmatprep.subr.bf16.mxu0 0
    %2784 = vmatpush2.bf16.msra.mxu0 0
    %2785 = vmatprep.subr.bf16.mxu0 0
    %2786 = vmatpush2.bf16.msra.mxu0 0
    %2787 = vmatprep.subr.bf16.mxu0 0
    %2788 = vmatpush2.bf16.msra.mxu0 0
    %2789 = vmatprep.subr.bf16.mxu0 0
    %2790 = vmatpush2.bf16.msra.mxu0 0
    %2791 = vmatprep.subr.bf16.mxu0 0
    %2792 = vmatpush2.bf16.msra.mxu0 0
    %2793 = vmatprep.subr.bf16.mxu0 0
    %2794 = vmatpush2.bf16.msra.mxu0 0
    %2795 = vmatprep.mubr.bf16.mxu0 0
    %2796 = vmatmul.mubr.bf16.gmra.mxu0 %v2746
    %v2797 = vpop.f32.mrf.mxu0
    %v2798 = vadd.f32 0.0, %v2797
    %v2799 = vpop.f32.mrf.mxu0
    %v2800 = vadd.f32 0.0, %v2799
    %v2801 = vpop.f32.mrf.mxu0
    %v2802 = vpop.f32.mrf.mxu0
    %2803 = vdwg.mxu0
    %2804 = vmatprep.subr.bf16.mxu0 0
    %2805 = vmatpush1.bf16.msra.mxu0 0
    %2806 = vmatprep.subr.bf16.mxu0 0
    %2807 = vmatpush1.bf16.msra.mxu0 0
    %2808 = vmatprep.subr.bf16.mxu0 0
    %2809 = vmatpush1.bf16.msra.mxu0 0
    %2810 = vmatprep.subr.bf16.mxu0 0
    %2811 = vmatpush1.bf16.msra.mxu0 0
    %2812 = vmatprep.subr.bf16.mxu0 0
    %2813 = vmatpush1.bf16.msra.mxu0 0
    %2814 = vmatprep.subr.bf16.mxu0 0
    %2815 = vmatpush1.bf16.msra.mxu0 0
    %2816 = vmatprep.subr.bf16.mxu0 0
    %2817 = vmatpush1.bf16.msra.mxu0 0
    %2818 = vmatprep.subr.bf16.mxu0 %v2758
    %2819 = vmatpush1.bf16.msra.mxu0 %v2755
    %2820 = vmatprep.subr.bf16.mxu0 0
    %2821 = vmatpush2.bf16.msra.mxu0 0
    %2822 = vmatprep.subr.bf16.mxu0 0
    %2823 = vmatpush2.bf16.msra.mxu0 0
    %2824 = vmatprep.subr.bf16.mxu0 0
    %2825 = vmatpush2.bf16.msra.mxu0 0
    %2826 = vmatprep.subr.bf16.mxu0 0
    %2827 = vmatpush2.bf16.msra.mxu0 0
    %2828 = vmatprep.subr.bf16.mxu0 0
    %2829 = vmatpush2.bf16.msra.mxu0 0
    %2830 = vmatprep.subr.bf16.mxu0 0
    %2831 = vmatpush2.bf16.msra.mxu0 0
    %2832 = vmatprep.subr.bf16.mxu0 0
    %2833 = vmatpush2.bf16.msra.mxu0 0
    %2834 = vmatprep.subr.bf16.mxu0 0
    %2835 = vmatpush2.bf16.msra.mxu0 0
    %2836 = vmatprep.mubr.bf16.mxu0 0
    %2837 = vmatmul.mubr.bf16.gmra.mxu0 %v2746
    %v2838 = vpop.f32.mrf.mxu0
    %v2839 = vadd.f32 0.0, %v2838
    %v2840 = vpop.f32.mrf.mxu0
    %v2841 = vadd.f32 0.0, %v2840
    %v2842 = vpop.f32.mrf.mxu0
    %v2843 = vpop.f32.mrf.mxu0
    %2844 = vdwg.mxu0
    %2845 = vmatprep.subr.bf16.mxu0 0
    %2846 = vmatpush1.bf16.msra.mxu0 0
    %2847 = vmatprep.subr.bf16.mxu0 0
    %2848 = vmatpush1.bf16.msra.mxu0 0
    %2849 = vmatprep.subr.bf16.mxu0 0
    %2850 = vmatpush1.bf16.msra.mxu0 0
    %2851 = vmatprep.subr.bf16.mxu0 0
    %2852 = vmatpush1.bf16.msra.mxu0 0
    %2853 = vmatprep.subr.bf16.mxu0 0
    %2854 = vmatpush1.bf16.msra.mxu0 0
    %2855 = vmatprep.subr.bf16.mxu0 0
    %2856 = vmatpush1.bf16.msra.mxu0 0
    %2857 = vmatprep.subr.bf16.mxu0 0
    %2858 = vmatpush1.bf16.msra.mxu0 0
    %2859 = vmatprep.subr.bf16.mxu0 0
    %2860 = vmatpush1.bf16.msra.mxu0 %v2761
    %2861 = vmatprep.subr.bf16.mxu0 0
    %2862 = vmatpush2.bf16.msra.mxu0 0
    %2863 = vmatprep.subr.bf16.mxu0 0
    %2864 = vmatpush2.bf16.msra.mxu0 0
    %2865 = vmatprep.subr.bf16.mxu0 0
    %2866 = vmatpush2.bf16.msra.mxu0 0
    %2867 = vmatprep.subr.bf16.mxu0 0
    %2868 = vmatpush2.bf16.msra.mxu0 0
    %2869 = vmatprep.subr.bf16.mxu0 0
    %2870 = vmatpush2.bf16.msra.mxu0 0
    %2871 = vmatprep.subr.bf16.mxu0 0
    %2872 = vmatpush2.bf16.msra.mxu0 0
    %2873 = vmatprep.subr.bf16.mxu0 0
    %2874 = vmatpush2.bf16.msra.mxu0 0
    %2875 = vmatprep.subr.bf16.mxu0 0
    %2876 = vmatpush2.bf16.msra.mxu0 0
    %2877 = vmatprep.mubr.bf16.mxu0 0
    %2878 = vmatmul.mubr.bf16.gmra.mxu0 %v2746
    %v2879 = vpop.f32.mrf.mxu0
    %v2880 = vadd.f32 0.0, %v2879
    %v2881 = vpop.f32.mrf.mxu0
    %v2882 = vpop.f32.mrf.mxu0
    %v2883 = vpop.f32.mrf.mxu0
    %2884 = vdwg.mxu0
    %v2885 = vadd.f32 %v2696, %v2798
    %v2886 = vadd.f32 %v2697, %v2800
    %v2887 = vadd.f32 %v2698, %v2839
    %v2888 = vadd.f32 %v2699, %v2841
    %v2889 = vadd.f32 %v2700, %v2880
    %v2890 = vld [vmem:[#allocation2] sm:$0xff]
    %v2891 = vld [vmem:[#allocation2 + $0x8] sm:$0xf]
    %s2892 = scalar_lea.vmem %s3, 12
    %v2893 = vld [vmem:[%s2892] sm:$0x3]
    %v2896 = vcombine.high %v2890, %v2890
    %v2898 = vunpack.c.l.s4 1983009808
    %v2899 = vunpack.c.0.s8 %v2898
    %v2900 = vlaneseq
    %v2901 = vshrl.u32 %v2900, 7
    %v2902 = vsub.s32 %v2899, %v2901
    %v2903 = vrot.slane %v2890, %v2902
    %v2905 = vunpack.c.l.s4 1983009808
    %v2906 = vunpack.c.0.s8 %v2905
    %v2907 = vlaneseq
    %v2908 = vshrl.u32 %v2907, 7
    %v2909 = vsub.s32 %v2906, %v2908
    %v2910 = vrot.slane %v2896, %v2909
    %v2911 = vcombine.high %v2903, %v2903
    %v2912 = vcombine.high %v2910, %v2910
    %v2914 = vunpack.c.l.s4 1983009808
    %v2915 = vunpack.c.0.s8 %v2914
    %v2916 = vlaneseq
    %v2917 = vshrl.u32 %v2916, 7
    %v2918 = vsub.s32 %v2915, %v2917
    %v2919 = vrot.slane %v2891, %v2918
    %v2920 = vcombine.high %v2919, %v2919
    %2921 = vrot.lane.b32.xlu0 %v2903, 92
    %v2922 = vpop.permute.xlu0 %2921
    %2923 = vrot.lane.b32.xlu0 %v2911, 92
    %v2924 = vpop.permute.xlu0 %2923
    %2925 = vrot.lane.b32.xlu0 %v2910, 92
    %v2926 = vpop.permute.xlu0 %2925
    %2927 = vrot.lane.b32.xlu0 %v2912, 92
    %v2928 = vpop.permute.xlu0 %2927
    %2929 = vrot.lane.b32.xlu0 %v2919, 92
    %v2930 = vpop.permute.xlu0 %2929
    %2931 = vrot.lane.b32.xlu0 %v2920, 92
    %v2932 = vpop.permute.xlu0 %2931
    %v2933 = vsel %vm1113, %v2922, %v2924
    %v2934 = vsel %vm1113, %v2924, %v2926
    %v2935 = vsel %vm1113, %v2926, %v2928
    %v2936 = vsel %vm1113, %v2928, %v2930
    %v2937 = vsel %vm1113, %v2930, %v2932
    %v2939 = vsel %vm69, %v2893, 0
    %v2942 = vsel %vm73, %v2933, 0
    %v2945 = vsel %vm73, %v2934, 0
    %v2948 = vsel %vm73, %v2935, 0
    %v2951 = vsel %vm73, %v2936, 0
    %v2954 = vsel %vm73, %v2937, 0
    %2956 = vmatprep.subr.bf16.mxu0 0
    %2957 = vmatpush1.bf16.msra.mxu0 0
    %2958 = vmatprep.subr.bf16.mxu0 0
    %2959 = vmatpush1.bf16.msra.mxu0 0
    %2960 = vmatprep.subr.bf16.mxu0 0
    %2961 = vmatpush1.bf16.msra.mxu0 0
    %2962 = vmatprep.subr.bf16.mxu0 0
    %2963 = vmatpush1.bf16.msra.mxu0 0
    %2964 = vmatprep.subr.bf16.mxu0 0
    %2965 = vmatpush1.bf16.msra.mxu0 0
    %2966 = vmatprep.subr.bf16.mxu0 0
    %2967 = vmatpush1.bf16.msra.mxu0 0
    %2968 = vmatprep.subr.bf16.mxu0 0
    %2969 = vmatpush1.bf16.msra.mxu0 0
    %2970 = vmatprep.subr.bf16.mxu0 %v2945
    %2971 = vmatpush1.bf16.msra.mxu0 %v2942
    %2972 = vmatprep.subr.bf16.mxu0 0
    %2973 = vmatpush2.bf16.msra.mxu0 0
    %2974 = vmatprep.subr.bf16.mxu0 0
    %2975 = vmatpush2.bf16.msra.mxu0 0
    %2976 = vmatprep.subr.bf16.mxu0 0
    %2977 = vmatpush2.bf16.msra.mxu0 0
    %2978 = vmatprep.subr.bf16.mxu0 0
    %2979 = vmatpush2.bf16.msra.mxu0 0
    %2980 = vmatprep.subr.bf16.mxu0 0
    %2981 = vmatpush2.bf16.msra.mxu0 0
    %2982 = vmatprep.subr.bf16.mxu0 0
    %2983 = vmatpush2.bf16.msra.mxu0 0
    %2984 = vmatprep.subr.bf16.mxu0 0
    %2985 = vmatpush2.bf16.msra.mxu0 0
    %2986 = vmatprep.subr.bf16.mxu0 0
    %2987 = vmatpush2.bf16.msra.mxu0 0
    %2988 = vmatprep.mubr.bf16.mxu0 0
    %2989 = vmatmul.mubr.bf16.gmra.mxu0 %v2939
    %v2990 = vpop.f32.mrf.mxu0
    %v2991 = vadd.f32 0.0, %v2990
    %v2992 = vpop.f32.mrf.mxu0
    %v2993 = vadd.f32 0.0, %v2992
    %v2994 = vpop.f32.mrf.mxu0
    %v2995 = vpop.f32.mrf.mxu0
    %2996 = vdwg.mxu0
    %2997 = vmatprep.subr.bf16.mxu0 0
    %2998 = vmatpush1.bf16.msra.mxu0 0
    %2999 = vmatprep.subr.bf16.mxu0 0
    %3000 = vmatpush1.bf16.msra.mxu0 0
    %3001 = vmatprep.subr.bf16.mxu0 0
    %3002 = vmatpush1.bf16.msra.mxu0 0
    %3003 = vmatprep.subr.bf16.mxu0 0
    %3004 = vmatpush1.bf16.msra.mxu0 0
    %3005 = vmatprep.subr.bf16.mxu0 0
    %3006 = vmatpush1.bf16.msra.mxu0 0
    %3007 = vmatprep.subr.bf16.mxu0 0
    %3008 = vmatpush1.bf16.msra.mxu0 0
    %3009 = vmatprep.subr.bf16.mxu0 0
    %3010 = vmatpush1.bf16.msra.mxu0 0
    %3011 = vmatprep.subr.bf16.mxu0 %v2951
    %3012 = vmatpush1.bf16.msra.mxu0 %v2948
    %3013 = vmatprep.subr.bf16.mxu0 0
    %3014 = vmatpush2.bf16.msra.mxu0 0
    %3015 = vmatprep.subr.bf16.mxu0 0
    %3016 = vmatpush2.bf16.msra.mxu0 0
    %3017 = vmatprep.subr.bf16.mxu0 0
    %3018 = vmatpush2.bf16.msra.mxu0 0
    %3019 = vmatprep.subr.bf16.mxu0 0
    %3020 = vmatpush2.bf16.msra.mxu0 0
    %3021 = vmatprep.subr.bf16.mxu0 0
    %3022 = vmatpush2.bf16.msra.mxu0 0
    %3023 = vmatprep.subr.bf16.mxu0 0
    %3024 = vmatpush2.bf16.msra.mxu0 0
    %3025 = vmatprep.subr.bf16.mxu0 0
    %3026 = vmatpush2.bf16.msra.mxu0 0
    %3027 = vmatprep.subr.bf16.mxu0 0
    %3028 = vmatpush2.bf16.msra.mxu0 0
    %3029 = vmatprep.mubr.bf16.mxu0 0
    %3030 = vmatmul.mubr.bf16.gmra.mxu0 %v2939
    %v3031 = vpop.f32.mrf.mxu0
    %v3032 = vadd.f32 0.0, %v3031
    %v3033 = vpop.f32.mrf.mxu0
    %v3034 = vadd.f32 0.0, %v3033
    %v3035 = vpop.f32.mrf.mxu0
    %v3036 = vpop.f32.mrf.mxu0
    %3037 = vdwg.mxu0
    %3038 = vmatprep.subr.bf16.mxu0 0
    %3039 = vmatpush1.bf16.msra.mxu0 0
    %3040 = vmatprep.subr.bf16.mxu0 0
    %3041 = vmatpush1.bf16.msra.mxu0 0
    %3042 = vmatprep.subr.bf16.mxu0 0
    %3043 = vmatpush1.bf16.msra.mxu0 0
    %3044 = vmatprep.subr.bf16.mxu0 0
    %3045 = vmatpush1.bf16.msra.mxu0 0
    %3046 = vmatprep.subr.bf16.mxu0 0
    %3047 = vmatpush1.bf16.msra.mxu0 0
    %3048 = vmatprep.subr.bf16.mxu0 0
    %3049 = vmatpush1.bf16.msra.mxu0 0
    %3050 = vmatprep.subr.bf16.mxu0 0
    %3051 = vmatpush1.bf16.msra.mxu0 0
    %3052 = vmatprep.subr.bf16.mxu0 0
    %3053 = vmatpush1.bf16.msra.mxu0 %v2954
    %3054 = vmatprep.subr.bf16.mxu0 0
    %3055 = vmatpush2.bf16.msra.mxu0 0
    %3056 = vmatprep.subr.bf16.mxu0 0
    %3057 = vmatpush2.bf16.msra.mxu0 0
    %3058 = vmatprep.subr.bf16.mxu0 0
    %3059 = vmatpush2.bf16.msra.mxu0 0
    %3060 = vmatprep.subr.bf16.mxu0 0
    %3061 = vmatpush2.bf16.msra.mxu0 0
    %3062 = vmatprep.subr.bf16.mxu0 0
    %3063 = vmatpush2.bf16.msra.mxu0 0
    %3064 = vmatprep.subr.bf16.mxu0 0
    %3065 = vmatpush2.bf16.msra.mxu0 0
    %3066 = vmatprep.subr.bf16.mxu0 0
    %3067 = vmatpush2.bf16.msra.mxu0 0
    %3068 = vmatprep.subr.bf16.mxu0 0
    %3069 = vmatpush2.bf16.msra.mxu0 0
    %3070 = vmatprep.mubr.bf16.mxu0 0
    %3071 = vmatmul.mubr.bf16.gmra.mxu0 %v2939
    %v3072 = vpop.f32.mrf.mxu0
    %v3073 = vadd.f32 0.0, %v3072
    %v3074 = vpop.f32.mrf.mxu0
    %v3075 = vpop.f32.mrf.mxu0
    %v3076 = vpop.f32.mrf.mxu0
    %3077 = vdwg.mxu0
    %v3078 = vadd.f32 %v2885, %v2991
    %v3079 = vadd.f32 %v2886, %v2993
    %v3080 = vadd.f32 %v2887, %v3032
    %v3081 = vadd.f32 %v2888, %v3034
    %v3082 = vadd.f32 %v2889, %v3073
    %v3083 = vld [vmem:[#allocation2] sm:$0xff]
    %v3084 = vld [vmem:[#allocation2 + $0x8] sm:$0xf]
    %s3085 = scalar_lea.vmem %s3, 14
    %v3086 = vld [vmem:[%s3085] sm:$0x3]
    %v3089 = vcombine.high %v3083, %v3083
    %v3091 = vunpack.c.l.s4 1983009808
    %v3092 = vunpack.c.0.s8 %v3091
    %v3093 = vlaneseq
    %v3094 = vshrl.u32 %v3093, 7
    %v3095 = vsub.s32 %v3092, %v3094
    %v3096 = vrot.slane %v3083, %v3095
    %v3098 = vunpack.c.l.s4 1983009808
    %v3099 = vunpack.c.0.s8 %v3098
    %v3100 = vlaneseq
    %v3101 = vshrl.u32 %v3100, 7
    %v3102 = vsub.s32 %v3099, %v3101
    %v3103 = vrot.slane %v3089, %v3102
    %v3104 = vcombine.high %v3096, %v3096
    %v3105 = vcombine.high %v3103, %v3103
    %v3107 = vunpack.c.l.s4 1983009808
    %v3108 = vunpack.c.0.s8 %v3107
    %v3109 = vlaneseq
    %v3110 = vshrl.u32 %v3109, 7
    %v3111 = vsub.s32 %v3108, %v3110
    %v3112 = vrot.slane %v3084, %v3111
    %v3113 = vcombine.high %v3112, %v3112
    %3114 = vrot.lane.b32.xlu0 %v3096, 91
    %v3115 = vpop.permute.xlu0 %3114
    %3116 = vrot.lane.b32.xlu0 %v3104, 91
    %v3117 = vpop.permute.xlu0 %3116
    %3118 = vrot.lane.b32.xlu0 %v3103, 91
    %v3119 = vpop.permute.xlu0 %3118
    %3120 = vrot.lane.b32.xlu0 %v3105, 91
    %v3121 = vpop.permute.xlu0 %3120
    %3122 = vrot.lane.b32.xlu0 %v3112, 91
    %v3123 = vpop.permute.xlu0 %3122
    %3124 = vrot.lane.b32.xlu0 %v3113, 91
    %v3125 = vpop.permute.xlu0 %3124
    %v3126 = vsel %vm1302, %v3115, %v3117
    %v3127 = vsel %vm1302, %v3117, %v3119
    %v3128 = vsel %vm1302, %v3119, %v3121
    %v3129 = vsel %vm1302, %v3121, %v3123
    %v3130 = vsel %vm1302, %v3123, %v3125
    %v3132 = vsel %vm69, %v3086, 0
    %v3135 = vsel %vm73, %v3126, 0
    %v3138 = vsel %vm73, %v3127, 0
    %v3141 = vsel %vm73, %v3128, 0
    %v3144 = vsel %vm73, %v3129, 0
    %v3147 = vsel %vm73, %v3130, 0
    %3149 = vmatprep.subr.bf16.mxu0 0
    %3150 = vmatpush1.bf16.msra.mxu0 0
    %3151 = vmatprep.subr.bf16.mxu0 0
    %3152 = vmatpush1.bf16.msra.mxu0 0
    %3153 = vmatprep.subr.bf16.mxu0 0
    %3154 = vmatpush1.bf16.msra.mxu0 0
    %3155 = vmatprep.subr.bf16.mxu0 0
    %3156 = vmatpush1.bf16.msra.mxu0 0
    %3157 = vmatprep.subr.bf16.mxu0 0
    %3158 = vmatpush1.bf16.msra.mxu0 0
    %3159 = vmatprep.subr.bf16.mxu0 0
    %3160 = vmatpush1.bf16.msra.mxu0 0
    %3161 = vmatprep.subr.bf16.mxu0 0
    %3162 = vmatpush1.bf16.msra.mxu0 0
    %3163 = vmatprep.subr.bf16.mxu0 %v3138
    %3164 = vmatpush1.bf16.msra.mxu0 %v3135
    %3165 = vmatprep.subr.bf16.mxu0 0
    %3166 = vmatpush2.bf16.msra.mxu0 0
    %3167 = vmatprep.subr.bf16.mxu0 0
    %3168 = vmatpush2.bf16.msra.mxu0 0
    %3169 = vmatprep.subr.bf16.mxu0 0
    %3170 = vmatpush2.bf16.msra.mxu0 0
    %3171 = vmatprep.subr.bf16.mxu0 0
    %3172 = vmatpush2.bf16.msra.mxu0 0
    %3173 = vmatprep.subr.bf16.mxu0 0
    %3174 = vmatpush2.bf16.msra.mxu0 0
    %3175 = vmatprep.subr.bf16.mxu0 0
    %3176 = vmatpush2.bf16.msra.mxu0 0
    %3177 = vmatprep.subr.bf16.mxu0 0
    %3178 = vmatpush2.bf16.msra.mxu0 0
    %3179 = vmatprep.subr.bf16.mxu0 0
    %3180 = vmatpush2.bf16.msra.mxu0 0
    %3181 = vmatprep.mubr.bf16.mxu0 0
    %3182 = vmatmul.mubr.bf16.gmra.mxu0 %v3132
    %v3183 = vpop.f32.mrf.mxu0
    %v3184 = vadd.f32 0.0, %v3183
    %v3185 = vpop.f32.mrf.mxu0
    %v3186 = vadd.f32 0.0, %v3185
    %v3187 = vpop.f32.mrf.mxu0
    %v3188 = vpop.f32.mrf.mxu0
    %3189 = vdwg.mxu0
    %3190 = vmatprep.subr.bf16.mxu0 0
    %3191 = vmatpush1.bf16.msra.mxu0 0
    %3192 = vmatprep.subr.bf16.mxu0 0
    %3193 = vmatpush1.bf16.msra.mxu0 0
    %3194 = vmatprep.subr.bf16.mxu0 0
    %3195 = vmatpush1.bf16.msra.mxu0 0
    %3196 = vmatprep.subr.bf16.mxu0 0
    %3197 = vmatpush1.bf16.msra.mxu0 0
    %3198 = vmatprep.subr.bf16.mxu0 0
    %3199 = vmatpush1.bf16.msra.mxu0 0
    %3200 = vmatprep.subr.bf16.mxu0 0
    %3201 = vmatpush1.bf16.msra.mxu0 0
    %3202 = vmatprep.subr.bf16.mxu0 0
    %3203 = vmatpush1.bf16.msra.mxu0 0
    %3204 = vmatprep.subr.bf16.mxu0 %v3144
    %3205 = vmatpush1.bf16.msra.mxu0 %v3141
    %3206 = vmatprep.subr.bf16.mxu0 0
    %3207 = vmatpush2.bf16.msra.mxu0 0
    %3208 = vmatprep.subr.bf16.mxu0 0
    %3209 = vmatpush2.bf16.msra.mxu0 0
    %3210 = vmatprep.subr.bf16.mxu0 0
    %3211 = vmatpush2.bf16.msra.mxu0 0
    %3212 = vmatprep.subr.bf16.mxu0 0
    %3213 = vmatpush2.bf16.msra.mxu0 0
    %3214 = vmatprep.subr.bf16.mxu0 0
    %3215 = vmatpush2.bf16.msra.mxu0 0
    %3216 = vmatprep.subr.bf16.mxu0 0
    %3217 = vmatpush2.bf16.msra.mxu0 0
    %3218 = vmatprep.subr.bf16.mxu0 0
    %3219 = vmatpush2.bf16.msra.mxu0 0
    %3220 = vmatprep.subr.bf16.mxu0 0
    %3221 = vmatpush2.bf16.msra.mxu0 0
    %3222 = vmatprep.mubr.bf16.mxu0 0
    %3223 = vmatmul.mubr.bf16.gmra.mxu0 %v3132
    %v3224 = vpop.f32.mrf.mxu0
    %v3225 = vadd.f32 0.0, %v3224
    %v3226 = vpop.f32.mrf.mxu0
    %v3227 = vadd.f32 0.0, %v3226
    %v3228 = vpop.f32.mrf.mxu0
    %v3229 = vpop.f32.mrf.mxu0
    %3230 = vdwg.mxu0
    %3231 = vmatprep.subr.bf16.mxu0 0
    %3232 = vmatpush1.bf16.msra.mxu0 0
    %3233 = vmatprep.subr.bf16.mxu0 0
    %3234 = vmatpush1.bf16.msra.mxu0 0
    %3235 = vmatprep.subr.bf16.mxu0 0
    %3236 = vmatpush1.bf16.msra.mxu0 0
    %3237 = vmatprep.subr.bf16.mxu0 0
    %3238 = vmatpush1.bf16.msra.mxu0 0
    %3239 = vmatprep.subr.bf16.mxu0 0
    %3240 = vmatpush1.bf16.msra.mxu0 0
    %3241 = vmatprep.subr.bf16.mxu0 0
    %3242 = vmatpush1.bf16.msra.mxu0 0
    %3243 = vmatprep.subr.bf16.mxu0 0
    %3244 = vmatpush1.bf16.msra.mxu0 0
    %3245 = vmatprep.subr.bf16.mxu0 0
    %3246 = vmatpush1.bf16.msra.mxu0 %v3147
    %3247 = vmatprep.subr.bf16.mxu0 0
    %3248 = vmatpush2.bf16.msra.mxu0 0
    %3249 = vmatprep.subr.bf16.mxu0 0
    %3250 = vmatpush2.bf16.msra.mxu0 0
    %3251 = vmatprep.subr.bf16.mxu0 0
    %3252 = vmatpush2.bf16.msra.mxu0 0
    %3253 = vmatprep.subr.bf16.mxu0 0
    %3254 = vmatpush2.bf16.msra.mxu0 0
    %3255 = vmatprep.subr.bf16.mxu0 0
    %3256 = vmatpush2.bf16.msra.mxu0 0
    %3257 = vmatprep.subr.bf16.mxu0 0
    %3258 = vmatpush2.bf16.msra.mxu0 0
    %3259 = vmatprep.subr.bf16.mxu0 0
    %3260 = vmatpush2.bf16.msra.mxu0 0
    %3261 = vmatprep.subr.bf16.mxu0 0
    %3262 = vmatpush2.bf16.msra.mxu0 0
    %3263 = vmatprep.mubr.bf16.mxu0 0
    %3264 = vmatmul.mubr.bf16.gmra.mxu0 %v3132
    %v3265 = vpop.f32.mrf.mxu0
    %v3266 = vadd.f32 0.0, %v3265
    %v3267 = vpop.f32.mrf.mxu0
    %v3268 = vpop.f32.mrf.mxu0
    %v3269 = vpop.f32.mrf.mxu0
    %3270 = vdwg.mxu0
    %v3271 = vadd.f32 %v3078, %v3184
    %v3272 = vadd.f32 %v3079, %v3186
    %v3273 = vadd.f32 %v3080, %v3225
    %v3274 = vadd.f32 %v3081, %v3227
    %v3275 = vadd.f32 %v3082, %v3266
    %v3276 = vld [vmem:[#allocation2] sm:$0xff]
    %v3277 = vld [vmem:[#allocation2 + $0x8] sm:$0xf]
    %s3278 = scalar_lea.vmem %s3, 16
    %v3279 = vld [vmem:[%s3278] sm:$0x3]
    %v3282 = vcombine.high %v3276, %v3276
    %v3284 = vunpack.c.l.s4 1983009808
    %v3285 = vunpack.c.0.s8 %v3284
    %v3286 = vlaneseq
    %v3287 = vshrl.u32 %v3286, 7
    %v3288 = vsub.s32 %v3285, %v3287
    %v3289 = vrot.slane %v3276, %v3288
    %v3291 = vunpack.c.l.s4 1983009808
    %v3292 = vunpack.c.0.s8 %v3291
    %v3293 = vlaneseq
    %v3294 = vshrl.u32 %v3293, 7
    %v3295 = vsub.s32 %v3292, %v3294
    %v3296 = vrot.slane %v3282, %v3295
    %v3297 = vcombine.high %v3289, %v3289
    %v3298 = vcombine.high %v3296, %v3296
    %v3300 = vunpack.c.l.s4 1983009808
    %v3301 = vunpack.c.0.s8 %v3300
    %v3302 = vlaneseq
    %v3303 = vshrl.u32 %v3302, 7
    %v3304 = vsub.s32 %v3301, %v3303
    %v3305 = vrot.slane %v3277, %v3304
    %v3306 = vcombine.high %v3305, %v3305
    %3307 = vrot.lane.b32.xlu0 %v3289, 90
    %v3308 = vpop.permute.xlu0 %3307
    %3309 = vrot.lane.b32.xlu0 %v3297, 90
    %v3310 = vpop.permute.xlu0 %3309
    %3311 = vrot.lane.b32.xlu0 %v3296, 90
    %v3312 = vpop.permute.xlu0 %3311
    %3313 = vrot.lane.b32.xlu0 %v3298, 90
    %v3314 = vpop.permute.xlu0 %3313
    %3315 = vrot.lane.b32.xlu0 %v3305, 90
    %v3316 = vpop.permute.xlu0 %3315
    %3317 = vrot.lane.b32.xlu0 %v3306, 90
    %v3318 = vpop.permute.xlu0 %3317
    %v3319 = vsel %vm1491, %v3308, %v3310
    %v3320 = vsel %vm1491, %v3310, %v3312
    %v3321 = vsel %vm1491, %v3312, %v3314
    %v3322 = vsel %vm1491, %v3314, %v3316
    %v3323 = vsel %vm1491, %v3316, %v3318
    %v3325 = vsel %vm69, %v3279, 0
    %v3328 = vsel %vm73, %v3319, 0
    %v3331 = vsel %vm73, %v3320, 0
    %v3334 = vsel %vm73, %v3321, 0
    %v3337 = vsel %vm73, %v3322, 0
    %v3340 = vsel %vm73, %v3323, 0
    %3342 = vmatprep.subr.bf16.mxu0 0
    %3343 = vmatpush1.bf16.msra.mxu0 0
    %3344 = vmatprep.subr.bf16.mxu0 0
    %3345 = vmatpush1.bf16.msra.mxu0 0
    %3346 = vmatprep.subr.bf16.mxu0 0
    %3347 = vmatpush1.bf16.msra.mxu0 0
    %3348 = vmatprep.subr.bf16.mxu0 0
    %3349 = vmatpush1.bf16.msra.mxu0 0
    %3350 = vmatprep.subr.bf16.mxu0 0
    %3351 = vmatpush1.bf16.msra.mxu0 0
    %3352 = vmatprep.subr.bf16.mxu0 0
    %3353 = vmatpush1.bf16.msra.mxu0 0
    %3354 = vmatprep.subr.bf16.mxu0 0
    %3355 = vmatpush1.bf16.msra.mxu0 0
    %3356 = vmatprep.subr.bf16.mxu0 %v3331
    %3357 = vmatpush1.bf16.msra.mxu0 %v3328
    %3358 = vmatprep.subr.bf16.mxu0 0
    %3359 = vmatpush2.bf16.msra.mxu0 0
    %3360 = vmatprep.subr.bf16.mxu0 0
    %3361 = vmatpush2.bf16.msra.mxu0 0
    %3362 = vmatprep.subr.bf16.mxu0 0
    %3363 = vmatpush2.bf16.msra.mxu0 0
    %3364 = vmatprep.subr.bf16.mxu0 0
    %3365 = vmatpush2.bf16.msra.mxu0 0
    %3366 = vmatprep.subr.bf16.mxu0 0
    %3367 = vmatpush2.bf16.msra.mxu0 0
    %3368 = vmatprep.subr.bf16.mxu0 0
    %3369 = vmatpush2.bf16.msra.mxu0 0
    %3370 = vmatprep.subr.bf16.mxu0 0
    %3371 = vmatpush2.bf16.msra.mxu0 0
    %3372 = vmatprep.subr.bf16.mxu0 0
    %3373 = vmatpush2.bf16.msra.mxu0 0
    %3374 = vmatprep.mubr.bf16.mxu0 0
    %3375 = vmatmul.mubr.bf16.gmra.mxu0 %v3325
    %v3376 = vpop.f32.mrf.mxu0
    %v3377 = vadd.f32 0.0, %v3376
    %v3378 = vpop.f32.mrf.mxu0
    %v3379 = vadd.f32 0.0, %v3378
    %v3380 = vpop.f32.mrf.mxu0
    %v3381 = vpop.f32.mrf.mxu0
    %3382 = vdwg.mxu0
    %3383 = vmatprep.subr.bf16.mxu0 0
    %3384 = vmatpush1.bf16.msra.mxu0 0
    %3385 = vmatprep.subr.bf16.mxu0 0
    %3386 = vmatpush1.bf16.msra.mxu0 0
    %3387 = vmatprep.subr.bf16.mxu0 0
    %3388 = vmatpush1.bf16.msra.mxu0 0
    %3389 = vmatprep.subr.bf16.mxu0 0
    %3390 = vmatpush1.bf16.msra.mxu0 0
    %3391 = vmatprep.subr.bf16.mxu0 0
    %3392 = vmatpush1.bf16.msra.mxu0 0
    %3393 = vmatprep.subr.bf16.mxu0 0
    %3394 = vmatpush1.bf16.msra.mxu0 0
    %3395 = vmatprep.subr.bf16.mxu0 0
    %3396 = vmatpush1.bf16.msra.mxu0 0
    %3397 = vmatprep.subr.bf16.mxu0 %v3337
    %3398 = vmatpush1.bf16.msra.mxu0 %v3334
    %3399 = vmatprep.subr.bf16.mxu0 0
    %3400 = vmatpush2.bf16.msra.mxu0 0
    %3401 = vmatprep.subr.bf16.mxu0 0
    %3402 = vmatpush2.bf16.msra.mxu0 0
    %3403 = vmatprep.subr.bf16.mxu0 0
    %3404 = vmatpush2.bf16.msra.mxu0 0
    %3405 = vmatprep.subr.bf16.mxu0 0
    %3406 = vmatpush2.bf16.msra.mxu0 0
    %3407 = vmatprep.subr.bf16.mxu0 0
    %3408 = vmatpush2.bf16.msra.mxu0 0
    %3409 = vmatprep.subr.bf16.mxu0 0
    %3410 = vmatpush2.bf16.msra.mxu0 0
    %3411 = vmatprep.subr.bf16.mxu0 0
    %3412 = vmatpush2.bf16.msra.mxu0 0
    %3413 = vmatprep.subr.bf16.mxu0 0
    %3414 = vmatpush2.bf16.msra.mxu0 0
    %3415 = vmatprep.mubr.bf16.mxu0 0
    %3416 = vmatmul.mubr.bf16.gmra.mxu0 %v3325
    %v3417 = vpop.f32.mrf.mxu0
    %v3418 = vadd.f32 0.0, %v3417
    %v3419 = vpop.f32.mrf.mxu0
    %v3420 = vadd.f32 0.0, %v3419
    %v3421 = vpop.f32.mrf.mxu0
    %v3422 = vpop.f32.mrf.mxu0
    %3423 = vdwg.mxu0
    %3424 = vmatprep.subr.bf16.mxu0 0
    %3425 = vmatpush1.bf16.msra.mxu0 0
    %3426 = vmatprep.subr.bf16.mxu0 0
    %3427 = vmatpush1.bf16.msra.mxu0 0
    %3428 = vmatprep.subr.bf16.mxu0 0
    %3429 = vmatpush1.bf16.msra.mxu0 0
    %3430 = vmatprep.subr.bf16.mxu0 0
    %3431 = vmatpush1.bf16.msra.mxu0 0
    %3432 = vmatprep.subr.bf16.mxu0 0
    %3433 = vmatpush1.bf16.msra.mxu0 0
    %3434 = vmatprep.subr.bf16.mxu0 0
    %3435 = vmatpush1.bf16.msra.mxu0 0
    %3436 = vmatprep.subr.bf16.mxu0 0
    %3437 = vmatpush1.bf16.msra.mxu0 0
    %3438 = vmatprep.subr.bf16.mxu0 0
    %3439 = vmatpush1.bf16.msra.mxu0 %v3340
    %3440 = vmatprep.subr.bf16.mxu0 0
    %3441 = vmatpush2.bf16.msra.mxu0 0
    %3442 = vmatprep.subr.bf16.mxu0 0
    %3443 = vmatpush2.bf16.msra.mxu0 0
    %3444 = vmatprep.subr.bf16.mxu0 0
    %3445 = vmatpush2.bf16.msra.mxu0 0
    %3446 = vmatprep.subr.bf16.mxu0 0
    %3447 = vmatpush2.bf16.msra.mxu0 0
    %3448 = vmatprep.subr.bf16.mxu0 0
    %3449 = vmatpush2.bf16.msra.mxu0 0
    %3450 = vmatprep.subr.bf16.mxu0 0
    %3451 = vmatpush2.bf16.msra.mxu0 0
    %3452 = vmatprep.subr.bf16.mxu0 0
    %3453 = vmatpush2.bf16.msra.mxu0 0
    %3454 = vmatprep.subr.bf16.mxu0 0
    %3455 = vmatpush2.bf16.msra.mxu0 0
    %3456 = vmatprep.mubr.bf16.mxu0 0
    %3457 = vmatmul.mubr.bf16.gmra.mxu0 %v3325
    %v3458 = vpop.f32.mrf.mxu0
    %v3459 = vadd.f32 0.0, %v3458
    %v3460 = vpop.f32.mrf.mxu0
    %v3461 = vpop.f32.mrf.mxu0
    %v3462 = vpop.f32.mrf.mxu0
    %3463 = vdwg.mxu0
    %v3464 = vadd.f32 %v3271, %v3377
    %v3465 = vadd.f32 %v3272, %v3379
    %v3466 = vadd.f32 %v3273, %v3418
    %v3467 = vadd.f32 %v3274, %v3420
    %v3468 = vadd.f32 %v3275, %v3459
    %v3469 = vmul.f32 %v3464, %v1646
    %v3470 = vmul.f32 %v3465, %v1650
    %v3471 = vmul.f32 %v3466, %v1654
    %v3472 = vmul.f32 %v3467, %v1658
    %v3473 = vmul.f32 %v3468, %v1662
    %v3474 = vsel %vm1673, %v3469, 0.0
    %v3475 = vsel %vm1673, %v3470, 0.0
    %v3476 = vadd.f32 %v3474, %v3475
    %v3477 = vsel %vm1673, %v3471, 0.0
    %v3478 = vadd.f32 %v3476, %v3477
    %v3479 = vsel %vm1673, %v3472, 0.0
    %v3480 = vadd.f32 %v3478, %v3479
    %v3481 = vsel %vm1681, %v3473, 0.0
    %v3482 = vadd.f32 %v3480, %v3481
    %3483 = vadd.xlane.f32.xlu0 %v3482
    %v3484 = vpop.xlane.xlu0 %3483
    %v3485 = vmul.f32 %v3484, 0.001953125
    %v3486 = vsub.f32 %v3464, %v3485
    %v3487 = vsub.f32 %v3465, %v3485
    %v3488 = vsub.f32 %v3466, %v3485
    %v3489 = vsub.f32 %v3467, %v3485
    %v3490 = vsub.f32 %v3468, %v3485
    %v3491 = vmul.f32 %v3486, %v1646
    %v3492 = vmul.f32 %v3487, %v1650
    %v3493 = vmul.f32 %v3488, %v1654
    %v3494 = vmul.f32 %v3489, %v1658
    %v3495 = vmul.f32 %v3490, %v1662
    %v3496 = vmul.f32 %v3491, %v3491
    %v3497 = vmul.f32 %v3492, %v3492
    %v3498 = vmul.f32 %v3493, %v3493
    %v3499 = vmul.f32 %v3494, %v3494
    %v3500 = vmul.f32 %v3495, %v3495
    %v3501 = vsel %vm1673, %v3496, 0.0
    %v3502 = vsel %vm1673, %v3497, 0.0
    %v3503 = vadd.f32 %v3501, %v3502
    %v3504 = vsel %vm1673, %v3498, 0.0
    %v3505 = vadd.f32 %v3503, %v3504
    %v3506 = vsel %vm1673, %v3499, 0.0
    %v3507 = vadd.f32 %v3505, %v3506
    %v3508 = vsel %vm1681, %v3500, 0.0
    %v3509 = vadd.f32 %v3507, %v3508
    %3510 = vadd.xlane.f32.xlu0 %v3509
    %v3511 = vpop.xlane.xlu0 %3510
    %v3512 = vmul.f32 %v3511, 0.001953125
    %v3513 = vld [vmem:[%s6] sm:$0xf]
    %v3514 = vadd.f32 %v3512, 1e-05
    %v3515 = vrsqrt.pop %v3514
    %v3516 = vmul.f32 %v3513, %v3515
    %3518 = vset.pattern.permute.xlu0 0
    %3519 = vperm.xlu0 %3518, %v3516
    %v3520 = vpop.permute.xlu0 %3519
    %v3522 = vmul.f32 %v3486, %v3520
    %v3523 = vmul.f32 %v3487, %v3520
    %v3524 = vmul.f32 %v3488, %v3520
    %v3525 = vmul.f32 %v3489, %v3520
    %v3526 = vmul.f32 %v3490, %v3520
    %v3527 = vld [vmem:[%s7] sm:$0xf]
    %3529 = vset.pattern.permute.xlu0 0
    %3530 = vperm.xlu0 %3529, %v3527
    %v3531 = vpop.permute.xlu0 %3530
    %v3533 = vadd.f32 %v3522, %v3531
    %v3534 = vadd.f32 %v3523, %v3531
    %v3535 = vadd.f32 %v3524, %v3531
    %v3536 = vadd.f32 %v3525, %v3531
    %v3537 = vadd.f32 %v3526, %v3531
    %v3538 = vld [vmem:[%s0] sm:$0xff]
    %v3539 = vld [vmem:[%s0 + $0x8] sm:$0xff]
    %v3540 = vld [vmem:[%s0 + $0x10] sm:$0xf]
    %v3544 = vcombine.high %v3538, %v3538
    %v3545 = vcombine.high %v3539, %v3539
    %3546 = vrot.lane.b32.xlu0 %v3538, 109
    %v3547 = vpop.permute.xlu0 %3546
    %3548 = vrot.lane.b32.xlu0 %v3544, 109
    %v3549 = vpop.permute.xlu0 %3548
    %3550 = vrot.lane.b32.xlu0 %v3539, 109
    %v3551 = vpop.permute.xlu0 %3550
    %3552 = vrot.lane.b32.xlu0 %v3545, 109
    %v3553 = vpop.permute.xlu0 %3552
    %3554 = vrot.lane.b32.xlu0 %v3540, 109
    %v3555 = vpop.permute.xlu0 %3554
    %vm3556 = vcmask 891904
    %v3557 = vsel %vm3556, %v3547, %v3549
    %v3558 = vsel %vm3556, %v3549, %v3551
    %v3559 = vsel %vm3556, %v3551, %v3553
    %v3560 = vsel %vm3556, %v3553, %v3555
    %v3566 = vadd.f32 %v3533, %v3557
    %v3567 = vadd.f32 %v3534, %v3558
    %v3568 = vadd.f32 %v3535, %v3559
    %v3569 = vadd.f32 %v3536, %v3560
    %v3570 = vadd.f32 %v3537, %v3555
    %v3571 = vmax.f32 %v3566, 0.0
    %v3572 = vmax.f32 %v3567, 0.0
    %v3573 = vmax.f32 %v3568, 0.0
    %v3574 = vmax.f32 %v3569, 0.0
    %v3575 = vmax.f32 %v3570, 0.0
    %v3580 = vcombine.low %v3571, %v3572
    %v3581 = vcombine.low %v3573, %v3574
    %3584 = vst [vmem:[#allocation3] sm:$0xff] %v3580
    %3585 = vst [vmem:[#allocation3 + $0x8] sm:$0xff] %v3581
    %3586 = vst.msk [vmem:[#allocation3 + $0x10] sm:$0xf] %vm1681, %v3575
    // Predicated region
    $region34: #{tpu_custom_call.1} parent=1 // pred_check
      _
    $region35: #{tpu_custom_call.1} parent=1 // pred_check_branch
      %3588 = sbr.rel (0) target = $region37
    $region36: #{tpu_custom_call.1} parent=1 // pred_region
      %s3590 = ssub.s32 320, 320
      %3591 = vsyncadd [#allocation4], %s3590
      %s3593 = sshll.u32 [#allocation3], 4
      %s3594 = int_to_ptr.vmem [resolvable:$true] %s3593
      %3596 = dma.vmem_to_hbm [thread:$0]  %s3594, 320, %s8, [#allocation4]
    $region37: #{tpu_custom_call.1} parent=1 // pred_fallthru
      _
    // Predicated region
    $region38: #{tpu_custom_call.1} parent=1 // pred_check
      _
    $region39: #{tpu_custom_call.1} parent=1 // pred_check_branch
      %3598 = sbr.rel (0) target = $region41
    $region40: #{tpu_custom_call.1} parent=1 // pred_region
      %3599 = dma.done [#allocation4], 320
    $region41: #{tpu_custom_call.1} parent=1 // pred_fallthru
      _
    %3600 = vsyncpa [#allocation4], 1

</llo_original>
